<compile_context>
chip_gen: v5e
topology: v5e:2x2
jax: 0.10.0
libtpu: 0.0.40
codegen_flags: <defaults>
</compile_context>

<pallas_src>
import functools

import numpy as np
import jax
import jax.numpy as jnp
from jax.experimental import pallas as pl
from jax.experimental.pallas import tpu as pltpu

# ----- demo configuration (small shapes consistent with the module) ---------
B = 2              # bags
N_PATCH = 8        # instances per bag
IN_DIM = 96        # input feature dim
EMBED = 64         # embed_dim
NUM_CLASSES = 2
HEADS = 8
HEAD_DIM = EMBED // HEADS
AGENT_NUM = 8      # agent tokens per head (kept small for the demo)
LN_EPS = 1e-5

_LAYER_KEYS = ('ln_w', 'ln_b', 'wqkv', 'bqkv', 'agents_bd', 'wo', 'bo')


def _replicated_spec(arr):
    """Whole-array block, same block index at every grid step (weights)."""
    nd = arr.ndim
    return pl.BlockSpec(arr.shape, lambda b, _n=nd: (0,) * _n)


# ----- in-kernel helpers -----------------------------------------------------
def _mm(a, b):
    # bf16 MXU inputs, f32 accumulation (astype is a no-op on pre-cast weights).
    return jnp.dot(a.astype(jnp.bfloat16), b.astype(jnp.bfloat16),
                   preferred_element_type=jnp.float32)


def _mm_nt(a, b):
    # a: (m, k), b: (n, k) -> (m, n): contract last dims, bf16 in / f32 acc.
    return jax.lax.dot_general(a.astype(jnp.bfloat16), b.astype(jnp.bfloat16),
                               (((1,), (1,)), ((), ())),
                               preferred_element_type=jnp.float32)


def _layernorm(x, w, b):
    mu = jnp.mean(x, axis=-1, keepdims=True)
    xc = x - mu
    var = jnp.mean(xc * xc, axis=-1, keepdims=True)
    return xc * jax.lax.rsqrt(var + LN_EPS) * w + b


def _softmax_lastdim(x):
    m = jnp.max(x, axis=-1, keepdims=True)
    e = jnp.exp(x - m)
    return e * pl.reciprocal(jnp.sum(e, axis=-1, keepdims=True), approx=True)


def _agent_attention(seq, ln_w, ln_b, wqkv, bqkv, agents_bd, wo, bo,
                     head_mask, seg_mat, *, embed, head_dim):
    """x + AgentAttention(LayerNorm(x)); all heads fused on the lane axis."""
    xn = _layernorm(seq, ln_w, ln_b)
    qkv = _mm(xn, wqkv) + bqkv                           # (Nt, 3E), one MXU pass
    q = qkv[:, 0:embed]
    k = qkv[:, embed:2 * embed]
    v = qkv[:, 2 * embed:3 * embed]
    scale = 1.0 / float(np.sqrt(head_dim))

    # agents aggregate keys/values (block-diagonal agent matrix == per-head)
    s1 = _mm_nt(agents_bd, k) * scale                    # (H*A, Nt)
    p1 = _softmax_lastdim(s1)                            # softmax over tokens
    av = _mm(p1, v) * head_mask                          # (H*A, E), keep own head's block

    # queries read agents; per-head softmax over agents via group-sum matmul.
    # Subtracting the global row max (not per-group) is valid: the constant
    # cancels within each group.
    s2 = _mm_nt(q, agents_bd) * scale                    # (Nt, H*A)
    m = jnp.max(s2, axis=-1, keepdims=True)
    e = jnp.exp(s2 - m)
    denom = _mm(e, seg_mat)                              # per-head sums, (Nt, H*A)
    p2 = e * pl.reciprocal(denom, approx=True)

    o = _mm(p2, av)                                      # (Nt, E)
    return seq + _mm(o, wo) + bo                         # residual


# ----- fused forward kernel ---------------------------------------------------
def _amd_mil_kernel(x_ref, fc1_w, fc1_b, cls_tok, head_mask, seg_mat,
                    l1_ln_w, l1_ln_b, l1_wqkv, l1_bqkv, l1_ag, l1_wo, l1_bo,
                    pp_w,
                    l2_ln_w, l2_ln_b, l2_wqkv, l2_bqkv, l2_ag, l2_wo, l2_bo,
                    norm_w, norm_b, fc2_w, fc2_b,
                    out_ref, seq_ref, *, n, hh, ww, embed, head_dim):
    hw = hh * ww
    add_length = hw - n

    # ---- _fc1: Linear + ReLU (dropout is a no-op at inference) ----
    h = jnp.maximum(_mm(x_ref[0], fc1_w[...]) + fc1_b[...], 0.0)       # (n, E)

    # ---- [cls | h | wrap-around pad] written straight into VMEM scratch ----
    seq_ref[0:1, :] = cls_tok[...]
    seq_ref[1:1 + n, :] = h
    if add_length > 0:
        seq_ref[1 + n:1 + hw, :] = h[0:add_length, :]

    hm = head_mask[...]        # (H*A, E)   bf16 0/1, precomputed on host
    sm = seg_mat[...]          # (H*A, H*A) bf16 0/1, precomputed on host

    # ---- AMD layer 1 ----
    seq = _agent_attention(seq_ref[...], l1_ln_w[...], l1_ln_b[...],
                           l1_wqkv[...], l1_bqkv[...], l1_ag[...],
                           l1_wo[...], l1_bo[...], hm, sm,
                           embed=embed, head_dim=head_dim)

    # ---- PPEG: identity + depthwise 7/5/3 convs as masked shifted adds ----
    seq_ref[...] = seq                        # identity term (+ unchanged cls row)
    feat = seq[1:1 + hw, :]                   # pre-conv features, (hw, E)
    ppw = pp_w[...]                           # (taps, E) combined per-offset weights
    col = jax.lax.broadcasted_iota(jnp.int32, (hw, 1), 0) % ww
    off_r = min(3, hh - 1)
    off_c = min(3, ww - 1)
    n_dj = 2 * off_c + 1
    for dj_i, dj in enumerate(range(-off_c, off_c + 1)):
        if dj == 0:
            mfeat = feat
        else:
            # zero source columns whose contribution would wrap across rows
            valid = (col >= max(0, dj)) & (col < ww + min(0, dj))
            mfeat = feat * valid.astype(jnp.float32)
        for di_i, di in enumerate(range(-off_r, off_r + 1)):
            off = di * ww + dj
            length = hw - abs(off)
            if length <= 0:
                continue
            t = di_i * n_dj + dj_i            # matches host tap ordering
            dst0 = max(0, -off)
            src0 = max(0, off)
            seq_ref[1 + dst0:1 + dst0 + length, :] += (
                mfeat[src0:src0 + length, :] * ppw[t:t + 1, :])

    # ---- AMD layer 2 ----
    seq = _agent_attention(seq_ref[...], l2_ln_w[...], l2_ln_b[...],
                           l2_wqkv[...], l2_bqkv[...], l2_ag[...],
                           l2_wo[...], l2_bo[...], hm, sm,
                           embed=embed, head_dim=head_dim)

    # ---- final LayerNorm on the cls token + classifier ----
    cls_n = _layernorm(seq[0:1, :], norm_w[...], norm_b[...])
    out_ref[0] = _mm(cls_n, fc2_w[...]) + fc2_b[...]


# ----- wrapper ---------------------------------------------------------------
def amd_mil_forward(x, params):
    bx, nx, din = x.shape
    hh = int(np.ceil(np.sqrt(nx)))
    hw = hh * hh
    nt = 1 + hw
    off_r = min(3, hh - 1)
    assert params['ppeg_w'].shape[0] == (2 * off_r + 1) ** 2

    weights = ([params['fc1_w'], params['fc1_b'], params['cls_token'],
                params['head_mask'], params['seg_mat']]
               + [params['layer1'][k] for k in _LAYER_KEYS]
               + [params['ppeg_w']]
               + [params['layer2'][k] for k in _LAYER_KEYS]
               + [params['norm_w'], params['norm_b'],
                  params['fc2_w'], params['fc2_b']])
    kernel = functools.partial(_amd_mil_kernel, n=nx, hh=hh, ww=hh,
                               embed=EMBED, head_dim=HEAD_DIM)
    # TODO(synk): at realistic bag sizes (1e4-1e5) set vmem_limit_bytes, add an
    # Nt-tiling grid axis (online softmax), and single-buffer the replicated
    # weight specs (pipeline_mode=pl.Buffered(1)) for v7x's 64 MiB VMEM.
    logits = pl.pallas_call(
        kernel,
        out_shape=jax.ShapeDtypeStruct((bx, 1, NUM_CLASSES), jnp.float32),
        grid=(bx,),
        in_specs=[pl.BlockSpec((1, nx, din), lambda b: (b, 0, 0))]
                 + [_replicated_spec(w) for w in weights],
        out_specs=pl.BlockSpec((1, 1, NUM_CLASSES), lambda b: (b, 0, 0)),
        scratch_shapes=[pltpu.VMEM((nt, EMBED), jnp.float32)],
        compiler_params=pltpu.CompilerParams(
            dimension_semantics=("parallel",)),   # bags shard across TCs (v7x)
    )(x, *weights)
    return {'logits': logits.reshape(bx, NUM_CLASSES)}


# ----- deterministic synthetic parameters ------------------------------------
def _make_attention_masks():
    """Per-head block masks (host precomputed, bf16-exact 0/1)."""
    ha = HEADS * AGENT_NUM
    r = np.arange(ha)[:, None] // AGENT_NUM
    head_mask = (r == np.arange(EMBED)[None, :] // HEAD_DIM).astype(np.float32)
    seg_mat = (r == np.arange(ha)[None, :] // AGENT_NUM).astype(np.float32)
    return jnp.asarray(head_mask, jnp.bfloat16), jnp.asarray(seg_mat, jnp.bfloat16)


def _make_ppeg_params(key, H, W, C):
    """Combine the three depthwise conv kernels into per-offset channel weights.

    Tap ordering is di-major / dj-minor over di in [-min(3,H-1), ...] and
    dj in [-min(3,W-1), ...] -- the kernel indexes taps with the same order.
    Conv biases are zero (initialize_weights) and are dropped entirely.
    """
    k7, k5, k3 = jax.random.split(key, 3)

    def xavier_conv(k, ksz):
        # depthwise Conv2d weight (C,1,k,k): xavier_normal_ fan_in=fan_out=k*k
        std = float(np.sqrt(2.0 / (2 * ksz * ksz)))
        return std * jax.random.normal(k, (ksz, ksz, C), jnp.float32)

    w7, w5, w3 = xavier_conv(k7, 7), xavier_conv(k5, 5), xavier_conv(k3, 3)
    off_r = min(3, H - 1)
    off_c = min(3, W - 1)

    w_rows = []
    for di in range(-off_r, off_r + 1):
        for dj in range(-off_c, off_c + 1):
            w = jnp.zeros((C,), jnp.float32)
            for ksz, wk in ((7, w7), (5, w5), (3, w3)):
                half = ksz // 2
                if abs(di) <= half and abs(dj) <= half:
                    w = w + wk[di + half, dj + half, :]
            w_rows.append(w)
    return jnp.stack(w_rows, 0)                       # (taps, C) f32


def make_params(key):
    keys = jax.random.split(key, 12)
    ki = iter(keys)

    def xavier(shape, fan_in, fan_out, dtype=jnp.bfloat16):
        std = float(np.sqrt(2.0 / (fan_in + fan_out)))
        return (std * jax.random.normal(next(ki), shape, jnp.float32)).astype(dtype)

    def make_layer():
        agents = 0.02 * jax.random.normal(
            next(ki), (HEADS, AGENT_NUM, HEAD_DIM), jnp.float32)
        # block-diagonal (H*A, H*dh) learnable-agent matrix: row h*A+a carries
        # agent (h, a) placed in head h's channel block.
        eye = jnp.eye(HEADS, dtype=jnp.float32)
        agents_bd = jnp.einsum('had,hg->hagd', agents, eye).reshape(
            HEADS * AGENT_NUM, HEADS * HEAD_DIM).astype(jnp.bfloat16)
        return {
            'ln_w': jnp.ones((1, EMBED), jnp.float32),
            'ln_b': jnp.zeros((1, EMBED), jnp.float32),
            'wqkv': xavier((EMBED, 3 * EMBED), EMBED, EMBED),
            'bqkv': jnp.zeros((1, 3 * EMBED), jnp.float32),
            'agents_bd': agents_bd,
            'wo': xavier((EMBED, EMBED), EMBED, EMBED),
            'bo': jnp.zeros((1, EMBED), jnp.float32),
        }

    hh = int(np.ceil(np.sqrt(N_PATCH)))
    head_mask, seg_mat = _make_attention_masks()
    return {
        'fc1_w': xavier((IN_DIM, EMBED), IN_DIM, EMBED),
        'fc1_b': jnp.zeros((1, EMBED), jnp.float32),
        'cls_token': 1e-6 * jax.random.normal(next(ki), (1, EMBED), jnp.float32),
        'head_mask': head_mask,
        'seg_mat': seg_mat,
        'layer1': make_layer(),
        'layer2': make_layer(),
        'ppeg_w': _make_ppeg_params(next(ki), hh, hh, EMBED),
        'norm_w': jnp.ones((1, EMBED), jnp.float32),
        'norm_b': jnp.zeros((1, EMBED), jnp.float32),
        'fc2_w': xavier((EMBED, NUM_CLASSES), EMBED, NUM_CLASSES),
        'fc2_b': jnp.zeros((1, NUM_CLASSES), jnp.float32),
    }


if __name__ == "__main__":
    key = jax.random.PRNGKey(0)
    pkey, xkey = jax.random.split(key)
    params = make_params(pkey)
    x = jax.random.normal(xkey, (B, N_PATCH, IN_DIM), jnp.float32)

    out = amd_mil_forward(x, params)
    logits = jax.block_until_ready(out['logits'])

    assert logits.shape == (B, NUM_CLASSES), logits.shape
    assert bool(jnp.all(jnp.isfinite(logits)))
    print("KERNEL_OK")
</pallas_src>

<mosaic_0001>
module attributes {stable_mosaic.version = 11 : i64} {
  func.func @_amd_mil_kernel(%arg0: i32, %arg1: memref<1x8x96xf32, #tpu.memory_space<vmem>>, %arg2: memref<96x64xbf16, #tpu.memory_space<vmem>>, %arg3: memref<1x64xf32, #tpu.memory_space<vmem>>, %arg4: memref<1x64xf32, #tpu.memory_space<vmem>>, %arg5: memref<64x64xbf16, #tpu.memory_space<vmem>>, %arg6: memref<64x64xbf16, #tpu.memory_space<vmem>>, %arg7: memref<1x64xf32, #tpu.memory_space<vmem>>, %arg8: memref<1x64xf32, #tpu.memory_space<vmem>>, %arg9: memref<64x192xbf16, #tpu.memory_space<vmem>>, %arg10: memref<1x192xf32, #tpu.memory_space<vmem>>, %arg11: memref<64x64xbf16, #tpu.memory_space<vmem>>, %arg12: memref<64x64xbf16, #tpu.memory_space<vmem>>, %arg13: memref<1x64xf32, #tpu.memory_space<vmem>>, %arg14: memref<25x64xf32, #tpu.memory_space<vmem>>, %arg15: memref<1x64xf32, #tpu.memory_space<vmem>>, %arg16: memref<1x64xf32, #tpu.memory_space<vmem>>, %arg17: memref<64x192xbf16, #tpu.memory_space<vmem>>, %arg18: memref<1x192xf32, #tpu.memory_space<vmem>>, %arg19: memref<64x64xbf16, #tpu.memory_space<vmem>>, %arg20: memref<64x64xbf16, #tpu.memory_space<vmem>>, %arg21: memref<1x64xf32, #tpu.memory_space<vmem>>, %arg22: memref<1x64xf32, #tpu.memory_space<vmem>>, %arg23: memref<1x64xf32, #tpu.memory_space<vmem>>, %arg24: memref<64x2xbf16, #tpu.memory_space<vmem>>, %arg25: memref<1x2xf32, #tpu.memory_space<vmem>>, %arg26: memref<1x1x2xf32, #tpu.memory_space<vmem>>, %arg27: memref<10x64xf32, #tpu.memory_space<vmem>>) attributes {dimension_semantics = [#tpu.dimension_semantics<parallel>], iteration_bounds = array<i64: 2>, scalar_prefetch = 0 : i64, scratch_operands = 1 : i64, tpu.core_type = #tpu.core_type<tc>, window_params = [{transform_indices = @transform_0, window_bounds = array<i64: 1, 8, 96>}, {pipeline_mode = #tpu.pipeline_mode<synchronous>, transform_indices = @transform_1, window_bounds = array<i64: 96, 64>}, {pipeline_mode = #tpu.pipeline_mode<synchronous>, transform_indices = @transform_2, window_bounds = array<i64: 1, 64>}, {pipeline_mode = #tpu.pipeline_mode<synchronous>, transform_indices = @transform_3, window_bounds = array<i64: 1, 64>}, {pipeline_mode = #tpu.pipeline_mode<synchronous>, transform_indices = @transform_4, window_bounds = array<i64: 64, 64>}, {pipeline_mode = #tpu.pipeline_mode<synchronous>, transform_indices = @transform_5, window_bounds = array<i64: 64, 64>}, {pipeline_mode = #tpu.pipeline_mode<synchronous>, transform_indices = @transform_6, window_bounds = array<i64: 1, 64>}, {pipeline_mode = #tpu.pipeline_mode<synchronous>, transform_indices = @transform_7, window_bounds = array<i64: 1, 64>}, {pipeline_mode = #tpu.pipeline_mode<synchronous>, transform_indices = @transform_8, window_bounds = array<i64: 64, 192>}, {pipeline_mode = #tpu.pipeline_mode<synchronous>, transform_indices = @transform_9, window_bounds = array<i64: 1, 192>}, {pipeline_mode = #tpu.pipeline_mode<synchronous>, transform_indices = @transform_10, window_bounds = array<i64: 64, 64>}, {pipeline_mode = #tpu.pipeline_mode<synchronous>, transform_indices = @transform_11, window_bounds = array<i64: 64, 64>}, {pipeline_mode = #tpu.pipeline_mode<synchronous>, transform_indices = @transform_12, window_bounds = array<i64: 1, 64>}, {pipeline_mode = #tpu.pipeline_mode<synchronous>, transform_indices = @transform_13, window_bounds = array<i64: 25, 64>}, {pipeline_mode = #tpu.pipeline_mode<synchronous>, transform_indices = @transform_14, window_bounds = array<i64: 1, 64>}, {pipeline_mode = #tpu.pipeline_mode<synchronous>, transform_indices = @transform_15, window_bounds = array<i64: 1, 64>}, {pipeline_mode = #tpu.pipeline_mode<synchronous>, transform_indices = @transform_16, window_bounds = array<i64: 64, 192>}, {pipeline_mode = #tpu.pipeline_mode<synchronous>, transform_indices = @transform_17, window_bounds = array<i64: 1, 192>}, {pipeline_mode = #tpu.pipeline_mode<synchronous>, transform_indices = @transform_18, window_bounds = array<i64: 64, 64>}, {pipeline_mode = #tpu.pipeline_mode<synchronous>, transform_indices = @transform_19, window_bounds = array<i64: 64, 64>}, {pipeline_mode = #tpu.pipeline_mode<synchronous>, transform_indices = @transform_20, window_bounds = array<i64: 1, 64>}, {pipeline_mode = #tpu.pipeline_mode<synchronous>, transform_indices = @transform_21, window_bounds = array<i64: 1, 64>}, {pipeline_mode = #tpu.pipeline_mode<synchronous>, transform_indices = @transform_22, window_bounds = array<i64: 1, 64>}, {pipeline_mode = #tpu.pipeline_mode<synchronous>, transform_indices = @transform_23, window_bounds = array<i64: 64, 2>}, {pipeline_mode = #tpu.pipeline_mode<synchronous>, transform_indices = @transform_24, window_bounds = array<i64: 1, 2>}, {transform_indices = @transform_25, window_bounds = array<i64: 1, 1, 2>}]} {
    %c0 = arith.constant 0 : index
    %c0_0 = arith.constant 0 : index
    %c0_1 = arith.constant 0 : index
    %0 = vector.load %arg1[%c0, %c0_0, %c0_1] : memref<1x8x96xf32, #tpu.memory_space<vmem>>, vector<1x8x96xf32>
    %1 = vector.shape_cast %0 : vector<1x8x96xf32> to vector<8x96xf32>
    %c0_2 = arith.constant 0 : index
    %c0_3 = arith.constant 0 : index
    %2 = vector.load %arg2[%c0_2, %c0_3] : memref<96x64xbf16, #tpu.memory_space<vmem>>, vector<96x64xbf16>
    %3 = arith.truncf %1 : vector<8x96xf32> to vector<8x96xbf16>
    %cst = arith.constant dense<0.000000e+00> : vector<8x64xf32>
    %4 = tpu.matmul %3, %2, %cst {dimension_numbers = #tpu.dot_dimension_numbers<[1], [0], [0], [1], [0, 0, 1, 1], [], []>} : vector<8x96xbf16>, vector<96x64xbf16>, vector<8x64xf32> -> vector<8x64xf32>
    %c0_4 = arith.constant 0 : index
    %c0_5 = arith.constant 0 : index
    %5 = vector.load %arg3[%c0_4, %c0_5] : memref<1x64xf32, #tpu.memory_space<vmem>>, vector<1x64xf32>
    %6 = vector.broadcast %5 : vector<1x64xf32> to vector<8x64xf32>
    %7 = arith.addf %4, %6 : vector<8x64xf32>
    %cst_6 = arith.constant 0.000000e+00 : f32
    %8 = vector.broadcast %cst_6 : f32 to vector<8x64xf32>
    %9 = arith.maximumf %7, %8 : vector<8x64xf32>
    %c0_7 = arith.constant 0 : index
    %c0_8 = arith.constant 0 : index
    %10 = vector.load %arg4[%c0_7, %c0_8] : memref<1x64xf32, #tpu.memory_space<vmem>>, vector<1x64xf32>
    %c0_9 = arith.constant 0 : index
    %c0_10 = arith.constant 0 : index
    %11 = vector.load %arg27[%c0_9, %c0_10] : memref<10x64xf32, #tpu.memory_space<vmem>>, vector<1x64xf32>
    tpu.vector_store %arg27[%c0_9, %c0_10], %10 {strides = array<i32>} : memref<10x64xf32, #tpu.memory_space<vmem>>, vector<1x64xf32>,
    %c1 = arith.constant 1 : index
    %c0_11 = arith.constant 0 : index
    %12 = vector.load %arg27[%c1, %c0_11] : memref<10x64xf32, #tpu.memory_space<vmem>>, vector<8x64xf32>
    tpu.vector_store %arg27[%c1, %c0_11], %9 {strides = array<i32>} : memref<10x64xf32, #tpu.memory_space<vmem>>, vector<8x64xf32>,
    %13 = vector.extract_strided_slice %9 {offsets = [0, 0], sizes = [1, 64], strides = [1, 1]} : vector<8x64xf32> to vector<1x64xf32>
    %c9 = arith.constant 9 : index
    %c0_12 = arith.constant 0 : index
    %14 = vector.load %arg27[%c9, %c0_12] : memref<10x64xf32, #tpu.memory_space<vmem>>, vector<1x64xf32>
    tpu.vector_store %arg27[%c9, %c0_12], %13 {strides = array<i32>} : memref<10x64xf32, #tpu.memory_space<vmem>>, vector<1x64xf32>,
    %c0_13 = arith.constant 0 : index
    %c0_14 = arith.constant 0 : index
    %15 = vector.load %arg5[%c0_13, %c0_14] : memref<64x64xbf16, #tpu.memory_space<vmem>>, vector<64x64xbf16>
    %c0_15 = arith.constant 0 : index
    %c0_16 = arith.constant 0 : index
    %16 = vector.load %arg6[%c0_15, %c0_16] : memref<64x64xbf16, #tpu.memory_space<vmem>>, vector<64x64xbf16>
    %c0_17 = arith.constant 0 : index
    %c0_18 = arith.constant 0 : index
    %17 = vector.load %arg27[%c0_17, %c0_18] : memref<10x64xf32, #tpu.memory_space<vmem>>, vector<10x64xf32>
    %c0_19 = arith.constant 0 : index
    %c0_20 = arith.constant 0 : index
    %18 = vector.load %arg7[%c0_19, %c0_20] : memref<1x64xf32, #tpu.memory_space<vmem>>, vector<1x64xf32>
    %c0_21 = arith.constant 0 : index
    %c0_22 = arith.constant 0 : index
    %19 = vector.load %arg8[%c0_21, %c0_22] : memref<1x64xf32, #tpu.memory_space<vmem>>, vector<1x64xf32>
    %c0_23 = arith.constant 0 : index
    %c0_24 = arith.constant 0 : index
    %20 = vector.load %arg9[%c0_23, %c0_24] : memref<64x192xbf16, #tpu.memory_space<vmem>>, vector<64x192xbf16>
    %c0_25 = arith.constant 0 : index
    %c0_26 = arith.constant 0 : index
    %21 = vector.load %arg10[%c0_25, %c0_26] : memref<1x192xf32, #tpu.memory_space<vmem>>, vector<1x192xf32>
    %c0_27 = arith.constant 0 : index
    %c0_28 = arith.constant 0 : index
    %22 = vector.load %arg11[%c0_27, %c0_28] : memref<64x64xbf16, #tpu.memory_space<vmem>>, vector<64x64xbf16>
    %c0_29 = arith.constant 0 : index
    %c0_30 = arith.constant 0 : index
    %23 = vector.load %arg12[%c0_29, %c0_30] : memref<64x64xbf16, #tpu.memory_space<vmem>>, vector<64x64xbf16>
    %c0_31 = arith.constant 0 : index
    %c0_32 = arith.constant 0 : index
    %24 = vector.load %arg13[%c0_31, %c0_32] : memref<1x64xf32, #tpu.memory_space<vmem>>, vector<1x64xf32>
    %cst_33 = arith.constant dense<0.000000e+00> : vector<10xf32>
    %25 = vector.multi_reduction <add>, %17, %cst_33 [1] : vector<10x64xf32> to vector<10xf32>
    %26 = vector.shape_cast %25 : vector<10xf32> to vector<10x1xf32>
    %cst_34 = arith.constant 6.400000e+01 : f32
    %27 = vector.broadcast %cst_34 : f32 to vector<10x1xf32>
    %28 = arith.divf %26, %27 : vector<10x1xf32>
    %29 = vector.broadcast %28 : vector<10x1xf32> to vector<10x64xf32>
    %30 = arith.subf %17, %29 : vector<10x64xf32>
    %31 = arith.mulf %30, %30 : vector<10x64xf32>
    %cst_35 = arith.constant dense<0.000000e+00> : vector<10xf32>
    %32 = vector.multi_reduction <add>, %31, %cst_35 [1] : vector<10x64xf32> to vector<10xf32>
    %33 = vector.shape_cast %32 : vector<10xf32> to vector<10x1xf32>
    %cst_36 = arith.constant 6.400000e+01 : f32
    %34 = vector.broadcast %cst_36 : f32 to vector<10x1xf32>
    %35 = arith.divf %33, %34 : vector<10x1xf32>
    %cst_37 = arith.constant 9.99999974E-6 : f32
    %36 = vector.broadcast %cst_37 : f32 to vector<10x1xf32>
    %37 = arith.addf %35, %36 : vector<10x1xf32>
    %38 = math.rsqrt %37 : vector<10x1xf32>
    %39 = vector.broadcast %38 : vector<10x1xf32> to vector<10x64xf32>
    %40 = arith.mulf %30, %39 : vector<10x64xf32>
    %41 = vector.broadcast %18 : vector<1x64xf32> to vector<10x64xf32>
    %42 = arith.mulf %40, %41 : vector<10x64xf32>
    %43 = vector.broadcast %19 : vector<1x64xf32> to vector<10x64xf32>
    %44 = arith.addf %42, %43 : vector<10x64xf32>
    %45 = arith.truncf %44 : vector<10x64xf32> to vector<10x64xbf16>
    %cst_38 = arith.constant dense<0.000000e+00> : vector<10x192xf32>
    %46 = tpu.matmul %45, %20, %cst_38 {dimension_numbers = #tpu.dot_dimension_numbers<[1], [0], [0], [1], [0, 0, 1, 1], [], []>} : vector<10x64xbf16>, vector<64x192xbf16>, vector<10x192xf32> -> vector<10x192xf32>
    %47 = vector.broadcast %21 : vector<1x192xf32> to vector<10x192xf32>
    %48 = arith.addf %46, %47 : vector<10x192xf32>
    %49 = vector.extract_strided_slice %48 {offsets = [0, 0], sizes = [10, 64], strides = [1, 1]} : vector<10x192xf32> to vector<10x64xf32>
    %50 = vector.extract_strided_slice %48 {offsets = [0, 64], sizes = [10, 64], strides = [1, 1]} : vector<10x192xf32> to vector<10x64xf32>
    %51 = vector.extract_strided_slice %48 {offsets = [0, 128], sizes = [10, 64], strides = [1, 1]} : vector<10x192xf32> to vector<10x64xf32>
    %52 = arith.truncf %50 : vector<10x64xf32> to vector<10x64xbf16>
    %cst_39 = arith.constant dense<0.000000e+00> : vector<64x10xf32>
    %53 = tpu.matmul %22, %52, %cst_39 {dimension_numbers = #tpu.dot_dimension_numbers<[1], [1], [0], [0], [0, 0, 1, 0], [], []>} : vector<64x64xbf16>, vector<10x64xbf16>, vector<64x10xf32> -> vector<64x10xf32>
    %cst_40 = arith.constant 0.353553385 : f32
    %54 = vector.broadcast %cst_40 : f32 to vector<64x10xf32>
    %55 = arith.mulf %53, %54 : vector<64x10xf32>
    %cst_41 = arith.constant dense<0xFF800000> : vector<64xf32>
    %56 = vector.multi_reduction <maximumf>, %55, %cst_41 [1] : vector<64x10xf32> to vector<64xf32>
    %57 = vector.shape_cast %56 : vector<64xf32> to vector<64x1xf32>
    %58 = vector.broadcast %57 : vector<64x1xf32> to vector<64x10xf32>
    %59 = arith.subf %55, %58 : vector<64x10xf32>
    %60 = math.exp %59 : vector<64x10xf32>
    %cst_42 = arith.constant dense<0.000000e+00> : vector<64xf32>
    %61 = vector.multi_reduction <add>, %60, %cst_42 [1] : vector<64x10xf32> to vector<64xf32>
    %62 = vector.shape_cast %61 : vector<64xf32> to vector<64x1xf32>
    %63 = tpu.reciprocal %62 {approx = true} : vector<64x1xf32> -> vector<64x1xf32>
    %64 = vector.broadcast %63 : vector<64x1xf32> to vector<64x10xf32>
    %65 = arith.mulf %60, %64 : vector<64x10xf32>
    %66 = arith.truncf %65 : vector<64x10xf32> to vector<64x10xbf16>
    %67 = arith.truncf %51 : vector<10x64xf32> to vector<10x64xbf16>
    %cst_43 = arith.constant dense<0.000000e+00> : vector<64x64xf32>
    %68 = tpu.matmul %66, %67, %cst_43 {dimension_numbers = #tpu.dot_dimension_numbers<[1], [0], [0], [1], [0, 0, 1, 1], [], []>} : vector<64x10xbf16>, vector<10x64xbf16>, vector<64x64xf32> -> vector<64x64xf32>
    %69 = arith.extf %15 : vector<64x64xbf16> to vector<64x64xf32>
    %70 = arith.mulf %68, %69 : vector<64x64xf32>
    %71 = arith.truncf %49 : vector<10x64xf32> to vector<10x64xbf16>
    %cst_44 = arith.constant dense<0.000000e+00> : vector<10x64xf32>
    %72 = tpu.matmul %71, %22, %cst_44 {dimension_numbers = #tpu.dot_dimension_numbers<[1], [1], [0], [0], [0, 0, 1, 0], [], []>} : vector<10x64xbf16>, vector<64x64xbf16>, vector<10x64xf32> -> vector<10x64xf32>
    %cst_45 = arith.constant 0.353553385 : f32
    %73 = vector.broadcast %cst_45 : f32 to vector<10x64xf32>
    %74 = arith.mulf %72, %73 : vector<10x64xf32>
    %cst_46 = arith.constant dense<0xFF800000> : vector<10xf32>
    %75 = vector.multi_reduction <maximumf>, %74, %cst_46 [1] : vector<10x64xf32> to vector<10xf32>
    %76 = vector.shape_cast %75 : vector<10xf32> to vector<10x1xf32>
    %77 = vector.broadcast %76 : vector<10x1xf32> to vector<10x64xf32>
    %78 = arith.subf %74, %77 : vector<10x64xf32>
    %79 = math.exp %78 : vector<10x64xf32>
    %80 = arith.truncf %79 : vector<10x64xf32> to vector<10x64xbf16>
    %cst_47 = arith.constant dense<0.000000e+00> : vector<10x64xf32>
    %81 = tpu.matmul %80, %16, %cst_47 {dimension_numbers = #tpu.dot_dimension_numbers<[1], [0], [0], [1], [0, 0, 1, 1], [], []>} : vector<10x64xbf16>, vector<64x64xbf16>, vector<10x64xf32> -> vector<10x64xf32>
    %82 = tpu.reciprocal %81 {approx = true} : vector<10x64xf32> -> vector<10x64xf32>
    %83 = arith.mulf %79, %82 : vector<10x64xf32>
    %84 = arith.truncf %83 : vector<10x64xf32> to vector<10x64xbf16>
    %85 = arith.truncf %70 : vector<64x64xf32> to vector<64x64xbf16>
    %cst_48 = arith.constant dense<0.000000e+00> : vector<10x64xf32>
    %86 = tpu.matmul %84, %85, %cst_48 {dimension_numbers = #tpu.dot_dimension_numbers<[1], [0], [0], [1], [0, 0, 1, 1], [], []>} : vector<10x64xbf16>, vector<64x64xbf16>, vector<10x64xf32> -> vector<10x64xf32>
    %87 = arith.truncf %86 : vector<10x64xf32> to vector<10x64xbf16>
    %cst_49 = arith.constant dense<0.000000e+00> : vector<10x64xf32>
    %88 = tpu.matmul %87, %23, %cst_49 {dimension_numbers = #tpu.dot_dimension_numbers<[1], [0], [0], [1], [0, 0, 1, 1], [], []>} : vector<10x64xbf16>, vector<64x64xbf16>, vector<10x64xf32> -> vector<10x64xf32>
    %89 = arith.addf %17, %88 : vector<10x64xf32>
    %90 = vector.broadcast %24 : vector<1x64xf32> to vector<10x64xf32>
    %91 = arith.addf %89, %90 : vector<10x64xf32>
    %c0_50 = arith.constant 0 : index
    %c0_51 = arith.constant 0 : index
    %92 = vector.load %arg27[%c0_50, %c0_51] : memref<10x64xf32, #tpu.memory_space<vmem>>, vector<10x64xf32>
    tpu.vector_store %arg27[%c0_50, %c0_51], %91 {strides = array<i32>} : memref<10x64xf32, #tpu.memory_space<vmem>>, vector<10x64xf32>,
    %93 = vector.extract_strided_slice %91 {offsets = [1, 0], sizes = [9, 64], strides = [1, 1]} : vector<10x64xf32> to vector<9x64xf32>
    %c0_52 = arith.constant 0 : index
    %c0_53 = arith.constant 0 : index
    %94 = vector.load %arg14[%c0_52, %c0_53] : memref<25x64xf32, #tpu.memory_space<vmem>>, vector<25x64xf32>
    %95 = tpu.iota {dimensions = array<i32: 0>} : vector<9x1xi32>
    %c3_i32 = arith.constant 3 : i32
    %c0_i32 = arith.constant 0 : i32
    %96 = arith.cmpi eq, %c3_i32, %c0_i32 : i32
    %c1_i32 = arith.constant 1 : i32
    %97 = arith.select %96, %c1_i32, %c3_i32 : i32
    %98 = vector.broadcast %97 : i32 to vector<9x1xi32>
    %99 = arith.remsi %95, %98 : vector<9x1xi32>
    %c0_i32_54 = arith.constant 0 : i32
    %100 = vector.broadcast %c0_i32_54 : i32 to vector<9x1xi32>
    %101 = arith.cmpi ne, %99, %100 : vector<9x1xi32>
    %c0_i32_55 = arith.constant 0 : i32
    %102 = vector.broadcast %c0_i32_55 : i32 to vector<9x1xi32>
    %103 = arith.cmpi slt, %99, %102 : vector<9x1xi32>
    %c0_i32_56 = arith.constant 0 : i32
    %104 = arith.cmpi slt, %97, %c0_i32_56 : i32
    %105 = vector.broadcast %104 : i1 to vector<9x1xi1>
    %106 = vector.broadcast %105 : vector<9x1xi1> to vector<9x1xi1>
    %107 = arith.xori %103, %106 : vector<9x1xi1>
    %108 = arith.andi %107, %101 : vector<9x1xi1>
    %109 = vector.broadcast %97 : i32 to vector<9x1xi32>
    %110 = arith.addi %99, %109 : vector<9x1xi32>
    %111 = arith.select %108, %110, %99 : vector<9x1xi1>, vector<9x1xi32>
    %c0_i32_57 = arith.constant 0 : i32
    %112 = vector.broadcast %c0_i32_57 : i32 to vector<9x1xi32>
    %113 = arith.cmpi sge, %111, %112 : vector<9x1xi32>
    %c1_i32_58 = arith.constant 1 : i32
    %114 = vector.broadcast %c1_i32_58 : i32 to vector<9x1xi32>
    %115 = arith.cmpi slt, %111, %114 : vector<9x1xi32>
    %116 = arith.andi %113, %115 : vector<9x1xi1>
    %117 = arith.extui %116 : vector<9x1xi1> to vector<9x1xi32>
    %118 = arith.sitofp %117 : vector<9x1xi32> to vector<9x1xf32>
    %119 = vector.broadcast %118 : vector<9x1xf32> to vector<9x64xf32>
    %120 = arith.mulf %93, %119 : vector<9x64xf32>
    %c9_59 = arith.constant 9 : index
    %c0_60 = arith.constant 0 : index
    %121 = vector.load %arg27[%c9_59, %c0_60] : memref<10x64xf32, #tpu.memory_space<vmem>>, vector<1x64xf32>
    %122 = vector.extract_strided_slice %120 {offsets = [0, 0], sizes = [1, 64], strides = [1, 1]} : vector<9x64xf32> to vector<1x64xf32>
    %123 = vector.extract_strided_slice %94 {offsets = [0, 0], sizes = [1, 64], strides = [1, 1]} : vector<25x64xf32> to vector<1x64xf32>
    %124 = arith.mulf %122, %123 : vector<1x64xf32>
    %125 = arith.addf %121, %124 : vector<1x64xf32>
    %c9_61 = arith.constant 9 : index
    %c0_62 = arith.constant 0 : index
    %126 = vector.load %arg27[%c9_61, %c0_62] : memref<10x64xf32, #tpu.memory_space<vmem>>, vector<1x64xf32>
    tpu.vector_store %arg27[%c9_61, %c0_62], %125 {strides = array<i32>} : memref<10x64xf32, #tpu.memory_space<vmem>>, vector<1x64xf32>,
    %c6 = arith.constant 6 : index
    %c0_63 = arith.constant 0 : index
    %127 = vector.load %arg27[%c6, %c0_63] : memref<10x64xf32, #tpu.memory_space<vmem>>, vector<4x64xf32>
    %128 = vector.extract_strided_slice %120 {offsets = [0, 0], sizes = [4, 64], strides = [1, 1]} : vector<9x64xf32> to vector<4x64xf32>
    %129 = vector.extract_strided_slice %94 {offsets = [5, 0], sizes = [1, 64], strides = [1, 1]} : vector<25x64xf32> to vector<1x64xf32>
    %130 = vector.broadcast %129 : vector<1x64xf32> to vector<4x64xf32>
    %131 = arith.mulf %128, %130 : vector<4x64xf32>
    %132 = arith.addf %127, %131 : vector<4x64xf32>
    %c6_64 = arith.constant 6 : index
    %c0_65 = arith.constant 0 : index
    %133 = vector.load %arg27[%c6_64, %c0_65] : memref<10x64xf32, #tpu.memory_space<vmem>>, vector<4x64xf32>
    tpu.vector_store %arg27[%c6_64, %c0_65], %132 {strides = array<i32>} : memref<10x64xf32, #tpu.memory_space<vmem>>, vector<4x64xf32>,
    %c3 = arith.constant 3 : index
    %c0_66 = arith.constant 0 : index
    %134 = vector.load %arg27[%c3, %c0_66] : memref<10x64xf32, #tpu.memory_space<vmem>>, vector<7x64xf32>
    %135 = vector.extract_strided_slice %120 {offsets = [0, 0], sizes = [7, 64], strides = [1, 1]} : vector<9x64xf32> to vector<7x64xf32>
    %136 = vector.extract_strided_slice %94 {offsets = [10, 0], sizes = [1, 64], strides = [1, 1]} : vector<25x64xf32> to vector<1x64xf32>
    %137 = vector.broadcast %136 : vector<1x64xf32> to vector<7x64xf32>
    %138 = arith.mulf %135, %137 : vector<7x64xf32>
    %139 = arith.addf %134, %138 : vector<7x64xf32>
    %c3_67 = arith.constant 3 : index
    %c0_68 = arith.constant 0 : index
    %140 = vector.load %arg27[%c3_67, %c0_68] : memref<10x64xf32, #tpu.memory_space<vmem>>, vector<7x64xf32>
    tpu.vector_store %arg27[%c3_67, %c0_68], %139 {strides = array<i32>} : memref<10x64xf32, #tpu.memory_space<vmem>>, vector<7x64xf32>,
    %c1_69 = arith.constant 1 : index
    %c0_70 = arith.constant 0 : index
    %141 = vector.load %arg27[%c1_69, %c0_70] : memref<10x64xf32, #tpu.memory_space<vmem>>, vector<8x64xf32>
    %142 = vector.extract_strided_slice %120 {offsets = [1, 0], sizes = [8, 64], strides = [1, 1]} : vector<9x64xf32> to vector<8x64xf32>
    %143 = vector.extract_strided_slice %94 {offsets = [15, 0], sizes = [1, 64], strides = [1, 1]} : vector<25x64xf32> to vector<1x64xf32>
    %144 = vector.broadcast %143 : vector<1x64xf32> to vector<8x64xf32>
    %145 = arith.mulf %142, %144 : vector<8x64xf32>
    %146 = arith.addf %141, %145 : vector<8x64xf32>
    %c1_71 = arith.constant 1 : index
    %c0_72 = arith.constant 0 : index
    %147 = vector.load %arg27[%c1_71, %c0_72] : memref<10x64xf32, #tpu.memory_space<vmem>>, vector<8x64xf32>
    tpu.vector_store %arg27[%c1_71, %c0_72], %146 {strides = array<i32>} : memref<10x64xf32, #tpu.memory_space<vmem>>, vector<8x64xf32>,
    %c1_73 = arith.constant 1 : index
    %c0_74 = arith.constant 0 : index
    %148 = vector.load %arg27[%c1_73, %c0_74] : memref<10x64xf32, #tpu.memory_space<vmem>>, vector<5x64xf32>
    %149 = vector.extract_strided_slice %120 {offsets = [4, 0], sizes = [5, 64], strides = [1, 1]} : vector<9x64xf32> to vector<5x64xf32>
    %150 = vector.extract_strided_slice %94 {offsets = [20, 0], sizes = [1, 64], strides = [1, 1]} : vector<25x64xf32> to vector<1x64xf32>
    %151 = vector.broadcast %150 : vector<1x64xf32> to vector<5x64xf32>
    %152 = arith.mulf %149, %151 : vector<5x64xf32>
    %153 = arith.addf %148, %152 : vector<5x64xf32>
    %c1_75 = arith.constant 1 : index
    %c0_76 = arith.constant 0 : index
    %154 = vector.load %arg27[%c1_75, %c0_76] : memref<10x64xf32, #tpu.memory_space<vmem>>, vector<5x64xf32>
    tpu.vector_store %arg27[%c1_75, %c0_76], %153 {strides = array<i32>} : memref<10x64xf32, #tpu.memory_space<vmem>>, vector<5x64xf32>,
    %c0_i32_77 = arith.constant 0 : i32
    %155 = vector.broadcast %c0_i32_77 : i32 to vector<9x1xi32>
    %156 = arith.cmpi sge, %111, %155 : vector<9x1xi32>
    %c2_i32 = arith.constant 2 : i32
    %157 = vector.broadcast %c2_i32 : i32 to vector<9x1xi32>
    %158 = arith.cmpi slt, %111, %157 : vector<9x1xi32>
    %159 = arith.andi %156, %158 : vector<9x1xi1>
    %160 = arith.extui %159 : vector<9x1xi1> to vector<9x1xi32>
    %161 = arith.sitofp %160 : vector<9x1xi32> to vector<9x1xf32>
    %162 = vector.broadcast %161 : vector<9x1xf32> to vector<9x64xf32>
    %163 = arith.mulf %93, %162 : vector<9x64xf32>
    %c8 = arith.constant 8 : index
    %c0_78 = arith.constant 0 : index
    %164 = vector.load %arg27[%c8, %c0_78] : memref<10x64xf32, #tpu.memory_space<vmem>>, vector<2x64xf32>
    %165 = vector.extract_strided_slice %163 {offsets = [0, 0], sizes = [2, 64], strides = [1, 1]} : vector<9x64xf32> to vector<2x64xf32>
    %166 = vector.extract_strided_slice %94 {offsets = [1, 0], sizes = [1, 64], strides = [1, 1]} : vector<25x64xf32> to vector<1x64xf32>
    %167 = vector.broadcast %166 : vector<1x64xf32> to vector<2x64xf32>
    %168 = arith.mulf %165, %167 : vector<2x64xf32>
    %169 = arith.addf %164, %168 : vector<2x64xf32>
    %c8_79 = arith.constant 8 : index
    %c0_80 = arith.constant 0 : index
    %170 = vector.load %arg27[%c8_79, %c0_80] : memref<10x64xf32, #tpu.memory_space<vmem>>, vector<2x64xf32>
    tpu.vector_store %arg27[%c8_79, %c0_80], %169 {strides = array<i32>} : memref<10x64xf32, #tpu.memory_space<vmem>>, vector<2x64xf32>,
    %c5 = arith.constant 5 : index
    %c0_81 = arith.constant 0 : index
    %171 = vector.load %arg27[%c5, %c0_81] : memref<10x64xf32, #tpu.memory_space<vmem>>, vector<5x64xf32>
    %172 = vector.extract_strided_slice %163 {offsets = [0, 0], sizes = [5, 64], strides = [1, 1]} : vector<9x64xf32> to vector<5x64xf32>
    %173 = vector.extract_strided_slice %94 {offsets = [6, 0], sizes = [1, 64], strides = [1, 1]} : vector<25x64xf32> to vector<1x64xf32>
    %174 = vector.broadcast %173 : vector<1x64xf32> to vector<5x64xf32>
    %175 = arith.mulf %172, %174 : vector<5x64xf32>
    %176 = arith.addf %171, %175 : vector<5x64xf32>
    %c5_82 = arith.constant 5 : index
    %c0_83 = arith.constant 0 : index
    %177 = vector.load %arg27[%c5_82, %c0_83] : memref<10x64xf32, #tpu.memory_space<vmem>>, vector<5x64xf32>
    tpu.vector_store %arg27[%c5_82, %c0_83], %176 {strides = array<i32>} : memref<10x64xf32, #tpu.memory_space<vmem>>, vector<5x64xf32>,
    %c2 = arith.constant 2 : index
    %c0_84 = arith.constant 0 : index
    %178 = vector.load %arg27[%c2, %c0_84] : memref<10x64xf32, #tpu.memory_space<vmem>>, vector<8x64xf32>
    %179 = vector.extract_strided_slice %163 {offsets = [0, 0], sizes = [8, 64], strides = [1, 1]} : vector<9x64xf32> to vector<8x64xf32>
    %180 = vector.extract_strided_slice %94 {offsets = [11, 0], sizes = [1, 64], strides = [1, 1]} : vector<25x64xf32> to vector<1x64xf32>
    %181 = vector.broadcast %180 : vector<1x64xf32> to vector<8x64xf32>
    %182 = arith.mulf %179, %181 : vector<8x64xf32>
    %183 = arith.addf %178, %182 : vector<8x64xf32>
    %c2_85 = arith.constant 2 : index
    %c0_86 = arith.constant 0 : index
    %184 = vector.load %arg27[%c2_85, %c0_86] : memref<10x64xf32, #tpu.memory_space<vmem>>, vector<8x64xf32>
    tpu.vector_store %arg27[%c2_85, %c0_86], %183 {strides = array<i32>} : memref<10x64xf32, #tpu.memory_space<vmem>>, vector<8x64xf32>,
    %c1_87 = arith.constant 1 : index
    %c0_88 = arith.constant 0 : index
    %185 = vector.load %arg27[%c1_87, %c0_88] : memref<10x64xf32, #tpu.memory_space<vmem>>, vector<7x64xf32>
    %186 = vector.extract_strided_slice %163 {offsets = [2, 0], sizes = [7, 64], strides = [1, 1]} : vector<9x64xf32> to vector<7x64xf32>
    %187 = vector.extract_strided_slice %94 {offsets = [16, 0], sizes = [1, 64], strides = [1, 1]} : vector<25x64xf32> to vector<1x64xf32>
    %188 = vector.broadcast %187 : vector<1x64xf32> to vector<7x64xf32>
    %189 = arith.mulf %186, %188 : vector<7x64xf32>
    %190 = arith.addf %185, %189 : vector<7x64xf32>
    %c1_89 = arith.constant 1 : index
    %c0_90 = arith.constant 0 : index
    %191 = vector.load %arg27[%c1_89, %c0_90] : memref<10x64xf32, #tpu.memory_space<vmem>>, vector<7x64xf32>
    tpu.vector_store %arg27[%c1_89, %c0_90], %190 {strides = array<i32>} : memref<10x64xf32, #tpu.memory_space<vmem>>, vector<7x64xf32>,
    %c1_91 = arith.constant 1 : index
    %c0_92 = arith.constant 0 : index
    %192 = vector.load %arg27[%c1_91, %c0_92] : memref<10x64xf32, #tpu.memory_space<vmem>>, vector<4x64xf32>
    %193 = vector.extract_strided_slice %163 {offsets = [5, 0], sizes = [4, 64], strides = [1, 1]} : vector<9x64xf32> to vector<4x64xf32>
    %194 = vector.extract_strided_slice %94 {offsets = [21, 0], sizes = [1, 64], strides = [1, 1]} : vector<25x64xf32> to vector<1x64xf32>
    %195 = vector.broadcast %194 : vector<1x64xf32> to vector<4x64xf32>
    %196 = arith.mulf %193, %195 : vector<4x64xf32>
    %197 = arith.addf %192, %196 : vector<4x64xf32>
    %c1_93 = arith.constant 1 : index
    %c0_94 = arith.constant 0 : index
    %198 = vector.load %arg27[%c1_93, %c0_94] : memref<10x64xf32, #tpu.memory_space<vmem>>, vector<4x64xf32>
    tpu.vector_store %arg27[%c1_93, %c0_94], %197 {strides = array<i32>} : memref<10x64xf32, #tpu.memory_space<vmem>>, vector<4x64xf32>,
    %c7 = arith.constant 7 : index
    %c0_95 = arith.constant 0 : index
    %199 = vector.load %arg27[%c7, %c0_95] : memref<10x64xf32, #tpu.memory_space<vmem>>, vector<3x64xf32>
    %200 = vector.extract_strided_slice %93 {offsets = [0, 0], sizes = [3, 64], strides = [1, 1]} : vector<9x64xf32> to vector<3x64xf32>
    %201 = vector.extract_strided_slice %94 {offsets = [2, 0], sizes = [1, 64], strides = [1, 1]} : vector<25x64xf32> to vector<1x64xf32>
    %202 = vector.broadcast %201 : vector<1x64xf32> to vector<3x64xf32>
    %203 = arith.mulf %200, %202 : vector<3x64xf32>
    %204 = arith.addf %199, %203 : vector<3x64xf32>
    %c7_96 = arith.constant 7 : index
    %c0_97 = arith.constant 0 : index
    %205 = vector.load %arg27[%c7_96, %c0_97] : memref<10x64xf32, #tpu.memory_space<vmem>>, vector<3x64xf32>
    tpu.vector_store %arg27[%c7_96, %c0_97], %204 {strides = array<i32>} : memref<10x64xf32, #tpu.memory_space<vmem>>, vector<3x64xf32>,
    %c4 = arith.constant 4 : index
    %c0_98 = arith.constant 0 : index
    %206 = vector.load %arg27[%c4, %c0_98] : memref<10x64xf32, #tpu.memory_space<vmem>>, vector<6x64xf32>
    %207 = vector.extract_strided_slice %93 {offsets = [0, 0], sizes = [6, 64], strides = [1, 1]} : vector<9x64xf32> to vector<6x64xf32>
    %208 = vector.extract_strided_slice %94 {offsets = [7, 0], sizes = [1, 64], strides = [1, 1]} : vector<25x64xf32> to vector<1x64xf32>
    %209 = vector.broadcast %208 : vector<1x64xf32> to vector<6x64xf32>
    %210 = arith.mulf %207, %209 : vector<6x64xf32>
    %211 = arith.addf %206, %210 : vector<6x64xf32>
    %c4_99 = arith.constant 4 : index
    %c0_100 = arith.constant 0 : index
    %212 = vector.load %arg27[%c4_99, %c0_100] : memref<10x64xf32, #tpu.memory_space<vmem>>, vector<6x64xf32>
    tpu.vector_store %arg27[%c4_99, %c0_100], %211 {strides = array<i32>} : memref<10x64xf32, #tpu.memory_space<vmem>>, vector<6x64xf32>,
    %c1_101 = arith.constant 1 : index
    %c0_102 = arith.constant 0 : index
    %213 = vector.load %arg27[%c1_101, %c0_102] : memref<10x64xf32, #tpu.memory_space<vmem>>, vector<9x64xf32>
    %214 = vector.extract_strided_slice %94 {offsets = [12, 0], sizes = [1, 64], strides = [1, 1]} : vector<25x64xf32> to vector<1x64xf32>
    %215 = vector.broadcast %214 : vector<1x64xf32> to vector<9x64xf32>
    %216 = arith.mulf %93, %215 : vector<9x64xf32>
    %217 = arith.addf %213, %216 : vector<9x64xf32>
    %c1_103 = arith.constant 1 : index
    %c0_104 = arith.constant 0 : index
    %218 = vector.load %arg27[%c1_103, %c0_104] : memref<10x64xf32, #tpu.memory_space<vmem>>, vector<9x64xf32>
    tpu.vector_store %arg27[%c1_103, %c0_104], %217 {strides = array<i32>} : memref<10x64xf32, #tpu.memory_space<vmem>>, vector<9x64xf32>,
    %c1_105 = arith.constant 1 : index
    %c0_106 = arith.constant 0 : index
    %219 = vector.load %arg27[%c1_105, %c0_106] : memref<10x64xf32, #tpu.memory_space<vmem>>, vector<6x64xf32>
    %220 = vector.extract_strided_slice %93 {offsets = [3, 0], sizes = [6, 64], strides = [1, 1]} : vector<9x64xf32> to vector<6x64xf32>
    %221 = vector.extract_strided_slice %94 {offsets = [17, 0], sizes = [1, 64], strides = [1, 1]} : vector<25x64xf32> to vector<1x64xf32>
    %222 = vector.broadcast %221 : vector<1x64xf32> to vector<6x64xf32>
    %223 = arith.mulf %220, %222 : vector<6x64xf32>
    %224 = arith.addf %219, %223 : vector<6x64xf32>
    %c1_107 = arith.constant 1 : index
    %c0_108 = arith.constant 0 : index
    %225 = vector.load %arg27[%c1_107, %c0_108] : memref<10x64xf32, #tpu.memory_space<vmem>>, vector<6x64xf32>
    tpu.vector_store %arg27[%c1_107, %c0_108], %224 {strides = array<i32>} : memref<10x64xf32, #tpu.memory_space<vmem>>, vector<6x64xf32>,
    %c1_109 = arith.constant 1 : index
    %c0_110 = arith.constant 0 : index
    %226 = vector.load %arg27[%c1_109, %c0_110] : memref<10x64xf32, #tpu.memory_space<vmem>>, vector<3x64xf32>
    %227 = vector.extract_strided_slice %93 {offsets = [6, 0], sizes = [3, 64], strides = [1, 1]} : vector<9x64xf32> to vector<3x64xf32>
    %228 = vector.extract_strided_slice %94 {offsets = [22, 0], sizes = [1, 64], strides = [1, 1]} : vector<25x64xf32> to vector<1x64xf32>
    %229 = vector.broadcast %228 : vector<1x64xf32> to vector<3x64xf32>
    %230 = arith.mulf %227, %229 : vector<3x64xf32>
    %231 = arith.addf %226, %230 : vector<3x64xf32>
    %c1_111 = arith.constant 1 : index
    %c0_112 = arith.constant 0 : index
    %232 = vector.load %arg27[%c1_111, %c0_112] : memref<10x64xf32, #tpu.memory_space<vmem>>, vector<3x64xf32>
    tpu.vector_store %arg27[%c1_111, %c0_112], %231 {strides = array<i32>} : memref<10x64xf32, #tpu.memory_space<vmem>>, vector<3x64xf32>,
    %c1_i32_113 = arith.constant 1 : i32
    %233 = vector.broadcast %c1_i32_113 : i32 to vector<9x1xi32>
    %234 = arith.cmpi sge, %111, %233 : vector<9x1xi32>
    %c3_i32_114 = arith.constant 3 : i32
    %235 = vector.broadcast %c3_i32_114 : i32 to vector<9x1xi32>
    %236 = arith.cmpi slt, %111, %235 : vector<9x1xi32>
    %237 = arith.andi %234, %236 : vector<9x1xi1>
    %238 = arith.extui %237 : vector<9x1xi1> to vector<9x1xi32>
    %239 = arith.sitofp %238 : vector<9x1xi32> to vector<9x1xf32>
    %240 = vector.broadcast %239 : vector<9x1xf32> to vector<9x64xf32>
    %241 = arith.mulf %93, %240 : vector<9x64xf32>
    %c6_115 = arith.constant 6 : index
    %c0_116 = arith.constant 0 : index
    %242 = vector.load %arg27[%c6_115, %c0_116] : memref<10x64xf32, #tpu.memory_space<vmem>>, vector<4x64xf32>
    %243 = vector.extract_strided_slice %241 {offsets = [0, 0], sizes = [4, 64], strides = [1, 1]} : vector<9x64xf32> to vector<4x64xf32>
    %244 = vector.extract_strided_slice %94 {offsets = [3, 0], sizes = [1, 64], strides = [1, 1]} : vector<25x64xf32> to vector<1x64xf32>
    %245 = vector.broadcast %244 : vector<1x64xf32> to vector<4x64xf32>
    %246 = arith.mulf %243, %245 : vector<4x64xf32>
    %247 = arith.addf %242, %246 : vector<4x64xf32>
    %c6_117 = arith.constant 6 : index
    %c0_118 = arith.constant 0 : index
    %248 = vector.load %arg27[%c6_117, %c0_118] : memref<10x64xf32, #tpu.memory_space<vmem>>, vector<4x64xf32>
    tpu.vector_store %arg27[%c6_117, %c0_118], %247 {strides = array<i32>} : memref<10x64xf32, #tpu.memory_space<vmem>>, vector<4x64xf32>,
    %c3_119 = arith.constant 3 : index
    %c0_120 = arith.constant 0 : index
    %249 = vector.load %arg27[%c3_119, %c0_120] : memref<10x64xf32, #tpu.memory_space<vmem>>, vector<7x64xf32>
    %250 = vector.extract_strided_slice %241 {offsets = [0, 0], sizes = [7, 64], strides = [1, 1]} : vector<9x64xf32> to vector<7x64xf32>
    %251 = vector.extract_strided_slice %94 {offsets = [8, 0], sizes = [1, 64], strides = [1, 1]} : vector<25x64xf32> to vector<1x64xf32>
    %252 = vector.broadcast %251 : vector<1x64xf32> to vector<7x64xf32>
    %253 = arith.mulf %250, %252 : vector<7x64xf32>
    %254 = arith.addf %249, %253 : vector<7x64xf32>
    %c3_121 = arith.constant 3 : index
    %c0_122 = arith.constant 0 : index
    %255 = vector.load %arg27[%c3_121, %c0_122] : memref<10x64xf32, #tpu.memory_space<vmem>>, vector<7x64xf32>
    tpu.vector_store %arg27[%c3_121, %c0_122], %254 {strides = array<i32>} : memref<10x64xf32, #tpu.memory_space<vmem>>, vector<7x64xf32>,
    %c1_123 = arith.constant 1 : index
    %c0_124 = arith.constant 0 : index
    %256 = vector.load %arg27[%c1_123, %c0_124] : memref<10x64xf32, #tpu.memory_space<vmem>>, vector<8x64xf32>
    %257 = vector.extract_strided_slice %241 {offsets = [1, 0], sizes = [8, 64], strides = [1, 1]} : vector<9x64xf32> to vector<8x64xf32>
    %258 = vector.extract_strided_slice %94 {offsets = [13, 0], sizes = [1, 64], strides = [1, 1]} : vector<25x64xf32> to vector<1x64xf32>
    %259 = vector.broadcast %258 : vector<1x64xf32> to vector<8x64xf32>
    %260 = arith.mulf %257, %259 : vector<8x64xf32>
    %261 = arith.addf %256, %260 : vector<8x64xf32>
    %c1_125 = arith.constant 1 : index
    %c0_126 = arith.constant 0 : index
    %262 = vector.load %arg27[%c1_125, %c0_126] : memref<10x64xf32, #tpu.memory_space<vmem>>, vector<8x64xf32>
    tpu.vector_store %arg27[%c1_125, %c0_126], %261 {strides = array<i32>} : memref<10x64xf32, #tpu.memory_space<vmem>>, vector<8x64xf32>,
    %c1_127 = arith.constant 1 : index
    %c0_128 = arith.constant 0 : index
    %263 = vector.load %arg27[%c1_127, %c0_128] : memref<10x64xf32, #tpu.memory_space<vmem>>, vector<5x64xf32>
    %264 = vector.extract_strided_slice %241 {offsets = [4, 0], sizes = [5, 64], strides = [1, 1]} : vector<9x64xf32> to vector<5x64xf32>
    %265 = vector.extract_strided_slice %94 {offsets = [18, 0], sizes = [1, 64], strides = [1, 1]} : vector<25x64xf32> to vector<1x64xf32>
    %266 = vector.broadcast %265 : vector<1x64xf32> to vector<5x64xf32>
    %267 = arith.mulf %264, %266 : vector<5x64xf32>
    %268 = arith.addf %263, %267 : vector<5x64xf32>
    %c1_129 = arith.constant 1 : index
    %c0_130 = arith.constant 0 : index
    %269 = vector.load %arg27[%c1_129, %c0_130] : memref<10x64xf32, #tpu.memory_space<vmem>>, vector<5x64xf32>
    tpu.vector_store %arg27[%c1_129, %c0_130], %268 {strides = array<i32>} : memref<10x64xf32, #tpu.memory_space<vmem>>, vector<5x64xf32>,
    %c1_131 = arith.constant 1 : index
    %c0_132 = arith.constant 0 : index
    %270 = vector.load %arg27[%c1_131, %c0_132] : memref<10x64xf32, #tpu.memory_space<vmem>>, vector<2x64xf32>
    %271 = vector.extract_strided_slice %241 {offsets = [7, 0], sizes = [2, 64], strides = [1, 1]} : vector<9x64xf32> to vector<2x64xf32>
    %272 = vector.extract_strided_slice %94 {offsets = [23, 0], sizes = [1, 64], strides = [1, 1]} : vector<25x64xf32> to vector<1x64xf32>
    %273 = vector.broadcast %272 : vector<1x64xf32> to vector<2x64xf32>
    %274 = arith.mulf %271, %273 : vector<2x64xf32>
    %275 = arith.addf %270, %274 : vector<2x64xf32>
    %c1_133 = arith.constant 1 : index
    %c0_134 = arith.constant 0 : index
    %276 = vector.load %arg27[%c1_133, %c0_134] : memref<10x64xf32, #tpu.memory_space<vmem>>, vector<2x64xf32>
    tpu.vector_store %arg27[%c1_133, %c0_134], %275 {strides = array<i32>} : memref<10x64xf32, #tpu.memory_space<vmem>>, vector<2x64xf32>,
    %c2_i32_135 = arith.constant 2 : i32
    %277 = vector.broadcast %c2_i32_135 : i32 to vector<9x1xi32>
    %278 = arith.cmpi sge, %111, %277 : vector<9x1xi32>
    %c3_i32_136 = arith.constant 3 : i32
    %279 = vector.broadcast %c3_i32_136 : i32 to vector<9x1xi32>
    %280 = arith.cmpi slt, %111, %279 : vector<9x1xi32>
    %281 = arith.andi %278, %280 : vector<9x1xi1>
    %282 = arith.extui %281 : vector<9x1xi1> to vector<9x1xi32>
    %283 = arith.sitofp %282 : vector<9x1xi32> to vector<9x1xf32>
    %284 = vector.broadcast %283 : vector<9x1xf32> to vector<9x64xf32>
    %285 = arith.mulf %93, %284 : vector<9x64xf32>
    %c5_137 = arith.constant 5 : index
    %c0_138 = arith.constant 0 : index
    %286 = vector.load %arg27[%c5_137, %c0_138] : memref<10x64xf32, #tpu.memory_space<vmem>>, vector<5x64xf32>
    %287 = vector.extract_strided_slice %285 {offsets = [0, 0], sizes = [5, 64], strides = [1, 1]} : vector<9x64xf32> to vector<5x64xf32>
    %288 = vector.extract_strided_slice %94 {offsets = [4, 0], sizes = [1, 64], strides = [1, 1]} : vector<25x64xf32> to vector<1x64xf32>
    %289 = vector.broadcast %288 : vector<1x64xf32> to vector<5x64xf32>
    %290 = arith.mulf %287, %289 : vector<5x64xf32>
    %291 = arith.addf %286, %290 : vector<5x64xf32>
    %c5_139 = arith.constant 5 : index
    %c0_140 = arith.constant 0 : index
    %292 = vector.load %arg27[%c5_139, %c0_140] : memref<10x64xf32, #tpu.memory_space<vmem>>, vector<5x64xf32>
    tpu.vector_store %arg27[%c5_139, %c0_140], %291 {strides = array<i32>} : memref<10x64xf32, #tpu.memory_space<vmem>>, vector<5x64xf32>,
    %c2_141 = arith.constant 2 : index
    %c0_142 = arith.constant 0 : index
    %293 = vector.load %arg27[%c2_141, %c0_142] : memref<10x64xf32, #tpu.memory_space<vmem>>, vector<8x64xf32>
    %294 = vector.extract_strided_slice %285 {offsets = [0, 0], sizes = [8, 64], strides = [1, 1]} : vector<9x64xf32> to vector<8x64xf32>
    %295 = vector.extract_strided_slice %94 {offsets = [9, 0], sizes = [1, 64], strides = [1, 1]} : vector<25x64xf32> to vector<1x64xf32>
    %296 = vector.broadcast %295 : vector<1x64xf32> to vector<8x64xf32>
    %297 = arith.mulf %294, %296 : vector<8x64xf32>
    %298 = arith.addf %293, %297 : vector<8x64xf32>
    %c2_143 = arith.constant 2 : index
    %c0_144 = arith.constant 0 : index
    %299 = vector.load %arg27[%c2_143, %c0_144] : memref<10x64xf32, #tpu.memory_space<vmem>>, vector<8x64xf32>
    tpu.vector_store %arg27[%c2_143, %c0_144], %298 {strides = array<i32>} : memref<10x64xf32, #tpu.memory_space<vmem>>, vector<8x64xf32>,
    %c1_145 = arith.constant 1 : index
    %c0_146 = arith.constant 0 : index
    %300 = vector.load %arg27[%c1_145, %c0_146] : memref<10x64xf32, #tpu.memory_space<vmem>>, vector<7x64xf32>
    %301 = vector.extract_strided_slice %285 {offsets = [2, 0], sizes = [7, 64], strides = [1, 1]} : vector<9x64xf32> to vector<7x64xf32>
    %302 = vector.extract_strided_slice %94 {offsets = [14, 0], sizes = [1, 64], strides = [1, 1]} : vector<25x64xf32> to vector<1x64xf32>
    %303 = vector.broadcast %302 : vector<1x64xf32> to vector<7x64xf32>
    %304 = arith.mulf %301, %303 : vector<7x64xf32>
    %305 = arith.addf %300, %304 : vector<7x64xf32>
    %c1_147 = arith.constant 1 : index
    %c0_148 = arith.constant 0 : index
    %306 = vector.load %arg27[%c1_147, %c0_148] : memref<10x64xf32, #tpu.memory_space<vmem>>, vector<7x64xf32>
    tpu.vector_store %arg27[%c1_147, %c0_148], %305 {strides = array<i32>} : memref<10x64xf32, #tpu.memory_space<vmem>>, vector<7x64xf32>,
    %c1_149 = arith.constant 1 : index
    %c0_150 = arith.constant 0 : index
    %307 = vector.load %arg27[%c1_149, %c0_150] : memref<10x64xf32, #tpu.memory_space<vmem>>, vector<4x64xf32>
    %308 = vector.extract_strided_slice %285 {offsets = [5, 0], sizes = [4, 64], strides = [1, 1]} : vector<9x64xf32> to vector<4x64xf32>
    %309 = vector.extract_strided_slice %94 {offsets = [19, 0], sizes = [1, 64], strides = [1, 1]} : vector<25x64xf32> to vector<1x64xf32>
    %310 = vector.broadcast %309 : vector<1x64xf32> to vector<4x64xf32>
    %311 = arith.mulf %308, %310 : vector<4x64xf32>
    %312 = arith.addf %307, %311 : vector<4x64xf32>
    %c1_151 = arith.constant 1 : index
    %c0_152 = arith.constant 0 : index
    %313 = vector.load %arg27[%c1_151, %c0_152] : memref<10x64xf32, #tpu.memory_space<vmem>>, vector<4x64xf32>
    tpu.vector_store %arg27[%c1_151, %c0_152], %312 {strides = array<i32>} : memref<10x64xf32, #tpu.memory_space<vmem>>, vector<4x64xf32>,
    %c1_153 = arith.constant 1 : index
    %c0_154 = arith.constant 0 : index
    %314 = vector.load %arg27[%c1_153, %c0_154] : memref<10x64xf32, #tpu.memory_space<vmem>>, vector<1x64xf32>
    %315 = vector.extract_strided_slice %285 {offsets = [8, 0], sizes = [1, 64], strides = [1, 1]} : vector<9x64xf32> to vector<1x64xf32>
    %316 = vector.extract_strided_slice %94 {offsets = [24, 0], sizes = [1, 64], strides = [1, 1]} : vector<25x64xf32> to vector<1x64xf32>
    %317 = arith.mulf %315, %316 : vector<1x64xf32>
    %318 = arith.addf %314, %317 : vector<1x64xf32>
    %c1_155 = arith.constant 1 : index
    %c0_156 = arith.constant 0 : index
    %319 = vector.load %arg27[%c1_155, %c0_156] : memref<10x64xf32, #tpu.memory_space<vmem>>, vector<1x64xf32>
    tpu.vector_store %arg27[%c1_155, %c0_156], %318 {strides = array<i32>} : memref<10x64xf32, #tpu.memory_space<vmem>>, vector<1x64xf32>,
    %c0_157 = arith.constant 0 : index
    %c0_158 = arith.constant 0 : index
    %320 = vector.load %arg27[%c0_157, %c0_158] : memref<10x64xf32, #tpu.memory_space<vmem>>, vector<10x64xf32>
    %c0_159 = arith.constant 0 : index
    %c0_160 = arith.constant 0 : index
    %321 = vector.load %arg15[%c0_159, %c0_160] : memref<1x64xf32, #tpu.memory_space<vmem>>, vector<1x64xf32>
    %c0_161 = arith.constant 0 : index
    %c0_162 = arith.constant 0 : index
    %322 = vector.load %arg16[%c0_161, %c0_162] : memref<1x64xf32, #tpu.memory_space<vmem>>, vector<1x64xf32>
    %c0_163 = arith.constant 0 : index
    %c0_164 = arith.constant 0 : index
    %323 = vector.load %arg17[%c0_163, %c0_164] : memref<64x192xbf16, #tpu.memory_space<vmem>>, vector<64x192xbf16>
    %c0_165 = arith.constant 0 : index
    %c0_166 = arith.constant 0 : index
    %324 = vector.load %arg18[%c0_165, %c0_166] : memref<1x192xf32, #tpu.memory_space<vmem>>, vector<1x192xf32>
    %c0_167 = arith.constant 0 : index
    %c0_168 = arith.constant 0 : index
    %325 = vector.load %arg19[%c0_167, %c0_168] : memref<64x64xbf16, #tpu.memory_space<vmem>>, vector<64x64xbf16>
    %c0_169 = arith.constant 0 : index
    %c0_170 = arith.constant 0 : index
    %326 = vector.load %arg20[%c0_169, %c0_170] : memref<64x64xbf16, #tpu.memory_space<vmem>>, vector<64x64xbf16>
    %c0_171 = arith.constant 0 : index
    %c0_172 = arith.constant 0 : index
    %327 = vector.load %arg21[%c0_171, %c0_172] : memref<1x64xf32, #tpu.memory_space<vmem>>, vector<1x64xf32>
    %cst_173 = arith.constant dense<0.000000e+00> : vector<10xf32>
    %328 = vector.multi_reduction <add>, %320, %cst_173 [1] : vector<10x64xf32> to vector<10xf32>
    %329 = vector.shape_cast %328 : vector<10xf32> to vector<10x1xf32>
    %cst_174 = arith.constant 6.400000e+01 : f32
    %330 = vector.broadcast %cst_174 : f32 to vector<10x1xf32>
    %331 = arith.divf %329, %330 : vector<10x1xf32>
    %332 = vector.broadcast %331 : vector<10x1xf32> to vector<10x64xf32>
    %333 = arith.subf %320, %332 : vector<10x64xf32>
    %334 = arith.mulf %333, %333 : vector<10x64xf32>
    %cst_175 = arith.constant dense<0.000000e+00> : vector<10xf32>
    %335 = vector.multi_reduction <add>, %334, %cst_175 [1] : vector<10x64xf32> to vector<10xf32>
    %336 = vector.shape_cast %335 : vector<10xf32> to vector<10x1xf32>
    %cst_176 = arith.constant 6.400000e+01 : f32
    %337 = vector.broadcast %cst_176 : f32 to vector<10x1xf32>
    %338 = arith.divf %336, %337 : vector<10x1xf32>
    %cst_177 = arith.constant 9.99999974E-6 : f32
    %339 = vector.broadcast %cst_177 : f32 to vector<10x1xf32>
    %340 = arith.addf %338, %339 : vector<10x1xf32>
    %341 = math.rsqrt %340 : vector<10x1xf32>
    %342 = vector.broadcast %341 : vector<10x1xf32> to vector<10x64xf32>
    %343 = arith.mulf %333, %342 : vector<10x64xf32>
    %344 = vector.broadcast %321 : vector<1x64xf32> to vector<10x64xf32>
    %345 = arith.mulf %343, %344 : vector<10x64xf32>
    %346 = vector.broadcast %322 : vector<1x64xf32> to vector<10x64xf32>
    %347 = arith.addf %345, %346 : vector<10x64xf32>
    %348 = arith.truncf %347 : vector<10x64xf32> to vector<10x64xbf16>
    %cst_178 = arith.constant dense<0.000000e+00> : vector<10x192xf32>
    %349 = tpu.matmul %348, %323, %cst_178 {dimension_numbers = #tpu.dot_dimension_numbers<[1], [0], [0], [1], [0, 0, 1, 1], [], []>} : vector<10x64xbf16>, vector<64x192xbf16>, vector<10x192xf32> -> vector<10x192xf32>
    %350 = vector.broadcast %324 : vector<1x192xf32> to vector<10x192xf32>
    %351 = arith.addf %349, %350 : vector<10x192xf32>
    %352 = vector.extract_strided_slice %351 {offsets = [0, 0], sizes = [10, 64], strides = [1, 1]} : vector<10x192xf32> to vector<10x64xf32>
    %353 = vector.extract_strided_slice %351 {offsets = [0, 64], sizes = [10, 64], strides = [1, 1]} : vector<10x192xf32> to vector<10x64xf32>
    %354 = vector.extract_strided_slice %351 {offsets = [0, 128], sizes = [10, 64], strides = [1, 1]} : vector<10x192xf32> to vector<10x64xf32>
    %355 = arith.truncf %353 : vector<10x64xf32> to vector<10x64xbf16>
    %cst_179 = arith.constant dense<0.000000e+00> : vector<64x10xf32>
    %356 = tpu.matmul %325, %355, %cst_179 {dimension_numbers = #tpu.dot_dimension_numbers<[1], [1], [0], [0], [0, 0, 1, 0], [], []>} : vector<64x64xbf16>, vector<10x64xbf16>, vector<64x10xf32> -> vector<64x10xf32>
    %cst_180 = arith.constant 0.353553385 : f32
    %357 = vector.broadcast %cst_180 : f32 to vector<64x10xf32>
    %358 = arith.mulf %356, %357 : vector<64x10xf32>
    %cst_181 = arith.constant dense<0xFF800000> : vector<64xf32>
    %359 = vector.multi_reduction <maximumf>, %358, %cst_181 [1] : vector<64x10xf32> to vector<64xf32>
    %360 = vector.shape_cast %359 : vector<64xf32> to vector<64x1xf32>
    %361 = vector.broadcast %360 : vector<64x1xf32> to vector<64x10xf32>
    %362 = arith.subf %358, %361 : vector<64x10xf32>
    %363 = math.exp %362 : vector<64x10xf32>
    %cst_182 = arith.constant dense<0.000000e+00> : vector<64xf32>
    %364 = vector.multi_reduction <add>, %363, %cst_182 [1] : vector<64x10xf32> to vector<64xf32>
    %365 = vector.shape_cast %364 : vector<64xf32> to vector<64x1xf32>
    %366 = tpu.reciprocal %365 {approx = true} : vector<64x1xf32> -> vector<64x1xf32>
    %367 = vector.broadcast %366 : vector<64x1xf32> to vector<64x10xf32>
    %368 = arith.mulf %363, %367 : vector<64x10xf32>
    %369 = arith.truncf %368 : vector<64x10xf32> to vector<64x10xbf16>
    %370 = arith.truncf %354 : vector<10x64xf32> to vector<10x64xbf16>
    %cst_183 = arith.constant dense<0.000000e+00> : vector<64x64xf32>
    %371 = tpu.matmul %369, %370, %cst_183 {dimension_numbers = #tpu.dot_dimension_numbers<[1], [0], [0], [1], [0, 0, 1, 1], [], []>} : vector<64x10xbf16>, vector<10x64xbf16>, vector<64x64xf32> -> vector<64x64xf32>
    %372 = arith.extf %15 : vector<64x64xbf16> to vector<64x64xf32>
    %373 = arith.mulf %371, %372 : vector<64x64xf32>
    %374 = arith.truncf %352 : vector<10x64xf32> to vector<10x64xbf16>
    %cst_184 = arith.constant dense<0.000000e+00> : vector<10x64xf32>
    %375 = tpu.matmul %374, %325, %cst_184 {dimension_numbers = #tpu.dot_dimension_numbers<[1], [1], [0], [0], [0, 0, 1, 0], [], []>} : vector<10x64xbf16>, vector<64x64xbf16>, vector<10x64xf32> -> vector<10x64xf32>
    %cst_185 = arith.constant 0.353553385 : f32
    %376 = vector.broadcast %cst_185 : f32 to vector<10x64xf32>
    %377 = arith.mulf %375, %376 : vector<10x64xf32>
    %cst_186 = arith.constant dense<0xFF800000> : vector<10xf32>
    %378 = vector.multi_reduction <maximumf>, %377, %cst_186 [1] : vector<10x64xf32> to vector<10xf32>
    %379 = vector.shape_cast %378 : vector<10xf32> to vector<10x1xf32>
    %380 = vector.broadcast %379 : vector<10x1xf32> to vector<10x64xf32>
    %381 = arith.subf %377, %380 : vector<10x64xf32>
    %382 = math.exp %381 : vector<10x64xf32>
    %383 = arith.truncf %382 : vector<10x64xf32> to vector<10x64xbf16>
    %cst_187 = arith.constant dense<0.000000e+00> : vector<10x64xf32>
    %384 = tpu.matmul %383, %16, %cst_187 {dimension_numbers = #tpu.dot_dimension_numbers<[1], [0], [0], [1], [0, 0, 1, 1], [], []>} : vector<10x64xbf16>, vector<64x64xbf16>, vector<10x64xf32> -> vector<10x64xf32>
    %385 = tpu.reciprocal %384 {approx = true} : vector<10x64xf32> -> vector<10x64xf32>
    %386 = arith.mulf %382, %385 : vector<10x64xf32>
    %387 = arith.truncf %386 : vector<10x64xf32> to vector<10x64xbf16>
    %388 = arith.truncf %373 : vector<64x64xf32> to vector<64x64xbf16>
    %cst_188 = arith.constant dense<0.000000e+00> : vector<10x64xf32>
    %389 = tpu.matmul %387, %388, %cst_188 {dimension_numbers = #tpu.dot_dimension_numbers<[1], [0], [0], [1], [0, 0, 1, 1], [], []>} : vector<10x64xbf16>, vector<64x64xbf16>, vector<10x64xf32> -> vector<10x64xf32>
    %390 = arith.truncf %389 : vector<10x64xf32> to vector<10x64xbf16>
    %cst_189 = arith.constant dense<0.000000e+00> : vector<10x64xf32>
    %391 = tpu.matmul %390, %326, %cst_189 {dimension_numbers = #tpu.dot_dimension_numbers<[1], [0], [0], [1], [0, 0, 1, 1], [], []>} : vector<10x64xbf16>, vector<64x64xbf16>, vector<10x64xf32> -> vector<10x64xf32>
    %392 = arith.addf %320, %391 : vector<10x64xf32>
    %393 = vector.broadcast %327 : vector<1x64xf32> to vector<10x64xf32>
    %394 = arith.addf %392, %393 : vector<10x64xf32>
    %395 = vector.extract_strided_slice %394 {offsets = [0, 0], sizes = [1, 64], strides = [1, 1]} : vector<10x64xf32> to vector<1x64xf32>
    %c0_190 = arith.constant 0 : index
    %c0_191 = arith.constant 0 : index
    %396 = vector.load %arg22[%c0_190, %c0_191] : memref<1x64xf32, #tpu.memory_space<vmem>>, vector<1x64xf32>
    %c0_192 = arith.constant 0 : index
    %c0_193 = arith.constant 0 : index
    %397 = vector.load %arg23[%c0_192, %c0_193] : memref<1x64xf32, #tpu.memory_space<vmem>>, vector<1x64xf32>
    %cst_194 = arith.constant dense<0.000000e+00> : vector<1xf32>
    %398 = vector.multi_reduction <add>, %395, %cst_194 [1] : vector<1x64xf32> to vector<1xf32>
    %399 = vector.shape_cast %398 : vector<1xf32> to vector<1x1xf32>
    %cst_195 = arith.constant 6.400000e+01 : f32
    %400 = vector.broadcast %cst_195 : f32 to vector<1x1xf32>
    %401 = arith.divf %399, %400 : vector<1x1xf32>
    %402 = vector.broadcast %401 : vector<1x1xf32> to vector<1x64xf32>
    %403 = arith.subf %395, %402 : vector<1x64xf32>
    %404 = arith.mulf %403, %403 : vector<1x64xf32>
    %cst_196 = arith.constant dense<0.000000e+00> : vector<1xf32>
    %405 = vector.multi_reduction <add>, %404, %cst_196 [1] : vector<1x64xf32> to vector<1xf32>
    %406 = vector.shape_cast %405 : vector<1xf32> to vector<1x1xf32>
    %cst_197 = arith.constant 6.400000e+01 : f32
    %407 = vector.broadcast %cst_197 : f32 to vector<1x1xf32>
    %408 = arith.divf %406, %407 : vector<1x1xf32>
    %cst_198 = arith.constant 9.99999974E-6 : f32
    %409 = vector.broadcast %cst_198 : f32 to vector<1x1xf32>
    %410 = arith.addf %408, %409 : vector<1x1xf32>
    %411 = math.rsqrt %410 : vector<1x1xf32>
    %412 = vector.broadcast %411 : vector<1x1xf32> to vector<1x64xf32>
    %413 = arith.mulf %403, %412 : vector<1x64xf32>
    %414 = arith.mulf %413, %396 : vector<1x64xf32>
    %415 = arith.addf %414, %397 : vector<1x64xf32>
    %c0_199 = arith.constant 0 : index
    %c0_200 = arith.constant 0 : index
    %416 = vector.load %arg24[%c0_199, %c0_200] : memref<64x2xbf16, #tpu.memory_space<vmem>>, vector<64x2xbf16>
    %417 = arith.truncf %415 : vector<1x64xf32> to vector<1x64xbf16>
    %cst_201 = arith.constant dense<0.000000e+00> : vector<1x2xf32>
    %418 = tpu.matmul %417, %416, %cst_201 {dimension_numbers = #tpu.dot_dimension_numbers<[1], [0], [0], [1], [0, 0, 1, 1], [], []>} : vector<1x64xbf16>, vector<64x2xbf16>, vector<1x2xf32> -> vector<1x2xf32>
    %c0_202 = arith.constant 0 : index
    %c0_203 = arith.constant 0 : index
    %419 = vector.load %arg25[%c0_202, %c0_203] : memref<1x2xf32, #tpu.memory_space<vmem>>, vector<1x2xf32>
    %420 = arith.addf %418, %419 : vector<1x2xf32>
    %c0_204 = arith.constant 0 : index
    %c0_205 = arith.constant 0 : index
    %c0_206 = arith.constant 0 : index
    %421 = vector.load %arg26[%c0_204, %c0_205, %c0_206] : memref<1x1x2xf32, #tpu.memory_space<vmem>>, vector<1x1x2xf32>
    %422 = vector.shape_cast %421 : vector<1x1x2xf32> to vector<1x2xf32>
    %423 = vector.shape_cast %420 : vector<1x2xf32> to vector<1x1x2xf32>
    tpu.vector_store %arg26[%c0_204, %c0_205, %c0_206], %423 {strides = array<i32>} : memref<1x1x2xf32, #tpu.memory_space<vmem>>, vector<1x1x2xf32>,
    return
  }
  func.func @transform_0(%arg0: i32) -> (i32, i32, i32) {
    %c0_i32 = arith.constant 0 : i32
    %c0_i32_0 = arith.constant 0 : i32
    %c0_i32_1 = arith.constant 0 : i32
    return %arg0, %c0_i32, %c0_i32_0 : i32, i32, i32
  }
  func.func @transform_1(%arg0: i32) -> (i32, i32) {
    %c0_i32 = arith.constant 0 : i32
    %c0_i32_0 = arith.constant 0 : i32
    %c0_i32_1 = arith.constant 0 : i32
    return %c0_i32, %c0_i32_0 : i32, i32
  }
  func.func @transform_2(%arg0: i32) -> (i32, i32) {
    %c0_i32 = arith.constant 0 : i32
    %c0_i32_0 = arith.constant 0 : i32
    %c0_i32_1 = arith.constant 0 : i32
    return %c0_i32, %c0_i32_0 : i32, i32
  }
  func.func @transform_3(%arg0: i32) -> (i32, i32) {
    %c0_i32 = arith.constant 0 : i32
    %c0_i32_0 = arith.constant 0 : i32
    %c0_i32_1 = arith.constant 0 : i32
    return %c0_i32, %c0_i32_0 : i32, i32
  }
  func.func @transform_4(%arg0: i32) -> (i32, i32) {
    %c0_i32 = arith.constant 0 : i32
    %c0_i32_0 = arith.constant 0 : i32
    %c0_i32_1 = arith.constant 0 : i32
    return %c0_i32, %c0_i32_0 : i32, i32
  }
  func.func @transform_5(%arg0: i32) -> (i32, i32) {
    %c0_i32 = arith.constant 0 : i32
    %c0_i32_0 = arith.constant 0 : i32
    %c0_i32_1 = arith.constant 0 : i32
    return %c0_i32, %c0_i32_0 : i32, i32
  }
  func.func @transform_6(%arg0: i32) -> (i32, i32) {
    %c0_i32 = arith.constant 0 : i32
    %c0_i32_0 = arith.constant 0 : i32
    %c0_i32_1 = arith.constant 0 : i32
    return %c0_i32, %c0_i32_0 : i32, i32
  }
  func.func @transform_7(%arg0: i32) -> (i32, i32) {
    %c0_i32 = arith.constant 0 : i32
    %c0_i32_0 = arith.constant 0 : i32
    %c0_i32_1 = arith.constant 0 : i32
    return %c0_i32, %c0_i32_0 : i32, i32
  }
  func.func @transform_8(%arg0: i32) -> (i32, i32) {
    %c0_i32 = arith.constant 0 : i32
    %c0_i32_0 = arith.constant 0 : i32
    %c0_i32_1 = arith.constant 0 : i32
    return %c0_i32, %c0_i32_0 : i32, i32
  }
  func.func @transform_9(%arg0: i32) -> (i32, i32) {
    %c0_i32 = arith.constant 0 : i32
    %c0_i32_0 = arith.constant 0 : i32
    %c0_i32_1 = arith.constant 0 : i32
    return %c0_i32, %c0_i32_0 : i32, i32
  }
  func.func @transform_10(%arg0: i32) -> (i32, i32) {
    %c0_i32 = arith.constant 0 : i32
    %c0_i32_0 = arith.constant 0 : i32
    %c0_i32_1 = arith.constant 0 : i32
    return %c0_i32, %c0_i32_0 : i32, i32
  }
  func.func @transform_11(%arg0: i32) -> (i32, i32) {
    %c0_i32 = arith.constant 0 : i32
    %c0_i32_0 = arith.constant 0 : i32
    %c0_i32_1 = arith.constant 0 : i32
    return %c0_i32, %c0_i32_0 : i32, i32
  }
  func.func @transform_12(%arg0: i32) -> (i32, i32) {
    %c0_i32 = arith.constant 0 : i32
    %c0_i32_0 = arith.constant 0 : i32
    %c0_i32_1 = arith.constant 0 : i32
    return %c0_i32, %c0_i32_0 : i32, i32
  }
  func.func @transform_13(%arg0: i32) -> (i32, i32) {
    %c0_i32 = arith.constant 0 : i32
    %c0_i32_0 = arith.constant 0 : i32
    %c0_i32_1 = arith.constant 0 : i32
    return %c0_i32, %c0_i32_0 : i32, i32
  }
  func.func @transform_14(%arg0: i32) -> (i32, i32) {
    %c0_i32 = arith.constant 0 : i32
    %c0_i32_0 = arith.constant 0 : i32
    %c0_i32_1 = arith.constant 0 : i32
    return %c0_i32, %c0_i32_0 : i32, i32
  }
  func.func @transform_15(%arg0: i32) -> (i32, i32) {
    %c0_i32 = arith.constant 0 : i32
    %c0_i32_0 = arith.constant 0 : i32
    %c0_i32_1 = arith.constant 0 : i32
    return %c0_i32, %c0_i32_0 : i32, i32
  }
  func.func @transform_16(%arg0: i32) -> (i32, i32) {
    %c0_i32 = arith.constant 0 : i32
    %c0_i32_0 = arith.constant 0 : i32
    %c0_i32_1 = arith.constant 0 : i32
    return %c0_i32, %c0_i32_0 : i32, i32
  }
  func.func @transform_17(%arg0: i32) -> (i32, i32) {
    %c0_i32 = arith.constant 0 : i32
    %c0_i32_0 = arith.constant 0 : i32
    %c0_i32_1 = arith.constant 0 : i32
    return %c0_i32, %c0_i32_0 : i32, i32
  }
  func.func @transform_18(%arg0: i32) -> (i32, i32) {
    %c0_i32 = arith.constant 0 : i32
    %c0_i32_0 = arith.constant 0 : i32
    %c0_i32_1 = arith.constant 0 : i32
    return %c0_i32, %c0_i32_0 : i32, i32
  }
  func.func @transform_19(%arg0: i32) -> (i32, i32) {
    %c0_i32 = arith.constant 0 : i32
    %c0_i32_0 = arith.constant 0 : i32
    %c0_i32_1 = arith.constant 0 : i32
    return %c0_i32, %c0_i32_0 : i32, i32
  }
  func.func @transform_20(%arg0: i32) -> (i32, i32) {
    %c0_i32 = arith.constant 0 : i32
    %c0_i32_0 = arith.constant 0 : i32
    %c0_i32_1 = arith.constant 0 : i32
    return %c0_i32, %c0_i32_0 : i32, i32
  }
  func.func @transform_21(%arg0: i32) -> (i32, i32) {
    %c0_i32 = arith.constant 0 : i32
    %c0_i32_0 = arith.constant 0 : i32
    %c0_i32_1 = arith.constant 0 : i32
    return %c0_i32, %c0_i32_0 : i32, i32
  }
  func.func @transform_22(%arg0: i32) -> (i32, i32) {
    %c0_i32 = arith.constant 0 : i32
    %c0_i32_0 = arith.constant 0 : i32
    %c0_i32_1 = arith.constant 0 : i32
    return %c0_i32, %c0_i32_0 : i32, i32
  }
  func.func @transform_23(%arg0: i32) -> (i32, i32) {
    %c0_i32 = arith.constant 0 : i32
    %c0_i32_0 = arith.constant 0 : i32
    %c0_i32_1 = arith.constant 0 : i32
    return %c0_i32, %c0_i32_0 : i32, i32
  }
  func.func @transform_24(%arg0: i32) -> (i32, i32) {
    %c0_i32 = arith.constant 0 : i32
    %c0_i32_0 = arith.constant 0 : i32
    %c0_i32_1 = arith.constant 0 : i32
    return %c0_i32, %c0_i32_0 : i32, i32
  }
  func.func @transform_25(%arg0: i32) -> (i32, i32, i32) {
    %c0_i32 = arith.constant 0 : i32
    %c0_i32_0 = arith.constant 0 : i32
    %c0_i32_1 = arith.constant 0 : i32
    return %arg0, %c0_i32, %c0_i32_0 : i32, i32, i32
  }
}

</mosaic_0001>

<llo_original>
// kernel: tpu_custom_call.1
$region0: #{tpu_custom_call.1}
  #allocation0 [shape = 'u32[]', space=smem, size = 0x4, offset = 0x4, fixed_abs, tag = 'smem constant byte address 0x4 - core index']
  #allocation1 [shape = 'u32[72,128]{1,0:T(1,128)}', space=vmem, size = 0x9000, scoped, tag = 'internal scratch']
  #allocation2 [shape = 'f32[10,64]{1,0:T(8,128)}', space=vmem, size = 0x2000, scoped, tag = 'scratch operand']
  %s0 = inlined_call_operand.vmem [shape: f32[2,8,96], index: 0, kind: input, shape index: {}]
  %s1 = inlined_call_operand.vmem [shape: bf16[96,64], index: 1, kind: input, shape index: {}]
  %s2 = inlined_call_operand.vmem [shape: f32[1,64], index: 2, kind: input, shape index: {}]
  %s3 = inlined_call_operand.hbm [shape: f32[1,64], index: 3, kind: input, shape index: {}]
  %s4 = inlined_call_operand.hbm [shape: bf16[64,64], index: 4, kind: input, shape index: {}]
  %s5 = inlined_call_operand.hbm [shape: bf16[64,64], index: 5, kind: input, shape index: {}]
  %s6 = inlined_call_operand.hbm [shape: f32[1,64], index: 6, kind: input, shape index: {}]
  %s7 = inlined_call_operand.hbm [shape: f32[1,64], index: 7, kind: input, shape index: {}]
  %s8 = inlined_call_operand.vmem [shape: bf16[64,192], index: 8, kind: input, shape index: {}]
  %s9 = inlined_call_operand.vmem [shape: f32[1,192], index: 9, kind: input, shape index: {}]
  %s10 = inlined_call_operand.hbm [shape: bf16[64,64], index: 10, kind: input, shape index: {}]
  %s11 = inlined_call_operand.hbm [shape: bf16[64,64], index: 11, kind: input, shape index: {}]
  %s12 = inlined_call_operand.vmem [shape: f32[1,64], index: 12, kind: input, shape index: {}]
  %s13 = inlined_call_operand.hbm [shape: f32[25,64], index: 13, kind: input, shape index: {}]
  %s14 = inlined_call_operand.vmem [shape: f32[1,64], index: 14, kind: input, shape index: {}]
  %s15 = inlined_call_operand.vmem [shape: f32[1,64], index: 15, kind: input, shape index: {}]
  %s16 = inlined_call_operand.hbm [shape: bf16[64,192], index: 16, kind: input, shape index: {}]
  %s17 = inlined_call_operand.vmem [shape: f32[1,192], index: 17, kind: input, shape index: {}]
  %s18 = inlined_call_operand.hbm [shape: bf16[64,64], index: 18, kind: input, shape index: {}]
  %s19 = inlined_call_operand.hbm [shape: bf16[64,64], index: 19, kind: input, shape index: {}]
  %s20 = inlined_call_operand.vmem [shape: f32[1,64], index: 20, kind: input, shape index: {}]
  %s21 = inlined_call_operand.vmem [shape: f32[1,64], index: 21, kind: input, shape index: {}]
  %s22 = inlined_call_operand.vmem [shape: f32[1,64], index: 22, kind: input, shape index: {}]
  %s23 = inlined_call_operand.vmem [shape: bf16[64,2], index: 23, kind: input, shape index: {}]
  %s24 = inlined_call_operand.vmem [shape: f32[1,2], index: 24, kind: input, shape index: {}]
  %s25 = inlined_call_operand.hbm [shape: f32[2,1,2], index: 25, kind: output, shape index: {}]
  %s26 = sld [smem:[#allocation0]]
  $region177: #{tpu_custom_call.1} parent=0
    _
  %s28 = ssub.s32 1, %s26
  %s29 = scalar_select 0, %s28, %s26
  $region1: #{tpu_custom_call.1} parent=0
    #allocation3 [shape = 'u8[512]{0}', space=vmem, size = 0x400, scoped, tag = 'input window, operand 3, single buffered']
    #allocation4 [shape = 's32[2]{0}', space=sflag, size = 0x8, scoped, tag = 'scoped memory for tpu_custom_call.1']
    #allocation5 [shape = 's32[2]{0}', space=sflag, size = 0x8, scoped, tag = 'scoped memory for tpu_custom_call.1']
    #allocation6 [shape = 'u8[16384]{0}', space=vmem, size = 0x4000, scoped, tag = 'input window, operand 4, single buffered']
    #allocation7 [shape = 's32[1]{0}', space=sflag, size = 0x4, scoped, tag = 'scoped memory for tpu_custom_call.1']
    #allocation8 [shape = 'u8[16384]{0}', space=vmem, size = 0x4000, scoped, tag = 'input window, operand 5, single buffered']
    #allocation9 [shape = 'u8[512]{0}', space=vmem, size = 0x400, scoped, tag = 'input window, operand 6, single buffered']
    #allocation10 [shape = 's32[1]{0}', space=sflag, size = 0x4, scoped, tag = 'scoped memory for tpu_custom_call.1']
    #allocation11 [shape = 'u8[512]{0}', space=vmem, size = 0x400, scoped, tag = 'input window, operand 7, single buffered']
    #allocation12 [shape = 'u8[16384]{0}', space=vmem, size = 0x4000, scoped, tag = 'input window, operand 10, single buffered']
    #allocation13 [shape = 's32[1]{0}', space=sflag, size = 0x4, scoped, tag = 'scoped memory for tpu_custom_call.1']
    #allocation14 [shape = 'u8[16384]{0}', space=vmem, size = 0x4000, scoped, tag = 'input window, operand 11, single buffered']
    #allocation15 [shape = 'u8[16384]{0}', space=vmem, size = 0x4000, scoped, tag = 'input window, operand 13, single buffered']
    #allocation16 [shape = 's32[1]{0}', space=sflag, size = 0x4, scoped, tag = 'scoped memory for tpu_custom_call.1']
    #allocation17 [shape = 'u8[32768]{0}', space=vmem, size = 0x8000, scoped, tag = 'input window, operand 16, single buffered']
    #allocation18 [shape = 'u8[16384]{0}', space=vmem, size = 0x4000, scoped, tag = 'input window, operand 18, single buffered']
    #allocation19 [shape = 's32[1]{0}', space=sflag, size = 0x4, scoped, tag = 'scoped memory for tpu_custom_call.1']
    #allocation20 [shape = 'u8[16384]{0}', space=vmem, size = 0x4000, scoped, tag = 'input window, operand 19, single buffered']
    #allocation21 [shape = 'u8[1024]{0}', space=vmem, size = 0x400, scoped, tag = 'output window, operand 0']
    %30 = vsyncpa [#allocation4], 0
    %31 = vsyncpa [#allocation7], 0
    %32 = vsyncpa [#allocation10], 0
    %33 = vsyncpa [#allocation13], 0
    %34 = vsyncpa [#allocation16], 0
    %35 = vsyncpa [#allocation19], 0
    %36 = vsyncpa [#allocation5], 0
    %s37 = scalar_lea.sflag [#allocation5], 1
    %38 = vsyncpa %s37, 0
    loop: start=0, step=1, limit=4
    $region2: #{tpu_custom_call.1} parent=1 // loop_pre_header
      _
    $region3: #{tpu_custom_call.1} parent=1 // loop_header
      %s40 = sphi 0, %s44
      %p41 = scmp.ge.s32.totalorder %s40, 4
      %s50 = sphi 0, %s52
      %s53 = sphi 0, %s50
      %s54 = sphi 0, %s53
      %s70 = sphi 0, %s54
      %s74 = sphi 0, %s74
      %s76 = sphi 0, %s74
      %s77 = sphi 0, %s76
      %s91 = sphi 0, %s77
      %s95 = sphi 0, %s95
      %s97 = sphi 0, %s95
      %s98 = sphi 0, %s97
      %s112 = sphi 0, %s98
      %s116 = sphi 0, %s116
      %s118 = sphi 0, %s116
      %s119 = sphi 0, %s118
      %s133 = sphi 0, %s119
      %s137 = sphi 0, %s137
      %s139 = sphi 0, %s137
      %s140 = sphi 0, %s139
      %s154 = sphi 0, %s140
      %s158 = sphi 0, %s158
      %s160 = sphi 0, %s158
      %s161 = sphi 0, %s160
      %s175 = sphi 0, %s161
      %s179 = sphi 0, %s179
      %s181 = sphi 0, %s179
      %s182 = sphi 0, %s181
      %s196 = sphi 0, %s182
      %s200 = sphi 0, %s200
      %s202 = sphi 0, %s200
      %s203 = sphi 0, %s202
      %s217 = sphi 0, %s203
      %s221 = sphi 0, %s221
      %s223 = sphi 0, %s221
      %s224 = sphi 0, %s223
      %s238 = sphi 0, %s224
      %s242 = sphi 0, %s242
      %s244 = sphi 0, %s242
      %s245 = sphi 0, %s244
      %s259 = sphi 0, %s245
      %s263 = sphi 0, %s263
      %s265 = sphi 0, %s263
      %s266 = sphi 0, %s265
      %s280 = sphi 0, %s266
      %s284 = sphi 0, %s284
      %s286 = sphi 0, %s284
      %s287 = sphi 0, %s286
      %s301 = sphi 0, %s287
      %s305 = sphi 0, %s305
      %s307 = sphi 0, %s305
      %s308 = sphi 0, %s307
      %s322 = sphi 0, %s308
      %s326 = sphi 0, %s326
      %s328 = sphi 0, %s326
      %s329 = sphi 0, %s328
      %s343 = sphi 0, %s329
      %s347 = sphi 0, %s347
      %s349 = sphi 0, %s347
      %s350 = sphi 0, %s349
      %s364 = sphi 0, %s350
      %s368 = sphi 0, %s368
      %s370 = sphi 0, %s368
      %s371 = sphi 0, %s370
      %s385 = sphi 0, %s371
      %s389 = sphi 0, %s389
      %s391 = sphi 0, %s389
      %s392 = sphi 0, %s391
      %s406 = sphi 0, %s392
      %s410 = sphi 0, %s410
      %s412 = sphi 0, %s410
      %s413 = sphi 0, %s412
      %s427 = sphi 0, %s413
      %s431 = sphi 0, %s431
      %s433 = sphi 0, %s431
      %s434 = sphi 0, %s433
      %s448 = sphi 0, %s434
      %s452 = sphi 0, %s452
      %s454 = sphi 0, %s452
      %s455 = sphi 0, %s454
      %s469 = sphi 0, %s455
      %s473 = sphi 0, %s473
      %s475 = sphi 0, %s473
      %s476 = sphi 0, %s475
      %s490 = sphi 0, %s476
      %s494 = sphi 0, %s494
      %s496 = sphi 0, %s494
      %s497 = sphi 0, %s496
      %s511 = sphi 0, %s497
      %s515 = sphi 0, %s515
      %s517 = sphi 0, %s515
      %s518 = sphi 0, %s517
      %s532 = sphi 0, %s518
      %s536 = sphi 0, %s536
      %s538 = sphi 0, %s536
      %s539 = sphi 0, %s538
      %s553 = sphi 0, %s539
      %s557 = sphi 0, %s557
      %s559 = sphi 0, %s557
      %s560 = sphi 0, %s559
      %s574 = sphi 0, %s560
      %s580 = sphi 0, %s582
      %s583 = sphi 0, %s580
      %s584 = sphi 0, %s583
      %s600 = sphi 0, %s584
    $region4: #{tpu_custom_call.1} parent=1 // loop_header_branch
      %43 = sbr.rel (%p41) target = $region8
    $region5: #{tpu_custom_call.1} parent=1 // loop_body
      %s45 = ssub.s32 %s40, 1
      %s46 = ssub.s32 %s40, 2
      %s47 = sadd.s32 %s40, 1
      %s48 = ssub.s32 %s40, %s47
      %p49 = scmp.eq.s32.totalorder %s48, 0
      %s51 = sadd.s32 %s50, 1
      %s52 = scalar_select %p49, %s50, %s51
      %p55 = pneg %p49
      %p56 = scmp.eq.s32.totalorder %s40, 1
      %p57 = por %p55, %p56
      %p58 = scmp.ne.s32.totalorder %s50, %s53
      %p59 = scmp.eq.s32.totalorder %s40, 0
      %p60 = por %p58, %p59
      %p61 = scmp.ne.s32.totalorder %s50, %s53
      %p62 = scmp.eq.s32.totalorder %s45, 1
      %p63 = por %p61, %p62
      %p64 = scmp.ne.s32.totalorder %s53, %s54
      %p65 = scmp.eq.s32.totalorder %s45, 0
      %p66 = por %p64, %p65
      %p67 = scmp.ne.s32.totalorder %s53, %s54
      %p68 = scmp.eq.s32.totalorder %s46, 1
      %p69 = por %p67, %p68
      %p71 = scmp.ne.s32.totalorder %s54, %s70
      %p72 = scmp.eq.s32.totalorder %s46, 0
      %p73 = por %p71, %p72
      %s75 = sadd.s32 %s74, 1
      %p78 = scmp.eq.s32.totalorder %s40, 1
      %p79 = scmp.ne.s32.totalorder %s74, %s76
      %p80 = scmp.eq.s32.totalorder %s40, 0
      %p81 = por %p79, %p80
      %p82 = scmp.ne.s32.totalorder %s74, %s76
      %p83 = scmp.eq.s32.totalorder %s45, 1
      %p84 = por %p82, %p83
      %p85 = scmp.ne.s32.totalorder %s76, %s77
      %p86 = scmp.eq.s32.totalorder %s45, 0
      %p87 = por %p85, %p86
      %p88 = scmp.ne.s32.totalorder %s76, %s77
      %p89 = scmp.eq.s32.totalorder %s46, 1
      %p90 = por %p88, %p89
      %p92 = scmp.ne.s32.totalorder %s77, %s91
      %p93 = scmp.eq.s32.totalorder %s46, 0
      %p94 = por %p92, %p93
      %s96 = sadd.s32 %s95, 1
      %p99 = scmp.eq.s32.totalorder %s40, 1
      %p100 = scmp.ne.s32.totalorder %s95, %s97
      %p101 = scmp.eq.s32.totalorder %s40, 0
      %p102 = por %p100, %p101
      %p103 = scmp.ne.s32.totalorder %s95, %s97
      %p104 = scmp.eq.s32.totalorder %s45, 1
      %p105 = por %p103, %p104
      %p106 = scmp.ne.s32.totalorder %s97, %s98
      %p107 = scmp.eq.s32.totalorder %s45, 0
      %p108 = por %p106, %p107
      %p109 = scmp.ne.s32.totalorder %s97, %s98
      %p110 = scmp.eq.s32.totalorder %s46, 1
      %p111 = por %p109, %p110
      %p113 = scmp.ne.s32.totalorder %s98, %s112
      %p114 = scmp.eq.s32.totalorder %s46, 0
      %p115 = por %p113, %p114
      %s117 = sadd.s32 %s116, 1
      %p120 = scmp.eq.s32.totalorder %s40, 1
      %p121 = scmp.ne.s32.totalorder %s116, %s118
      %p122 = scmp.eq.s32.totalorder %s40, 0
      %p123 = por %p121, %p122
      %p124 = scmp.ne.s32.totalorder %s116, %s118
      %p125 = scmp.eq.s32.totalorder %s45, 1
      %p126 = por %p124, %p125
      %p127 = scmp.ne.s32.totalorder %s118, %s119
      %p128 = scmp.eq.s32.totalorder %s45, 0
      %p129 = por %p127, %p128
      %p130 = scmp.ne.s32.totalorder %s118, %s119
      %p131 = scmp.eq.s32.totalorder %s46, 1
      %p132 = por %p130, %p131
      %p134 = scmp.ne.s32.totalorder %s119, %s133
      %p135 = scmp.eq.s32.totalorder %s46, 0
      %p136 = por %p134, %p135
      %s138 = sadd.s32 %s137, 1
      %p141 = scmp.eq.s32.totalorder %s40, 1
      %p142 = scmp.ne.s32.totalorder %s137, %s139
      %p143 = scmp.eq.s32.totalorder %s40, 0
      %p144 = por %p142, %p143
      %p145 = scmp.ne.s32.totalorder %s137, %s139
      %p146 = scmp.eq.s32.totalorder %s45, 1
      %p147 = por %p145, %p146
      %p148 = scmp.ne.s32.totalorder %s139, %s140
      %p149 = scmp.eq.s32.totalorder %s45, 0
      %p150 = por %p148, %p149
      %p151 = scmp.ne.s32.totalorder %s139, %s140
      %p152 = scmp.eq.s32.totalorder %s46, 1
      %p153 = por %p151, %p152
      %p155 = scmp.ne.s32.totalorder %s140, %s154
      %p156 = scmp.eq.s32.totalorder %s46, 0
      %p157 = por %p155, %p156
      %s159 = sadd.s32 %s158, 1
      %p162 = scmp.eq.s32.totalorder %s40, 1
      %p163 = scmp.ne.s32.totalorder %s158, %s160
      %p164 = scmp.eq.s32.totalorder %s40, 0
      %p165 = por %p163, %p164
      %p166 = scmp.ne.s32.totalorder %s158, %s160
      %p167 = scmp.eq.s32.totalorder %s45, 1
      %p168 = por %p166, %p167
      %p169 = scmp.ne.s32.totalorder %s160, %s161
      %p170 = scmp.eq.s32.totalorder %s45, 0
      %p171 = por %p169, %p170
      %p172 = scmp.ne.s32.totalorder %s160, %s161
      %p173 = scmp.eq.s32.totalorder %s46, 1
      %p174 = por %p172, %p173
      %p176 = scmp.ne.s32.totalorder %s161, %s175
      %p177 = scmp.eq.s32.totalorder %s46, 0
      %p178 = por %p176, %p177
      %s180 = sadd.s32 %s179, 1
      %p183 = scmp.eq.s32.totalorder %s40, 1
      %p184 = scmp.ne.s32.totalorder %s179, %s181
      %p185 = scmp.eq.s32.totalorder %s40, 0
      %p186 = por %p184, %p185
      %p187 = scmp.ne.s32.totalorder %s179, %s181
      %p188 = scmp.eq.s32.totalorder %s45, 1
      %p189 = por %p187, %p188
      %p190 = scmp.ne.s32.totalorder %s181, %s182
      %p191 = scmp.eq.s32.totalorder %s45, 0
      %p192 = por %p190, %p191
      %p193 = scmp.ne.s32.totalorder %s181, %s182
      %p194 = scmp.eq.s32.totalorder %s46, 1
      %p195 = por %p193, %p194
      %p197 = scmp.ne.s32.totalorder %s182, %s196
      %p198 = scmp.eq.s32.totalorder %s46, 0
      %p199 = por %p197, %p198
      %s201 = sadd.s32 %s200, 1
      %p204 = scmp.eq.s32.totalorder %s40, 1
      %p205 = scmp.ne.s32.totalorder %s200, %s202
      %p206 = scmp.eq.s32.totalorder %s40, 0
      %p207 = por %p205, %p206
      %p208 = scmp.ne.s32.totalorder %s200, %s202
      %p209 = scmp.eq.s32.totalorder %s45, 1
      %p210 = por %p208, %p209
      %p211 = scmp.ne.s32.totalorder %s202, %s203
      %p212 = scmp.eq.s32.totalorder %s45, 0
      %p213 = por %p211, %p212
      %p214 = scmp.ne.s32.totalorder %s202, %s203
      %p215 = scmp.eq.s32.totalorder %s46, 1
      %p216 = por %p214, %p215
      %p218 = scmp.ne.s32.totalorder %s203, %s217
      %p219 = scmp.eq.s32.totalorder %s46, 0
      %p220 = por %p218, %p219
      %s222 = sadd.s32 %s221, 1
      %p225 = scmp.eq.s32.totalorder %s40, 1
      %p226 = scmp.ne.s32.totalorder %s221, %s223
      %p227 = scmp.eq.s32.totalorder %s40, 0
      %p228 = por %p226, %p227
      %p229 = scmp.ne.s32.totalorder %s221, %s223
      %p230 = scmp.eq.s32.totalorder %s45, 1
      %p231 = por %p229, %p230
      %p232 = scmp.ne.s32.totalorder %s223, %s224
      %p233 = scmp.eq.s32.totalorder %s45, 0
      %p234 = por %p232, %p233
      %p235 = scmp.ne.s32.totalorder %s223, %s224
      %p236 = scmp.eq.s32.totalorder %s46, 1
      %p237 = por %p235, %p236
      %p239 = scmp.ne.s32.totalorder %s224, %s238
      %p240 = scmp.eq.s32.totalorder %s46, 0
      %p241 = por %p239, %p240
      %s243 = sadd.s32 %s242, 1
      %p246 = scmp.eq.s32.totalorder %s40, 1
      %p247 = scmp.ne.s32.totalorder %s242, %s244
      %p248 = scmp.eq.s32.totalorder %s40, 0
      %p249 = por %p247, %p248
      %p250 = scmp.ne.s32.totalorder %s242, %s244
      %p251 = scmp.eq.s32.totalorder %s45, 1
      %p252 = por %p250, %p251
      %p253 = scmp.ne.s32.totalorder %s244, %s245
      %p254 = scmp.eq.s32.totalorder %s45, 0
      %p255 = por %p253, %p254
      %p256 = scmp.ne.s32.totalorder %s244, %s245
      %p257 = scmp.eq.s32.totalorder %s46, 1
      %p258 = por %p256, %p257
      %p260 = scmp.ne.s32.totalorder %s245, %s259
      %p261 = scmp.eq.s32.totalorder %s46, 0
      %p262 = por %p260, %p261
      %s264 = sadd.s32 %s263, 1
      %p267 = scmp.eq.s32.totalorder %s40, 1
      %p268 = scmp.ne.s32.totalorder %s263, %s265
      %p269 = scmp.eq.s32.totalorder %s40, 0
      %p270 = por %p268, %p269
      %p271 = scmp.ne.s32.totalorder %s263, %s265
      %p272 = scmp.eq.s32.totalorder %s45, 1
      %p273 = por %p271, %p272
      %p274 = scmp.ne.s32.totalorder %s265, %s266
      %p275 = scmp.eq.s32.totalorder %s45, 0
      %p276 = por %p274, %p275
      %p277 = scmp.ne.s32.totalorder %s265, %s266
      %p278 = scmp.eq.s32.totalorder %s46, 1
      %p279 = por %p277, %p278
      %p281 = scmp.ne.s32.totalorder %s266, %s280
      %p282 = scmp.eq.s32.totalorder %s46, 0
      %p283 = por %p281, %p282
      %s285 = sadd.s32 %s284, 1
      %p288 = scmp.eq.s32.totalorder %s40, 1
      %p289 = scmp.ne.s32.totalorder %s284, %s286
      %p290 = scmp.eq.s32.totalorder %s40, 0
      %p291 = por %p289, %p290
      %p292 = scmp.ne.s32.totalorder %s284, %s286
      %p293 = scmp.eq.s32.totalorder %s45, 1
      %p294 = por %p292, %p293
      %p295 = scmp.ne.s32.totalorder %s286, %s287
      %p296 = scmp.eq.s32.totalorder %s45, 0
      %p297 = por %p295, %p296
      %p298 = scmp.ne.s32.totalorder %s286, %s287
      %p299 = scmp.eq.s32.totalorder %s46, 1
      %p300 = por %p298, %p299
      %p302 = scmp.ne.s32.totalorder %s287, %s301
      %p303 = scmp.eq.s32.totalorder %s46, 0
      %p304 = por %p302, %p303
      %s306 = sadd.s32 %s305, 1
      %p309 = scmp.eq.s32.totalorder %s40, 1
      %p310 = scmp.ne.s32.totalorder %s305, %s307
      %p311 = scmp.eq.s32.totalorder %s40, 0
      %p312 = por %p310, %p311
      %p313 = scmp.ne.s32.totalorder %s305, %s307
      %p314 = scmp.eq.s32.totalorder %s45, 1
      %p315 = por %p313, %p314
      %p316 = scmp.ne.s32.totalorder %s307, %s308
      %p317 = scmp.eq.s32.totalorder %s45, 0
      %p318 = por %p316, %p317
      %p319 = scmp.ne.s32.totalorder %s307, %s308
      %p320 = scmp.eq.s32.totalorder %s46, 1
      %p321 = por %p319, %p320
      %p323 = scmp.ne.s32.totalorder %s308, %s322
      %p324 = scmp.eq.s32.totalorder %s46, 0
      %p325 = por %p323, %p324
      %s327 = sadd.s32 %s326, 1
      %p330 = scmp.eq.s32.totalorder %s40, 1
      %p331 = scmp.ne.s32.totalorder %s326, %s328
      %p332 = scmp.eq.s32.totalorder %s40, 0
      %p333 = por %p331, %p332
      %p334 = scmp.ne.s32.totalorder %s326, %s328
      %p335 = scmp.eq.s32.totalorder %s45, 1
      %p336 = por %p334, %p335
      %p337 = scmp.ne.s32.totalorder %s328, %s329
      %p338 = scmp.eq.s32.totalorder %s45, 0
      %p339 = por %p337, %p338
      %p340 = scmp.ne.s32.totalorder %s328, %s329
      %p341 = scmp.eq.s32.totalorder %s46, 1
      %p342 = por %p340, %p341
      %p344 = scmp.ne.s32.totalorder %s329, %s343
      %p345 = scmp.eq.s32.totalorder %s46, 0
      %p346 = por %p344, %p345
      %s348 = sadd.s32 %s347, 1
      %p351 = scmp.eq.s32.totalorder %s40, 1
      %p352 = scmp.ne.s32.totalorder %s347, %s349
      %p353 = scmp.eq.s32.totalorder %s40, 0
      %p354 = por %p352, %p353
      %p355 = scmp.ne.s32.totalorder %s347, %s349
      %p356 = scmp.eq.s32.totalorder %s45, 1
      %p357 = por %p355, %p356
      %p358 = scmp.ne.s32.totalorder %s349, %s350
      %p359 = scmp.eq.s32.totalorder %s45, 0
      %p360 = por %p358, %p359
      %p361 = scmp.ne.s32.totalorder %s349, %s350
      %p362 = scmp.eq.s32.totalorder %s46, 1
      %p363 = por %p361, %p362
      %p365 = scmp.ne.s32.totalorder %s350, %s364
      %p366 = scmp.eq.s32.totalorder %s46, 0
      %p367 = por %p365, %p366
      %s369 = sadd.s32 %s368, 1
      %p372 = scmp.eq.s32.totalorder %s40, 1
      %p373 = scmp.ne.s32.totalorder %s368, %s370
      %p374 = scmp.eq.s32.totalorder %s40, 0
      %p375 = por %p373, %p374
      %p376 = scmp.ne.s32.totalorder %s368, %s370
      %p377 = scmp.eq.s32.totalorder %s45, 1
      %p378 = por %p376, %p377
      %p379 = scmp.ne.s32.totalorder %s370, %s371
      %p380 = scmp.eq.s32.totalorder %s45, 0
      %p381 = por %p379, %p380
      %p382 = scmp.ne.s32.totalorder %s370, %s371
      %p383 = scmp.eq.s32.totalorder %s46, 1
      %p384 = por %p382, %p383
      %p386 = scmp.ne.s32.totalorder %s371, %s385
      %p387 = scmp.eq.s32.totalorder %s46, 0
      %p388 = por %p386, %p387
      %s390 = sadd.s32 %s389, 1
      %p393 = scmp.eq.s32.totalorder %s40, 1
      %p394 = scmp.ne.s32.totalorder %s389, %s391
      %p395 = scmp.eq.s32.totalorder %s40, 0
      %p396 = por %p394, %p395
      %p397 = scmp.ne.s32.totalorder %s389, %s391
      %p398 = scmp.eq.s32.totalorder %s45, 1
      %p399 = por %p397, %p398
      %p400 = scmp.ne.s32.totalorder %s391, %s392
      %p401 = scmp.eq.s32.totalorder %s45, 0
      %p402 = por %p400, %p401
      %p403 = scmp.ne.s32.totalorder %s391, %s392
      %p404 = scmp.eq.s32.totalorder %s46, 1
      %p405 = por %p403, %p404
      %p407 = scmp.ne.s32.totalorder %s392, %s406
      %p408 = scmp.eq.s32.totalorder %s46, 0
      %p409 = por %p407, %p408
      %s411 = sadd.s32 %s410, 1
      %p414 = scmp.eq.s32.totalorder %s40, 1
      %p415 = scmp.ne.s32.totalorder %s410, %s412
      %p416 = scmp.eq.s32.totalorder %s40, 0
      %p417 = por %p415, %p416
      %p418 = scmp.ne.s32.totalorder %s410, %s412
      %p419 = scmp.eq.s32.totalorder %s45, 1
      %p420 = por %p418, %p419
      %p421 = scmp.ne.s32.totalorder %s412, %s413
      %p422 = scmp.eq.s32.totalorder %s45, 0
      %p423 = por %p421, %p422
      %p424 = scmp.ne.s32.totalorder %s412, %s413
      %p425 = scmp.eq.s32.totalorder %s46, 1
      %p426 = por %p424, %p425
      %p428 = scmp.ne.s32.totalorder %s413, %s427
      %p429 = scmp.eq.s32.totalorder %s46, 0
      %p430 = por %p428, %p429
      %s432 = sadd.s32 %s431, 1
      %p435 = scmp.eq.s32.totalorder %s40, 1
      %p436 = scmp.ne.s32.totalorder %s431, %s433
      %p437 = scmp.eq.s32.totalorder %s40, 0
      %p438 = por %p436, %p437
      %p439 = scmp.ne.s32.totalorder %s431, %s433
      %p440 = scmp.eq.s32.totalorder %s45, 1
      %p441 = por %p439, %p440
      %p442 = scmp.ne.s32.totalorder %s433, %s434
      %p443 = scmp.eq.s32.totalorder %s45, 0
      %p444 = por %p442, %p443
      %p445 = scmp.ne.s32.totalorder %s433, %s434
      %p446 = scmp.eq.s32.totalorder %s46, 1
      %p447 = por %p445, %p446
      %p449 = scmp.ne.s32.totalorder %s434, %s448
      %p450 = scmp.eq.s32.totalorder %s46, 0
      %p451 = por %p449, %p450
      %s453 = sadd.s32 %s452, 1
      %p456 = scmp.eq.s32.totalorder %s40, 1
      %p457 = scmp.ne.s32.totalorder %s452, %s454
      %p458 = scmp.eq.s32.totalorder %s40, 0
      %p459 = por %p457, %p458
      %p460 = scmp.ne.s32.totalorder %s452, %s454
      %p461 = scmp.eq.s32.totalorder %s45, 1
      %p462 = por %p460, %p461
      %p463 = scmp.ne.s32.totalorder %s454, %s455
      %p464 = scmp.eq.s32.totalorder %s45, 0
      %p465 = por %p463, %p464
      %p466 = scmp.ne.s32.totalorder %s454, %s455
      %p467 = scmp.eq.s32.totalorder %s46, 1
      %p468 = por %p466, %p467
      %p470 = scmp.ne.s32.totalorder %s455, %s469
      %p471 = scmp.eq.s32.totalorder %s46, 0
      %p472 = por %p470, %p471
      %s474 = sadd.s32 %s473, 1
      %p477 = scmp.eq.s32.totalorder %s40, 1
      %p478 = scmp.ne.s32.totalorder %s473, %s475
      %p479 = scmp.eq.s32.totalorder %s40, 0
      %p480 = por %p478, %p479
      %p481 = scmp.ne.s32.totalorder %s473, %s475
      %p482 = scmp.eq.s32.totalorder %s45, 1
      %p483 = por %p481, %p482
      %p484 = scmp.ne.s32.totalorder %s475, %s476
      %p485 = scmp.eq.s32.totalorder %s45, 0
      %p486 = por %p484, %p485
      %p487 = scmp.ne.s32.totalorder %s475, %s476
      %p488 = scmp.eq.s32.totalorder %s46, 1
      %p489 = por %p487, %p488
      %p491 = scmp.ne.s32.totalorder %s476, %s490
      %p492 = scmp.eq.s32.totalorder %s46, 0
      %p493 = por %p491, %p492
      %s495 = sadd.s32 %s494, 1
      %p498 = scmp.eq.s32.totalorder %s40, 1
      %p499 = scmp.ne.s32.totalorder %s494, %s496
      %p500 = scmp.eq.s32.totalorder %s40, 0
      %p501 = por %p499, %p500
      %p502 = scmp.ne.s32.totalorder %s494, %s496
      %p503 = scmp.eq.s32.totalorder %s45, 1
      %p504 = por %p502, %p503
      %p505 = scmp.ne.s32.totalorder %s496, %s497
      %p506 = scmp.eq.s32.totalorder %s45, 0
      %p507 = por %p505, %p506
      %p508 = scmp.ne.s32.totalorder %s496, %s497
      %p509 = scmp.eq.s32.totalorder %s46, 1
      %p510 = por %p508, %p509
      %p512 = scmp.ne.s32.totalorder %s497, %s511
      %p513 = scmp.eq.s32.totalorder %s46, 0
      %p514 = por %p512, %p513
      %s516 = sadd.s32 %s515, 1
      %p519 = scmp.eq.s32.totalorder %s40, 1
      %p520 = scmp.ne.s32.totalorder %s515, %s517
      %p521 = scmp.eq.s32.totalorder %s40, 0
      %p522 = por %p520, %p521
      %p523 = scmp.ne.s32.totalorder %s515, %s517
      %p524 = scmp.eq.s32.totalorder %s45, 1
      %p525 = por %p523, %p524
      %p526 = scmp.ne.s32.totalorder %s517, %s518
      %p527 = scmp.eq.s32.totalorder %s45, 0
      %p528 = por %p526, %p527
      %p529 = scmp.ne.s32.totalorder %s517, %s518
      %p530 = scmp.eq.s32.totalorder %s46, 1
      %p531 = por %p529, %p530
      %p533 = scmp.ne.s32.totalorder %s518, %s532
      %p534 = scmp.eq.s32.totalorder %s46, 0
      %p535 = por %p533, %p534
      %s537 = sadd.s32 %s536, 1
      %p540 = scmp.eq.s32.totalorder %s40, 1
      %p541 = scmp.ne.s32.totalorder %s536, %s538
      %p542 = scmp.eq.s32.totalorder %s40, 0
      %p543 = por %p541, %p542
      %p544 = scmp.ne.s32.totalorder %s536, %s538
      %p545 = scmp.eq.s32.totalorder %s45, 1
      %p546 = por %p544, %p545
      %p547 = scmp.ne.s32.totalorder %s538, %s539
      %p548 = scmp.eq.s32.totalorder %s45, 0
      %p549 = por %p547, %p548
      %p550 = scmp.ne.s32.totalorder %s538, %s539
      %p551 = scmp.eq.s32.totalorder %s46, 1
      %p552 = por %p550, %p551
      %p554 = scmp.ne.s32.totalorder %s539, %s553
      %p555 = scmp.eq.s32.totalorder %s46, 0
      %p556 = por %p554, %p555
      %s558 = sadd.s32 %s557, 1
      %p561 = scmp.eq.s32.totalorder %s40, 1
      %p562 = scmp.ne.s32.totalorder %s557, %s559
      %p563 = scmp.eq.s32.totalorder %s40, 0
      %p564 = por %p562, %p563
      %p565 = scmp.ne.s32.totalorder %s557, %s559
      %p566 = scmp.eq.s32.totalorder %s45, 1
      %p567 = por %p565, %p566
      %p568 = scmp.ne.s32.totalorder %s559, %s560
      %p569 = scmp.eq.s32.totalorder %s45, 0
      %p570 = por %p568, %p569
      %p571 = scmp.ne.s32.totalorder %s559, %s560
      %p572 = scmp.eq.s32.totalorder %s46, 1
      %p573 = por %p571, %p572
      %p575 = scmp.ne.s32.totalorder %s560, %s574
      %p576 = scmp.eq.s32.totalorder %s46, 0
      %p577 = por %p575, %p576
      %s578 = ssub.s32 %s40, %s47
      %p579 = scmp.eq.s32.totalorder %s578, 0
      %s581 = sadd.s32 %s580, 1
      %s582 = scalar_select %p579, %s580, %s581
      %p585 = pneg %p579
      %p586 = scmp.eq.s32.totalorder %s40, 1
      %p587 = por %p585, %p586
      %p588 = scmp.ne.s32.totalorder %s580, %s583
      %p589 = scmp.eq.s32.totalorder %s40, 0
      %p590 = por %p588, %p589
      %p591 = scmp.ne.s32.totalorder %s580, %s583
      %p592 = scmp.eq.s32.totalorder %s45, 1
      %p593 = por %p591, %p592
      %p594 = scmp.ne.s32.totalorder %s583, %s584
      %p595 = scmp.eq.s32.totalorder %s45, 0
      %p596 = por %p594, %p595
      %p597 = scmp.ne.s32.totalorder %s583, %s584
      %p598 = scmp.eq.s32.totalorder %s46, 1
      %p599 = por %p597, %p598
      %p601 = scmp.ne.s32.totalorder %s584, %s600
      %p602 = scmp.eq.s32.totalorder %s46, 0
      %p603 = por %p601, %p602
      %p604 = scmp.le.s32.totalorder 1, %s40
      %p605 = scmp.lt.s32.totalorder %s40, 3
      %p606 = pnand %p604, %p605
      %p607 = pneg %p606
      // Predicated region
      $region9: #{tpu_custom_call.1} parent=5 // pred_check
        _
      $region10: #{tpu_custom_call.1} parent=5 // pred_check_branch
        %609 = sbr.rel (%p606) target = $region12
      $region11: #{tpu_custom_call.1} parent=5 // pred_region
        %s610 = ssub.s32 %s40, 1
        // Predicated region
        $region13: #{tpu_custom_call.1} parent=11 // pred_check
          %p611 = pneg %p87
        $region14: #{tpu_custom_call.1} parent=11 // pred_check_branch
          %613 = sbr.rel (%p611) target = $region16
        $region15: #{tpu_custom_call.1} parent=11 // pred_region
          _
        $region16: #{tpu_custom_call.1} parent=11 // pred_fallthru
          _
        // Predicated region
        $region17: #{tpu_custom_call.1} parent=11 // pred_check
          %p614 = pneg %p108
        $region18: #{tpu_custom_call.1} parent=11 // pred_check_branch
          %616 = sbr.rel (%p614) target = $region20
        $region19: #{tpu_custom_call.1} parent=11 // pred_region
          _
        $region20: #{tpu_custom_call.1} parent=11 // pred_fallthru
          _
        // Predicated region
        $region21: #{tpu_custom_call.1} parent=11 // pred_check
          %p617 = pneg %p129
        $region22: #{tpu_custom_call.1} parent=11 // pred_check_branch
          %619 = sbr.rel (%p617) target = $region24
        $region23: #{tpu_custom_call.1} parent=11 // pred_region
          %621 = vsyncadd [#allocation4], 0
          %s623 = sshll.u32 %s3, 4
          %s624 = int_to_ptr.hbm [resolvable:$true] %s623
          %s625 = sshll.u32 [#allocation3], 4
          %s626 = int_to_ptr.vmem [resolvable:$true] %s625
          %628 = dma.hbm_to_vmem [thread:$0]  %s624, 16, %s626, [#allocation4]
        $region24: #{tpu_custom_call.1} parent=11 // pred_fallthru
          _
        // Predicated region
        $region25: #{tpu_custom_call.1} parent=11 // pred_check
          %p629 = pneg %p150
        $region26: #{tpu_custom_call.1} parent=11 // pred_check_branch
          %631 = sbr.rel (%p629) target = $region28
        $region27: #{tpu_custom_call.1} parent=11 // pred_region
          %633 = vsyncadd [#allocation7], 0
          %s634 = sshll.u32 %s4, 4
          %s635 = int_to_ptr.hbm [resolvable:$true] %s634
          %s636 = sshll.u32 [#allocation6], 4
          %s637 = int_to_ptr.vmem [resolvable:$true] %s636
          %642 = dma.hbm_to_vmem [thread:$0]  %s635, 512, %s637, [#allocation7], 64, 64, 4
        $region28: #{tpu_custom_call.1} parent=11 // pred_fallthru
          _
        // Predicated region
        $region29: #{tpu_custom_call.1} parent=11 // pred_check
          %p643 = pneg %p171
        $region30: #{tpu_custom_call.1} parent=11 // pred_check_branch
          %645 = sbr.rel (%p643) target = $region32
        $region31: #{tpu_custom_call.1} parent=11 // pred_region
          %647 = vsyncadd [#allocation7], 0
          %s648 = sshll.u32 %s5, 4
          %s649 = int_to_ptr.hbm [resolvable:$true] %s648
          %s650 = sshll.u32 [#allocation8], 4
          %s651 = int_to_ptr.vmem [resolvable:$true] %s650
          %656 = dma.hbm_to_vmem [thread:$0]  %s649, 512, %s651, [#allocation7], 64, 64, 4
        $region32: #{tpu_custom_call.1} parent=11 // pred_fallthru
          _
        // Predicated region
        $region33: #{tpu_custom_call.1} parent=11 // pred_check
          %p657 = pneg %p192
        $region34: #{tpu_custom_call.1} parent=11 // pred_check_branch
          %659 = sbr.rel (%p657) target = $region36
        $region35: #{tpu_custom_call.1} parent=11 // pred_region
          %661 = vsyncadd [#allocation10], 0
          %s663 = sshll.u32 %s6, 4
          %s664 = int_to_ptr.hbm [resolvable:$true] %s663
          %s665 = sshll.u32 [#allocation9], 4
          %s666 = int_to_ptr.vmem [resolvable:$true] %s665
          %668 = dma.hbm_to_vmem [thread:$0]  %s664, 16, %s666, [#allocation10]
        $region36: #{tpu_custom_call.1} parent=11 // pred_fallthru
          _
        // Predicated region
        $region37: #{tpu_custom_call.1} parent=11 // pred_check
          %p669 = pneg %p213
        $region38: #{tpu_custom_call.1} parent=11 // pred_check_branch
          %671 = sbr.rel (%p669) target = $region40
        $region39: #{tpu_custom_call.1} parent=11 // pred_region
          %673 = vsyncadd [#allocation10], 0
          %s675 = sshll.u32 %s7, 4
          %s676 = int_to_ptr.hbm [resolvable:$true] %s675
          %s677 = sshll.u32 [#allocation11], 4
          %s678 = int_to_ptr.vmem [resolvable:$true] %s677
          %680 = dma.hbm_to_vmem [thread:$0]  %s676, 16, %s678, [#allocation10]
        $region40: #{tpu_custom_call.1} parent=11 // pred_fallthru
          _
        // Predicated region
        $region41: #{tpu_custom_call.1} parent=11 // pred_check
          %p681 = pneg %p234
        $region42: #{tpu_custom_call.1} parent=11 // pred_check_branch
          %683 = sbr.rel (%p681) target = $region44
        $region43: #{tpu_custom_call.1} parent=11 // pred_region
          _
        $region44: #{tpu_custom_call.1} parent=11 // pred_fallthru
          _
        // Predicated region
        $region45: #{tpu_custom_call.1} parent=11 // pred_check
          %p684 = pneg %p255
        $region46: #{tpu_custom_call.1} parent=11 // pred_check_branch
          %686 = sbr.rel (%p684) target = $region48
        $region47: #{tpu_custom_call.1} parent=11 // pred_region
          _
        $region48: #{tpu_custom_call.1} parent=11 // pred_fallthru
          _
        // Predicated region
        $region49: #{tpu_custom_call.1} parent=11 // pred_check
          %p687 = pneg %p276
        $region50: #{tpu_custom_call.1} parent=11 // pred_check_branch
          %689 = sbr.rel (%p687) target = $region52
        $region51: #{tpu_custom_call.1} parent=11 // pred_region
          %691 = vsyncadd [#allocation13], 0
          %s692 = sshll.u32 %s10, 4
          %s693 = int_to_ptr.hbm [resolvable:$true] %s692
          %s694 = sshll.u32 [#allocation12], 4
          %s695 = int_to_ptr.vmem [resolvable:$true] %s694
          %700 = dma.hbm_to_vmem [thread:$0]  %s693, 512, %s695, [#allocation13], 64, 64, 4
        $region52: #{tpu_custom_call.1} parent=11 // pred_fallthru
          _
        // Predicated region
        $region53: #{tpu_custom_call.1} parent=11 // pred_check
          %p701 = pneg %p297
        $region54: #{tpu_custom_call.1} parent=11 // pred_check_branch
          %703 = sbr.rel (%p701) target = $region56
        $region55: #{tpu_custom_call.1} parent=11 // pred_region
          %705 = vsyncadd [#allocation13], 0
          %s706 = sshll.u32 %s11, 4
          %s707 = int_to_ptr.hbm [resolvable:$true] %s706
          %s708 = sshll.u32 [#allocation14], 4
          %s709 = int_to_ptr.vmem [resolvable:$true] %s708
          %714 = dma.hbm_to_vmem [thread:$0]  %s707, 512, %s709, [#allocation13], 64, 64, 4
        $region56: #{tpu_custom_call.1} parent=11 // pred_fallthru
          _
        // Predicated region
        $region57: #{tpu_custom_call.1} parent=11 // pred_check
          %p715 = pneg %p318
        $region58: #{tpu_custom_call.1} parent=11 // pred_check_branch
          %717 = sbr.rel (%p715) target = $region60
        $region59: #{tpu_custom_call.1} parent=11 // pred_region
          _
        $region60: #{tpu_custom_call.1} parent=11 // pred_fallthru
          _
        // Predicated region
        $region61: #{tpu_custom_call.1} parent=11 // pred_check
          %p718 = pneg %p339
        $region62: #{tpu_custom_call.1} parent=11 // pred_check_branch
          %720 = sbr.rel (%p718) target = $region64
        $region63: #{tpu_custom_call.1} parent=11 // pred_region
          %722 = vsyncadd [#allocation16], 0
          %s723 = sshll.u32 %s13, 4
          %s724 = int_to_ptr.hbm [resolvable:$true] %s723
          %s725 = sshll.u32 [#allocation15], 4
          %s726 = int_to_ptr.vmem [resolvable:$true] %s725
          %731 = dma.hbm_to_vmem [thread:$0]  %s724, 512, %s726, [#allocation16], 128, 128, 8
        $region64: #{tpu_custom_call.1} parent=11 // pred_fallthru
          _
        // Predicated region
        $region65: #{tpu_custom_call.1} parent=11 // pred_check
          %p732 = pneg %p360
        $region66: #{tpu_custom_call.1} parent=11 // pred_check_branch
          %734 = sbr.rel (%p732) target = $region68
        $region67: #{tpu_custom_call.1} parent=11 // pred_region
          _
        $region68: #{tpu_custom_call.1} parent=11 // pred_fallthru
          _
        // Predicated region
        $region69: #{tpu_custom_call.1} parent=11 // pred_check
          %p735 = pneg %p381
        $region70: #{tpu_custom_call.1} parent=11 // pred_check_branch
          %737 = sbr.rel (%p735) target = $region72
        $region71: #{tpu_custom_call.1} parent=11 // pred_region
          _
        $region72: #{tpu_custom_call.1} parent=11 // pred_fallthru
          _
        // Predicated region
        $region73: #{tpu_custom_call.1} parent=11 // pred_check
          %p738 = pneg %p402
        $region74: #{tpu_custom_call.1} parent=11 // pred_check_branch
          %740 = sbr.rel (%p738) target = $region76
        $region75: #{tpu_custom_call.1} parent=11 // pred_region
          %742 = vsyncadd [#allocation16], 0
          %s743 = sshll.u32 %s16, 4
          %s744 = int_to_ptr.hbm [resolvable:$true] %s743
          %s745 = sshll.u32 [#allocation17], 4
          %s746 = int_to_ptr.vmem [resolvable:$true] %s745
          %751 = dma.hbm_to_vmem [thread:$0]  %s744, 1024, %s746, [#allocation16], 128, 128, 8
        $region76: #{tpu_custom_call.1} parent=11 // pred_fallthru
          _
        // Predicated region
        $region77: #{tpu_custom_call.1} parent=11 // pred_check
          %p752 = pneg %p423
        $region78: #{tpu_custom_call.1} parent=11 // pred_check_branch
          %754 = sbr.rel (%p752) target = $region80
        $region79: #{tpu_custom_call.1} parent=11 // pred_region
          _
        $region80: #{tpu_custom_call.1} parent=11 // pred_fallthru
          _
        // Predicated region
        $region81: #{tpu_custom_call.1} parent=11 // pred_check
          %p755 = pneg %p444
        $region82: #{tpu_custom_call.1} parent=11 // pred_check_branch
          %757 = sbr.rel (%p755) target = $region84
        $region83: #{tpu_custom_call.1} parent=11 // pred_region
          %759 = vsyncadd [#allocation19], 0
          %s760 = sshll.u32 %s18, 4
          %s761 = int_to_ptr.hbm [resolvable:$true] %s760
          %s762 = sshll.u32 [#allocation18], 4
          %s763 = int_to_ptr.vmem [resolvable:$true] %s762
          %768 = dma.hbm_to_vmem [thread:$0]  %s761, 512, %s763, [#allocation19], 64, 64, 4
        $region84: #{tpu_custom_call.1} parent=11 // pred_fallthru
          _
        // Predicated region
        $region85: #{tpu_custom_call.1} parent=11 // pred_check
          %p769 = pneg %p465
        $region86: #{tpu_custom_call.1} parent=11 // pred_check_branch
          %771 = sbr.rel (%p769) target = $region88
        $region87: #{tpu_custom_call.1} parent=11 // pred_region
          %773 = vsyncadd [#allocation19], 0
          %s774 = sshll.u32 %s19, 4
          %s775 = int_to_ptr.hbm [resolvable:$true] %s774
          %s776 = sshll.u32 [#allocation20], 4
          %s777 = int_to_ptr.vmem [resolvable:$true] %s776
          %782 = dma.hbm_to_vmem [thread:$0]  %s775, 512, %s777, [#allocation19], 64, 64, 4
        $region88: #{tpu_custom_call.1} parent=11 // pred_fallthru
          _
        // Predicated region
        $region89: #{tpu_custom_call.1} parent=11 // pred_check
          %p783 = pneg %p486
        $region90: #{tpu_custom_call.1} parent=11 // pred_check_branch
          %785 = sbr.rel (%p783) target = $region92
        $region91: #{tpu_custom_call.1} parent=11 // pred_region
          _
        $region92: #{tpu_custom_call.1} parent=11 // pred_fallthru
          _
        // Predicated region
        $region93: #{tpu_custom_call.1} parent=11 // pred_check
          %p786 = pneg %p507
        $region94: #{tpu_custom_call.1} parent=11 // pred_check_branch
          %788 = sbr.rel (%p786) target = $region96
        $region95: #{tpu_custom_call.1} parent=11 // pred_region
          _
        $region96: #{tpu_custom_call.1} parent=11 // pred_fallthru
          _
        // Predicated region
        $region97: #{tpu_custom_call.1} parent=11 // pred_check
          %p789 = pneg %p528
        $region98: #{tpu_custom_call.1} parent=11 // pred_check_branch
          %791 = sbr.rel (%p789) target = $region100
        $region99: #{tpu_custom_call.1} parent=11 // pred_region
          _
        $region100: #{tpu_custom_call.1} parent=11 // pred_fallthru
          _
        // Predicated region
        $region101: #{tpu_custom_call.1} parent=11 // pred_check
          %p792 = pneg %p549
        $region102: #{tpu_custom_call.1} parent=11 // pred_check_branch
          %794 = sbr.rel (%p792) target = $region104
        $region103: #{tpu_custom_call.1} parent=11 // pred_region
          _
        $region104: #{tpu_custom_call.1} parent=11 // pred_fallthru
          _
        // Predicated region
        $region105: #{tpu_custom_call.1} parent=11 // pred_check
          %p795 = pneg %p570
        $region106: #{tpu_custom_call.1} parent=11 // pred_check_branch
          %797 = sbr.rel (%p795) target = $region108
        $region107: #{tpu_custom_call.1} parent=11 // pred_region
          _
        $region108: #{tpu_custom_call.1} parent=11 // pred_fallthru
          _
      $region12: #{tpu_custom_call.1} parent=5 // pred_fallthru
        _
      %p798 = scmp.lt.s32.totalorder %s40, 2
      // Predicated region
      $region109: #{tpu_custom_call.1} parent=5 // pred_check
        %p799 = pneg %p798
      $region110: #{tpu_custom_call.1} parent=5 // pred_check_branch
        %801 = sbr.rel (%p799) target = $region112
      $region111: #{tpu_custom_call.1} parent=5 // pred_region
        // Predicated region
        $region113: #{tpu_custom_call.1} parent=111 // pred_check
          %p802 = pneg %p60
        $region114: #{tpu_custom_call.1} parent=111 // pred_check_branch
          %804 = sbr.rel (%p802) target = $region116
        $region115: #{tpu_custom_call.1} parent=111 // pred_region
          %p805 = scmp.lt.s32.totalorder %s40, 1
          %s806 = scalar_select %p805, %s40, 1
          %s807 = smul.addr %s806, 8
          %s808 = scalar_lea.vmem %s0, %s807
        $region116: #{tpu_custom_call.1} parent=111 // pred_fallthru
          _
      $region112: #{tpu_custom_call.1} parent=5 // pred_fallthru
        _
      %p809 = scmp.le.s32.totalorder 1, %s40
      %p810 = scmp.lt.s32.totalorder %s40, 3
      %p811 = pnand %p809, %p810
      %p812 = pneg %p811
      // Predicated region
      $region117: #{tpu_custom_call.1} parent=5 // pred_check
        _
      $region118: #{tpu_custom_call.1} parent=5 // pred_check_branch
        %814 = sbr.rel (%p811) target = $region120
      $region119: #{tpu_custom_call.1} parent=5 // pred_region
        %s815 = ssub.s32 %s40, 1
        // Predicated region
        $region121: #{tpu_custom_call.1} parent=119 // pred_check
          %p816 = pneg %p129
        $region122: #{tpu_custom_call.1} parent=119 // pred_check_branch
          %818 = sbr.rel (%p816) target = $region124
        $region123: #{tpu_custom_call.1} parent=119 // pred_region
          %820 = dma.done [#allocation4], 16
        $region124: #{tpu_custom_call.1} parent=119 // pred_fallthru
          _
        // Predicated region
        $region125: #{tpu_custom_call.1} parent=119 // pred_check
          %p821 = pneg %p150
        $region126: #{tpu_custom_call.1} parent=119 // pred_check_branch
          %823 = sbr.rel (%p821) target = $region128
        $region127: #{tpu_custom_call.1} parent=119 // pred_region
          %825 = dma.done [#allocation7], 512
        $region128: #{tpu_custom_call.1} parent=119 // pred_fallthru
          _
        // Predicated region
        $region129: #{tpu_custom_call.1} parent=119 // pred_check
          %p826 = pneg %p171
        $region130: #{tpu_custom_call.1} parent=119 // pred_check_branch
          %828 = sbr.rel (%p826) target = $region132
        $region131: #{tpu_custom_call.1} parent=119 // pred_region
          %830 = dma.done [#allocation7], 512
        $region132: #{tpu_custom_call.1} parent=119 // pred_fallthru
          _
        // Predicated region
        $region133: #{tpu_custom_call.1} parent=119 // pred_check
          %p831 = pneg %p192
        $region134: #{tpu_custom_call.1} parent=119 // pred_check_branch
          %833 = sbr.rel (%p831) target = $region136
        $region135: #{tpu_custom_call.1} parent=119 // pred_region
          %835 = dma.done [#allocation10], 16
        $region136: #{tpu_custom_call.1} parent=119 // pred_fallthru
          _
        // Predicated region
        $region137: #{tpu_custom_call.1} parent=119 // pred_check
          %p836 = pneg %p213
        $region138: #{tpu_custom_call.1} parent=119 // pred_check_branch
          %838 = sbr.rel (%p836) target = $region140
        $region139: #{tpu_custom_call.1} parent=119 // pred_region
          %840 = dma.done [#allocation10], 16
        $region140: #{tpu_custom_call.1} parent=119 // pred_fallthru
          _
        // Predicated region
        $region141: #{tpu_custom_call.1} parent=119 // pred_check
          %p841 = pneg %p276
        $region142: #{tpu_custom_call.1} parent=119 // pred_check_branch
          %843 = sbr.rel (%p841) target = $region144
        $region143: #{tpu_custom_call.1} parent=119 // pred_region
          %845 = dma.done [#allocation13], 512
        $region144: #{tpu_custom_call.1} parent=119 // pred_fallthru
          _
        // Predicated region
        $region145: #{tpu_custom_call.1} parent=119 // pred_check
          %p846 = pneg %p297
        $region146: #{tpu_custom_call.1} parent=119 // pred_check_branch
          %848 = sbr.rel (%p846) target = $region148
        $region147: #{tpu_custom_call.1} parent=119 // pred_region
          %850 = dma.done [#allocation13], 512
        $region148: #{tpu_custom_call.1} parent=119 // pred_fallthru
          _
        // Predicated region
        $region149: #{tpu_custom_call.1} parent=119 // pred_check
          %p851 = pneg %p339
        $region150: #{tpu_custom_call.1} parent=119 // pred_check_branch
          %853 = sbr.rel (%p851) target = $region152
        $region151: #{tpu_custom_call.1} parent=119 // pred_region
          %855 = dma.done [#allocation16], 512
        $region152: #{tpu_custom_call.1} parent=119 // pred_fallthru
          _
        // Predicated region
        $region153: #{tpu_custom_call.1} parent=119 // pred_check
          %p856 = pneg %p402
        $region154: #{tpu_custom_call.1} parent=119 // pred_check_branch
          %858 = sbr.rel (%p856) target = $region156
        $region155: #{tpu_custom_call.1} parent=119 // pred_region
          %860 = dma.done [#allocation16], 1024
        $region156: #{tpu_custom_call.1} parent=119 // pred_fallthru
          _
        // Predicated region
        $region157: #{tpu_custom_call.1} parent=119 // pred_check
          %p861 = pneg %p444
        $region158: #{tpu_custom_call.1} parent=119 // pred_check_branch
          %863 = sbr.rel (%p861) target = $region160
        $region159: #{tpu_custom_call.1} parent=119 // pred_region
          %865 = dma.done [#allocation19], 512
        $region160: #{tpu_custom_call.1} parent=119 // pred_fallthru
          _
        // Predicated region
        $region161: #{tpu_custom_call.1} parent=119 // pred_check
          %p866 = pneg %p465
        $region162: #{tpu_custom_call.1} parent=119 // pred_check_branch
          %868 = sbr.rel (%p866) target = $region164
        $region163: #{tpu_custom_call.1} parent=119 // pred_region
          %870 = dma.done [#allocation19], 512
        $region164: #{tpu_custom_call.1} parent=119 // pred_fallthru
          _
        %p871 = scmp.lt.s32.totalorder %s45, 1
        %s872 = scalar_select %p871, %s45, 1
        %s873 = smul.addr %s872, 8
        %s874 = scalar_lea.vmem %s0, %s873
        %p875 = pneg %p66
        %p876 = pneg %p63
        %p877 = pneg %p87
        %p878 = pneg %p84
        %p879 = pneg %p108
        %p880 = pneg %p105
        %p881 = pneg %p129
        %p882 = pneg %p126
        %p883 = pneg %p150
        %p884 = pneg %p147
        %p885 = pneg %p171
        %p886 = pneg %p168
        %p887 = pneg %p192
        %p888 = pneg %p189
        %p889 = pneg %p213
        %p890 = pneg %p210
        %p891 = pneg %p234
        %p892 = pneg %p231
        %p893 = pneg %p255
        %p894 = pneg %p252
        %p895 = pneg %p276
        %p896 = pneg %p273
        %p897 = pneg %p297
        %p898 = pneg %p294
        %p899 = pneg %p318
        %p900 = pneg %p315
        %p901 = pneg %p339
        %p902 = pneg %p336
        %p903 = pneg %p360
        %p904 = pneg %p357
        %p905 = pneg %p381
        %p906 = pneg %p378
        %p907 = pneg %p402
        %p908 = pneg %p399
        %p909 = pneg %p423
        %p910 = pneg %p420
        %p911 = pneg %p444
        %p912 = pneg %p441
        %p913 = pneg %p465
        %p914 = pneg %p462
        %p915 = pneg %p486
        %p916 = pneg %p483
        %p917 = pneg %p507
        %p918 = pneg %p504
        %p919 = pneg %p528
        %p920 = pneg %p525
        %p921 = pneg %p549
        %p922 = pneg %p546
        %p923 = pneg %p570
        %p924 = pneg %p567
        %p925 = pneg %p596
        %p926 = pneg %p593
        %s927 = sand.u32 %s583, 1
        %s928 = scalar_lea.sflag [#allocation5], %s927
        %s929 = sand.u32 %s583, 1
        %s930 = scalar_lea.vmem [#allocation21], %s929
        %p931 = scmp.lt.s32.totalorder %s45, 1
        %s932 = scalar_select %p931, %s45, 1
        %s933 = smul.addr %s932, 8
        %s934 = scalar_lea.vmem %s0, %s933
        %v936 = vld [vmem:[%s934] sm:$0xff]
        %v937 = vld [vmem:[%s1] sm:$0xf]
        %v938 = vld [vmem:[%s1 + $0x4] sm:$0xf]
        %v939 = vld [vmem:[%s1 + $0x8] sm:$0xf]
        %v940 = vld [vmem:[%s1 + $0xc] sm:$0xf]
        %v941 = vld [vmem:[%s1 + $0x10] sm:$0xf]
        %v942 = vld [vmem:[%s1 + $0x14] sm:$0xf]
        %v943 = vld [vmem:[%s1 + $0x18] sm:$0xf]
        %v944 = vld [vmem:[%s1 + $0x1c] sm:$0xf]
        %v945 = vld [vmem:[%s1 + $0x20] sm:$0xf]
        %v946 = vld [vmem:[%s1 + $0x24] sm:$0xf]
        %v947 = vld [vmem:[%s1 + $0x28] sm:$0xf]
        %v948 = vld [vmem:[%s1 + $0x2c] sm:$0xf]
        %v949 = vpack.c.bf16 %v936, %v936
        %v950 = vld [vmem:[%s2] sm:$0x1]
        %v952 = vperm.slane %v950, 0
        %v966 = vunpack.c.l.b16 %v937
        %v967 = vunpack.c.l.b16 %v938
        %v968 = vunpack.c.l.b16 %v939
        %v969 = vunpack.c.l.b16 %v940
        %v970 = vunpack.c.l.b16 %v941
        %v971 = vunpack.c.l.b16 %v942
        %v972 = vunpack.c.l.b16 %v943
        %v973 = vunpack.c.l.b16 %v944
        %v974 = vunpack.c.l.b16 %v945
        %v975 = vunpack.c.l.b16 %v946
        %v976 = vunpack.c.l.b16 %v947
        %v977 = vunpack.c.l.b16 %v948
        %v978 = vpack.c.b16 %v967, %v966
        %v979 = vpack.c.b16 %v969, %v968
        %v980 = vpack.c.b16 %v971, %v970
        %v981 = vpack.c.b16 %v973, %v972
        %v982 = vpack.c.b16 %v975, %v974
        %v983 = vpack.c.b16 %v977, %v976
        %vm990 = vcmask 785408
        %v992 = vsel %vm990, %v949, 0
        %994 = vmatpush.bf16.msra.mxu0 0
        %995 = vmatpush.bf16.msra.mxu0 0
        %996 = vmatpush.bf16.msra.mxu0 %v983
        %997 = vmatpush.bf16.msra.mxu0 %v982
        %998 = vmatpush.bf16.msra.mxu0 %v981
        %999 = vmatpush.bf16.msra.mxu0 %v980
        %1000 = vmatpush.bf16.msra.mxu0 %v979
        %1001 = vmatpush.bf16.msra.mxu0 %v978
        %1002 = vmatmul.bf16.gmra.mxu0 %v992
        %v1003 = vpop.f32.mrf.mxu0
        %v1004 = vadd.f32 %v952, %v1003
        %v1005 = vpop.f32.mrf.mxu0
        %1006 = vdwg.mxu0
        %v1007 = vmax.f32 %v1004, 0.0
        %v1008 = vld [vmem:[#allocation3] sm:$0x1]
        %vm1009 = vcmask 516096
        %1010 = vst.msk [vmem:[#allocation2] sm:$0x1] %vm1009, %v1008
        %vm1011 = vcmask 523264
        %1012 = vst.msk [vmem:[#allocation2 + $0x1] sm:$0xff] %vm1011, %v1007
        %1013 = vst.msk [vmem:[#allocation2 + $0x9] sm:$0x1] %vm1009, %v1007
        %v1014 = vld [vmem:[#allocation6] sm:$0xf]
        %v1015 = vld [vmem:[#allocation6 + $0x4] sm:$0xf]
        %v1016 = vld [vmem:[#allocation6 + $0x8] sm:$0xf]
        %v1017 = vld [vmem:[#allocation6 + $0xc] sm:$0xf]
        %v1018 = vld [vmem:[#allocation6 + $0x10] sm:$0xf]
        %v1019 = vld [vmem:[#allocation6 + $0x14] sm:$0xf]
        %v1020 = vld [vmem:[#allocation6 + $0x18] sm:$0xf]
        %v1021 = vld [vmem:[#allocation6 + $0x1c] sm:$0xf]
        %v1022 = vld [vmem:[#allocation8] sm:$0xf]
        %v1023 = vld [vmem:[#allocation8 + $0x4] sm:$0xf]
        %v1024 = vld [vmem:[#allocation8 + $0x8] sm:$0xf]
        %v1025 = vld [vmem:[#allocation8 + $0xc] sm:$0xf]
        %v1026 = vld [vmem:[#allocation8 + $0x10] sm:$0xf]
        %v1027 = vld [vmem:[#allocation8 + $0x14] sm:$0xf]
        %v1028 = vld [vmem:[#allocation8 + $0x18] sm:$0xf]
        %v1029 = vld [vmem:[#allocation8 + $0x1c] sm:$0xf]
        %v1030 = vld [vmem:[#allocation2] sm:$0xff]
        %v1031 = vld [vmem:[#allocation2 + $0x8] sm:$0x3]
        %v1032 = vld [vmem:[#allocation9] sm:$0x1]
        %v1033 = vld [vmem:[#allocation11] sm:$0x1]
        %v1034 = vld [vmem:[%s8] sm:$0xff]
        %v1035 = vld [vmem:[%s8 + $0x8] sm:$0xff]
        %v1036 = vld [vmem:[%s8 + $0x10] sm:$0xff]
        %v1037 = vld [vmem:[%s8 + $0x18] sm:$0xff]
        %v1038 = vld [vmem:[%s8 + $0x20] sm:$0xff]
        %v1039 = vld [vmem:[%s8 + $0x28] sm:$0xff]
        %v1040 = vld [vmem:[%s8 + $0x30] sm:$0xff]
        %v1041 = vld [vmem:[%s8 + $0x38] sm:$0xff]
        %v1042 = vld [vmem:[%s9] sm:$0x3]
        %v1043 = vld [vmem:[#allocation12] sm:$0xf]
        %v1044 = vld [vmem:[#allocation12 + $0x4] sm:$0xf]
        %v1045 = vld [vmem:[#allocation12 + $0x8] sm:$0xf]
        %v1046 = vld [vmem:[#allocation12 + $0xc] sm:$0xf]
        %v1047 = vld [vmem:[#allocation12 + $0x10] sm:$0xf]
        %v1048 = vld [vmem:[#allocation12 + $0x14] sm:$0xf]
        %v1049 = vld [vmem:[#allocation12 + $0x18] sm:$0xf]
        %v1050 = vld [vmem:[#allocation12 + $0x1c] sm:$0xf]
        %v1051 = vld [vmem:[#allocation14] sm:$0xf]
        %v1052 = vld [vmem:[#allocation14 + $0x4] sm:$0xf]
        %v1053 = vld [vmem:[#allocation14 + $0x8] sm:$0xf]
        %v1054 = vld [vmem:[#allocation14 + $0xc] sm:$0xf]
        %v1055 = vld [vmem:[#allocation14 + $0x10] sm:$0xf]
        %v1056 = vld [vmem:[#allocation14 + $0x14] sm:$0xf]
        %v1057 = vld [vmem:[#allocation14 + $0x18] sm:$0xf]
        %v1058 = vld [vmem:[#allocation14 + $0x1c] sm:$0xf]
        %v1059 = vld [vmem:[%s12] sm:$0x1]
        %v1060 = vsel %vm1011, %v1030, 0.0
        %1061 = vadd.xlane.f32.xlu0 %v1060
        %v1062 = vpop.xlane.xlu0 %1061
        %vm1063 = vcmask 517120
        %v1064 = vsel %vm1063, %v1031, 0.0
        %1065 = vadd.xlane.f32.xlu0 %v1064
        %v1066 = vpop.xlane.xlu0 %1065
        %v1067 = vrcp.pop 64.0
        %v1068 = vmul.f32 64.0, %v1067
        %v1069 = vsub.f32 1.0, %v1068
        %v1070 = vmul.f32 %v1067, %v1069
        %v1071 = vadd.f32 %v1067, %v1070
        %vm1072 = vweird.f32 %v1067
        %v1073 = vsel %vm1072, %v1067, %v1071
        %v1074 = vmul.f32 %v1062, %v1073
        %v1075 = vmul.f32 %v1066, %v1073
        %v1076 = vsub.f32 %v1030, %v1074
        %v1077 = vsub.f32 %v1031, %v1075
        %v1078 = vmul.f32 %v1076, %v1076
        %v1079 = vmul.f32 %v1077, %v1077
        %v1080 = vsel %vm1011, %v1078, 0.0
        %1081 = vadd.xlane.f32.xlu0 %v1080
        %v1082 = vpop.xlane.xlu0 %1081
        %v1083 = vsel %vm1063, %v1079, 0.0
        %1084 = vadd.xlane.f32.xlu0 %v1083
        %v1085 = vpop.xlane.xlu0 %1084
        %v1086 = vmul.f32 %v1082, %v1073
        %v1087 = vmul.f32 %v1085, %v1073
        %v1088 = vadd.f32 %v1086, 1e-05
        %v1089 = vadd.f32 %v1087, 1e-05
        %v1090 = vrsqrt.pop %v1088
        %v1091 = vmul.f32 %v1090, %v1088
        %v1092 = vmul.f32 %v1091, %v1090
        %v1093 = vmul.f32 0.5, %v1092
        %v1094 = vsub.f32 1.5, %v1093
        %v1095 = vmul.f32 %v1090, %v1094
        %vm1096 = vweird.f32 %v1088
        %vm1097 = vweird.f32 %v1090
        %vm1098 = vmor %vm1096, %vm1097
        %v1099 = vsel %vm1098, %v1090, %v1095
        %v1100 = vrsqrt.pop %v1089
        %v1101 = vmul.f32 %v1100, %v1089
        %v1102 = vmul.f32 %v1101, %v1100
        %v1103 = vmul.f32 0.5, %v1102
        %v1104 = vsub.f32 1.5, %v1103
        %v1105 = vmul.f32 %v1100, %v1104
        %vm1106 = vweird.f32 %v1089
        %vm1107 = vweird.f32 %v1100
        %vm1108 = vmor %vm1106, %vm1107
        %v1109 = vsel %vm1108, %v1100, %v1105
        %v1110 = vmul.f32 %v1076, %v1099
        %v1111 = vmul.f32 %v1077, %v1109
        %v1113 = vperm.slane %v1032, 0
        %v1115 = vmul.f32 %v1110, %v1113
        %v1116 = vmul.f32 %v1111, %v1113
        %v1118 = vperm.slane %v1033, 0
        %v1120 = vadd.f32 %v1115, %v1118
        %v1121 = vadd.f32 %v1116, %v1118
        %v1122 = vpack.c.bf16 %v1121, %v1120
        %v1124 = vperm.slane %v1042, 0
        %v1125 = vperm.slane %v1042, 1
        %v1136 = vunpack.c.l.b16 %v1034
        %v1137 = vunpack.c.h.b16 %v1034
        %v1138 = vunpack.c.l.b16 %v1035
        %v1139 = vunpack.c.h.b16 %v1035
        %v1140 = vunpack.c.l.b16 %v1036
        %v1141 = vunpack.c.h.b16 %v1036
        %v1142 = vunpack.c.l.b16 %v1037
        %v1143 = vunpack.c.h.b16 %v1037
        %v1144 = vunpack.c.l.b16 %v1038
        %v1145 = vunpack.c.h.b16 %v1038
        %v1146 = vunpack.c.l.b16 %v1039
        %v1147 = vunpack.c.h.b16 %v1039
        %v1148 = vunpack.c.l.b16 %v1040
        %v1149 = vunpack.c.h.b16 %v1040
        %v1150 = vunpack.c.l.b16 %v1041
        %v1151 = vunpack.c.h.b16 %v1041
        %v1152 = vpack.c.b16 %v1138, %v1136
        %v1153 = vpack.c.b16 %v1139, %v1137
        %v1154 = vpack.c.b16 %v1142, %v1140
        %v1155 = vpack.c.b16 %v1143, %v1141
        %v1156 = vpack.c.b16 %v1146, %v1144
        %v1157 = vpack.c.b16 %v1147, %v1145
        %v1158 = vpack.c.b16 %v1150, %v1148
        %v1159 = vpack.c.b16 %v1151, %v1149
        %v1169 = vsel %vm1011, %v1122, 0
        %1171 = vmatpush.bf16.msra.mxu0 0
        %1172 = vmatpush.bf16.msra.mxu0 0
        %1173 = vmatpush.bf16.msra.mxu0 0
        %1174 = vmatpush.bf16.msra.mxu0 0
        %1175 = vmatpush.bf16.msra.mxu0 %v1158
        %1176 = vmatpush.bf16.msra.mxu0 %v1156
        %1177 = vmatpush.bf16.msra.mxu0 %v1154
        %1178 = vmatpush.bf16.msra.mxu0 %v1152
        %1179 = vmatmul.bf16.gmra.mxu0 %v1169
        %v1180 = vpop.f32.mrf.mxu0
        %v1181 = vadd.f32 %v1124, %v1180
        %v1182 = vpop.f32.mrf.mxu0
        %v1183 = vadd.f32 %v1124, %v1182
        %1184 = vdwg.mxu0
        %1185 = vmatpush.bf16.msra.mxu0 0
        %1186 = vmatpush.bf16.msra.mxu0 0
        %1187 = vmatpush.bf16.msra.mxu0 0
        %1188 = vmatpush.bf16.msra.mxu0 0
        %1189 = vmatpush.bf16.msra.mxu0 %v1159
        %1190 = vmatpush.bf16.msra.mxu0 %v1157
        %1191 = vmatpush.bf16.msra.mxu0 %v1155
        %1192 = vmatpush.bf16.msra.mxu0 %v1153
        %1193 = vmatmul.bf16.gmra.mxu0 %v1169
        %v1194 = vpop.f32.mrf.mxu0
        %v1195 = vadd.f32 %v1125, %v1194
        %v1196 = vpop.f32.mrf.mxu0
        %v1197 = vadd.f32 %v1125, %v1196
        %1198 = vdwg.mxu0
        %v1199 = vpack.c.bf16 %v1183, %v1181
        %v1208 = vunpack.c.l.b16 %v1043
        %v1209 = vunpack.c.l.b16 %v1044
        %v1210 = vunpack.c.l.b16 %v1045
        %v1211 = vunpack.c.l.b16 %v1046
        %v1212 = vunpack.c.l.b16 %v1047
        %v1213 = vunpack.c.l.b16 %v1048
        %v1214 = vunpack.c.l.b16 %v1049
        %v1215 = vunpack.c.l.b16 %v1050
        %v1216 = vpack.c.b16 %v1209, %v1208
        %v1217 = vpack.c.b16 %v1211, %v1210
        %v1218 = vpack.c.b16 %v1213, %v1212
        %v1219 = vpack.c.b16 %v1215, %v1214
        %1221 = vrot.lane.b32.xlu0 %v1199, 64
        %v1222 = vpop.permute.xlu0 %1221
        %v1224 = vsel %vm1011, %v1216, 0
        %v1227 = vsel %vm1011, %v1217, 0
        %v1230 = vsel %vm1011, %v1218, 0
        %v1233 = vsel %vm1011, %v1219, 0
        %v1236 = vsel %vm1011, %v1222, 0
        %1238 = vmatpush.bf16.xpose.msra.mxu0 0
        %1239 = vmatpush.bf16.xpose.msra.mxu0 0
        %1240 = vmatpush.bf16.xpose.msra.mxu0 0
        %1241 = vmatpush.bf16.xpose.msra.mxu0 0
        %1242 = vmatpush.bf16.xpose.msra.mxu0 0
        %1243 = vmatpush.bf16.xpose.msra.mxu0 0
        %1244 = vmatpush.bf16.xpose.msra.mxu0 0
        %1245 = vmatpush.bf16.xpose.msra.mxu0 %v1236
        %1246 = vmatmul.bf16.gmra.mxu0 %v1224
        %v1247 = vpop.f32.mrf.mxu0
        %v1248 = vadd.f32 0.0, %v1247
        %v1249 = vpop.f32.mrf.mxu0
        %v1250 = vadd.f32 0.0, %v1249
        %1251 = vmatmul.bf16.gmra.mxu0 %v1227
        %v1252 = vpop.f32.mrf.mxu0
        %v1253 = vadd.f32 0.0, %v1252
        %v1254 = vpop.f32.mrf.mxu0
        %v1255 = vadd.f32 0.0, %v1254
        %1256 = vmatmul.bf16.gmra.mxu0 %v1230
        %v1257 = vpop.f32.mrf.mxu0
        %v1258 = vadd.f32 0.0, %v1257
        %v1259 = vpop.f32.mrf.mxu0
        %v1260 = vadd.f32 0.0, %v1259
        %1261 = vmatmul.bf16.gmra.mxu0 %v1233
        %v1262 = vpop.f32.mrf.mxu0
        %v1263 = vadd.f32 0.0, %v1262
        %v1264 = vpop.f32.mrf.mxu0
        %v1265 = vadd.f32 0.0, %v1264
        %1266 = vdwg.mxu0
        %v1267 = vmul.f32 %v1248, 0.35355338
        %v1268 = vmul.f32 %v1250, 0.35355338
        %v1269 = vmul.f32 %v1253, 0.35355338
        %v1270 = vmul.f32 %v1255, 0.35355338
        %v1271 = vmul.f32 %v1258, 0.35355338
        %v1272 = vmul.f32 %v1260, 0.35355338
        %v1273 = vmul.f32 %v1263, 0.35355338
        %v1274 = vmul.f32 %v1265, 0.35355338
        %vm1275 = vcmask 80896
        %v1276 = vsel %vm1275, %v1267, -inf
        %1277 = vmax.xlane.f32.xlu0 %v1276
        %v1278 = vpop.xlane.xlu0 %1277
        %v1279 = vsel %vm1275, %v1268, -inf
        %1280 = vmax.xlane.f32.xlu0 %v1279
        %v1281 = vpop.xlane.xlu0 %1280
        %v1282 = vsel %vm1275, %v1269, -inf
        %1283 = vmax.xlane.f32.xlu0 %v1282
        %v1284 = vpop.xlane.xlu0 %1283
        %v1285 = vsel %vm1275, %v1270, -inf
        %1286 = vmax.xlane.f32.xlu0 %v1285
        %v1287 = vpop.xlane.xlu0 %1286
        %v1288 = vsel %vm1275, %v1271, -inf
        %1289 = vmax.xlane.f32.xlu0 %v1288
        %v1290 = vpop.xlane.xlu0 %1289
        %v1291 = vsel %vm1275, %v1272, -inf
        %1292 = vmax.xlane.f32.xlu0 %v1291
        %v1293 = vpop.xlane.xlu0 %1292
        %v1294 = vsel %vm1275, %v1273, -inf
        %1295 = vmax.xlane.f32.xlu0 %v1294
        %v1296 = vpop.xlane.xlu0 %1295
        %v1297 = vsel %vm1275, %v1274, -inf
        %1298 = vmax.xlane.f32.xlu0 %v1297
        %v1299 = vpop.xlane.xlu0 %1298
        %v1300 = vsub.f32 %v1267, %v1278
        %v1301 = vsub.f32 %v1268, %v1281
        %v1302 = vsub.f32 %v1269, %v1284
        %v1303 = vsub.f32 %v1270, %v1287
        %v1304 = vsub.f32 %v1271, %v1290
        %v1305 = vsub.f32 %v1272, %v1293
        %v1306 = vsub.f32 %v1273, %v1296
        %v1307 = vsub.f32 %v1274, %v1299
        %v1308 = vmul.f32 %v1300, 1.442695
        %v1309 = vpow.pop %v1308
        %v1310 = vmul.f32 %v1301, 1.442695
        %v1311 = vpow.pop %v1310
        %v1312 = vmul.f32 %v1302, 1.442695
        %v1313 = vpow.pop %v1312
        %v1314 = vmul.f32 %v1303, 1.442695
        %v1315 = vpow.pop %v1314
        %v1316 = vmul.f32 %v1304, 1.442695
        %v1317 = vpow.pop %v1316
        %v1318 = vmul.f32 %v1305, 1.442695
        %v1319 = vpow.pop %v1318
        %v1320 = vmul.f32 %v1306, 1.442695
        %v1321 = vpow.pop %v1320
        %v1322 = vmul.f32 %v1307, 1.442695
        %v1323 = vpow.pop %v1322
        %v1324 = vsel %vm1275, %v1309, 0.0
        %1325 = vadd.xlane.f32.xlu0 %v1324
        %v1326 = vpop.xlane.xlu0 %1325
        %v1327 = vsel %vm1275, %v1311, 0.0
        %1328 = vadd.xlane.f32.xlu0 %v1327
        %v1329 = vpop.xlane.xlu0 %1328
        %v1330 = vsel %vm1275, %v1313, 0.0
        %1331 = vadd.xlane.f32.xlu0 %v1330
        %v1332 = vpop.xlane.xlu0 %1331
        %v1333 = vsel %vm1275, %v1315, 0.0
        %1334 = vadd.xlane.f32.xlu0 %v1333
        %v1335 = vpop.xlane.xlu0 %1334
        %v1336 = vsel %vm1275, %v1317, 0.0
        %1337 = vadd.xlane.f32.xlu0 %v1336
        %v1338 = vpop.xlane.xlu0 %1337
        %v1339 = vsel %vm1275, %v1319, 0.0
        %1340 = vadd.xlane.f32.xlu0 %v1339
        %v1341 = vpop.xlane.xlu0 %1340
        %v1342 = vsel %vm1275, %v1321, 0.0
        %1343 = vadd.xlane.f32.xlu0 %v1342
        %v1344 = vpop.xlane.xlu0 %1343
        %v1345 = vsel %vm1275, %v1323, 0.0
        %1346 = vadd.xlane.f32.xlu0 %v1345
        %v1347 = vpop.xlane.xlu0 %1346
        %v1348 = vrcp.pop %v1326
        %v1349 = vrcp.pop %v1329
        %v1350 = vrcp.pop %v1332
        %v1351 = vrcp.pop %v1335
        %v1352 = vrcp.pop %v1338
        %v1353 = vrcp.pop %v1341
        %v1354 = vrcp.pop %v1344
        %v1355 = vrcp.pop %v1347
        %v1356 = vmul.f32 %v1309, %v1348
        %v1357 = vmul.f32 %v1311, %v1349
        %v1358 = vmul.f32 %v1313, %v1350
        %v1359 = vmul.f32 %v1315, %v1351
        %v1360 = vmul.f32 %v1317, %v1352
        %v1361 = vmul.f32 %v1319, %v1353
        %v1362 = vmul.f32 %v1321, %v1354
        %v1363 = vmul.f32 %v1323, %v1355
        %v1364 = vpack.c.bf16 %v1357, %v1356
        %v1365 = vpack.c.bf16 %v1359, %v1358
        %v1366 = vpack.c.bf16 %v1361, %v1360
        %v1367 = vpack.c.bf16 %v1363, %v1362
        %v1368 = vpack.c.bf16 %v1197, %v1195
        %v1370 = vsel %vm1275, %v1364, 0
        %v1373 = vsel %vm1275, %v1365, 0
        %v1376 = vsel %vm1275, %v1366, 0
        %v1379 = vsel %vm1275, %v1367, 0
        %vm1381 = vcmask 1044480
        %v1383 = vsel %vm1381, %v1368, 0
        %1385 = vmatpush.bf16.msra.mxu0 0
        %1386 = vmatpush.bf16.msra.mxu0 0
        %1387 = vmatpush.bf16.msra.mxu0 0
        %1388 = vmatpush.bf16.msra.mxu0 0
        %1389 = vmatpush.bf16.msra.mxu0 0
        %1390 = vmatpush.bf16.msra.mxu0 0
        %1391 = vmatpush.bf16.msra.mxu0 0
        %1392 = vmatpush.bf16.msra.mxu0 %v1383
        %1393 = vmatmul.bf16.gmra.mxu0 %v1370
        %v1394 = vpop.f32.mrf.mxu0
        %v1395 = vadd.f32 0.0, %v1394
        %v1396 = vpop.f32.mrf.mxu0
        %v1397 = vadd.f32 0.0, %v1396
        %1398 = vmatmul.bf16.gmra.mxu0 %v1373
        %v1399 = vpop.f32.mrf.mxu0
        %v1400 = vadd.f32 0.0, %v1399
        %v1401 = vpop.f32.mrf.mxu0
        %v1402 = vadd.f32 0.0, %v1401
        %1403 = vmatmul.bf16.gmra.mxu0 %v1376
        %v1404 = vpop.f32.mrf.mxu0
        %v1405 = vadd.f32 0.0, %v1404
        %v1406 = vpop.f32.mrf.mxu0
        %v1407 = vadd.f32 0.0, %v1406
        %1408 = vmatmul.bf16.gmra.mxu0 %v1379
        %v1409 = vpop.f32.mrf.mxu0
        %v1410 = vadd.f32 0.0, %v1409
        %v1411 = vpop.f32.mrf.mxu0
        %v1412 = vadd.f32 0.0, %v1411
        %1413 = vdwg.mxu0
        %v1414 = vunpack.c.l.bf16 %v1014
        %v1415 = vunpack.c.l.bf16 %v1015
        %v1416 = vunpack.c.l.bf16 %v1016
        %v1417 = vunpack.c.l.bf16 %v1017
        %v1418 = vunpack.c.l.bf16 %v1018
        %v1419 = vunpack.c.l.bf16 %v1019
        %v1420 = vunpack.c.l.bf16 %v1020
        %v1421 = vunpack.c.l.bf16 %v1021
        %v1422 = vmul.f32 %v1395, %v1414
        %v1423 = vmul.f32 %v1397, %v1415
        %v1424 = vmul.f32 %v1400, %v1416
        %v1425 = vmul.f32 %v1402, %v1417
        %v1426 = vmul.f32 %v1405, %v1418
        %v1427 = vmul.f32 %v1407, %v1419
        %v1428 = vmul.f32 %v1410, %v1420
        %v1429 = vmul.f32 %v1412, %v1421
        %v1431 = vsel %vm1011, %v1199, 0
        %1433 = vmatpush.bf16.xpose.msra.mxu0 0
        %1434 = vmatpush.bf16.xpose.msra.mxu0 0
        %1435 = vmatpush.bf16.xpose.msra.mxu0 0
        %1436 = vmatpush.bf16.xpose.msra.mxu0 0
        %1437 = vmatpush.bf16.xpose.msra.mxu0 %v1233
        %1438 = vmatpush.bf16.xpose.msra.mxu0 %v1230
        %1439 = vmatpush.bf16.xpose.msra.mxu0 %v1227
        %1440 = vmatpush.bf16.xpose.msra.mxu0 %v1224
        %1441 = vmatmul.bf16.gmra.mxu0 %v1431
        %v1442 = vpop.f32.mrf.mxu0
        %v1443 = vadd.f32 0.0, %v1442
        %v1444 = vpop.f32.mrf.mxu0
        %v1445 = vadd.f32 0.0, %v1444
        %1446 = vdwg.mxu0
        %v1447 = vmul.f32 %v1443, 0.35355338
        %v1448 = vmul.f32 %v1445, 0.35355338
        %v1449 = vsel %vm1011, %v1447, -inf
        %1450 = vmax.xlane.f32.xlu0 %v1449
        %v1451 = vpop.xlane.xlu0 %1450
        %v1452 = vsel %vm1063, %v1448, -inf
        %1453 = vmax.xlane.f32.xlu0 %v1452
        %v1454 = vpop.xlane.xlu0 %1453
        %v1455 = vsub.f32 %v1447, %v1451
        %v1456 = vsub.f32 %v1448, %v1454
        %v1457 = vmul.f32 %v1455, 1.442695
        %v1458 = vpow.pop %v1457
        %v1459 = vmul.f32 %v1456, 1.442695
        %v1460 = vpow.pop %v1459
        %v1461 = vpack.c.bf16 %v1460, %v1458
        %v1470 = vunpack.c.l.b16 %v1022
        %v1471 = vunpack.c.l.b16 %v1023
        %v1472 = vunpack.c.l.b16 %v1024
        %v1473 = vunpack.c.l.b16 %v1025
        %v1474 = vunpack.c.l.b16 %v1026
        %v1475 = vunpack.c.l.b16 %v1027
        %v1476 = vunpack.c.l.b16 %v1028
        %v1477 = vunpack.c.l.b16 %v1029
        %v1478 = vpack.c.b16 %v1471, %v1470
        %v1479 = vpack.c.b16 %v1473, %v1472
        %v1480 = vpack.c.b16 %v1475, %v1474
        %v1481 = vpack.c.b16 %v1477, %v1476
        %v1487 = vsel %vm1011, %v1461, 0
        %1489 = vmatpush.bf16.msra.mxu0 0
        %1490 = vmatpush.bf16.msra.mxu0 0
        %1491 = vmatpush.bf16.msra.mxu0 0
        %1492 = vmatpush.bf16.msra.mxu0 0
        %1493 = vmatpush.bf16.msra.mxu0 %v1481
        %1494 = vmatpush.bf16.msra.mxu0 %v1480
        %1495 = vmatpush.bf16.msra.mxu0 %v1479
        %1496 = vmatpush.bf16.msra.mxu0 %v1478
        %1497 = vmatmul.bf16.gmra.mxu0 %v1487
        %v1498 = vpop.f32.mrf.mxu0
        %v1499 = vadd.f32 0.0, %v1498
        %v1500 = vpop.f32.mrf.mxu0
        %v1501 = vadd.f32 0.0, %v1500
        %1502 = vdwg.mxu0
        %v1503 = vrcp.pop %v1499
        %v1504 = vrcp.pop %v1501
        %v1505 = vmul.f32 %v1458, %v1503
        %v1506 = vmul.f32 %v1460, %v1504
        %v1507 = vpack.c.bf16 %v1506, %v1505
        %v1508 = vpack.c.bf16 %v1423, %v1422
        %v1509 = vpack.c.bf16 %v1425, %v1424
        %v1510 = vpack.c.bf16 %v1427, %v1426
        %v1511 = vpack.c.bf16 %v1429, %v1428
        %v1513 = vsel %vm1011, %v1507, 0
        %1515 = vmatpush.bf16.msra.mxu0 0
        %1516 = vmatpush.bf16.msra.mxu0 0
        %1517 = vmatpush.bf16.msra.mxu0 0
        %1518 = vmatpush.bf16.msra.mxu0 0
        %1519 = vmatpush.bf16.msra.mxu0 %v1511
        %1520 = vmatpush.bf16.msra.mxu0 %v1510
        %1521 = vmatpush.bf16.msra.mxu0 %v1509
        %1522 = vmatpush.bf16.msra.mxu0 %v1508
        %1523 = vmatmul.bf16.gmra.mxu0 %v1513
        %v1524 = vpop.f32.mrf.mxu0
        %v1525 = vadd.f32 0.0, %v1524
        %v1526 = vpop.f32.mrf.mxu0
        %v1527 = vadd.f32 0.0, %v1526
        %1528 = vdwg.mxu0
        %v1529 = vpack.c.bf16 %v1527, %v1525
        %v1538 = vunpack.c.l.b16 %v1051
        %v1539 = vunpack.c.l.b16 %v1052
        %v1540 = vunpack.c.l.b16 %v1053
        %v1541 = vunpack.c.l.b16 %v1054
        %v1542 = vunpack.c.l.b16 %v1055
        %v1543 = vunpack.c.l.b16 %v1056
        %v1544 = vunpack.c.l.b16 %v1057
        %v1545 = vunpack.c.l.b16 %v1058
        %v1546 = vpack.c.b16 %v1539, %v1538
        %v1547 = vpack.c.b16 %v1541, %v1540
        %v1548 = vpack.c.b16 %v1543, %v1542
        %v1549 = vpack.c.b16 %v1545, %v1544
        %v1555 = vsel %vm1011, %v1529, 0
        %1557 = vmatpush.bf16.msra.mxu0 0
        %1558 = vmatpush.bf16.msra.mxu0 0
        %1559 = vmatpush.bf16.msra.mxu0 0
        %1560 = vmatpush.bf16.msra.mxu0 0
        %1561 = vmatpush.bf16.msra.mxu0 %v1549
        %1562 = vmatpush.bf16.msra.mxu0 %v1548
        %1563 = vmatpush.bf16.msra.mxu0 %v1547
        %1564 = vmatpush.bf16.msra.mxu0 %v1546
        %1565 = vmatmul.bf16.gmra.mxu0 %v1555
        %v1566 = vpop.f32.mrf.mxu0
        %v1567 = vadd.f32 0.0, %v1566
        %v1568 = vpop.f32.mrf.mxu0
        %v1569 = vadd.f32 0.0, %v1568
        %1570 = vdwg.mxu0
        %v1571 = vadd.f32 %v1030, %v1567
        %v1572 = vadd.f32 %v1031, %v1569
        %v1574 = vperm.slane %v1059, 0
        %v1576 = vadd.f32 %v1571, %v1574
        %v1577 = vadd.f32 %v1572, %v1574
        %1578 = vst.msk [vmem:[#allocation2] sm:$0xff] %vm1011, %v1576
        %1579 = vst.msk [vmem:[#allocation2 + $0x8] sm:$0x3] %vm1063, %v1577
        %v1580 = vld [vmem:[#allocation15] sm:$0xff]
        %v1581 = vld [vmem:[#allocation15 + $0x8] sm:$0xff]
        %v1582 = vld [vmem:[#allocation15 + $0x10] sm:$0xff]
        %v1583 = vld [vmem:[#allocation15 + $0x18] sm:$0x1]
        %v1584 = vlaneseq
        %v1585 = vshrl.u32 %v1584, 7
        %v1586 = vadd.s32 %v1585, 8
        %vm1587 = vcmp.lt.s32.totalorder %v1585, 0
        %v1588 = vsub.s32 0, %v1585
        %v1589 = vsel %vm1587, %v1588, %v1585
        %v1590 = vand.u32 %v1589, 65535
        %v1591 = vshrl.u32 %v1589, 16
        %v1593 = vmul.u32 %v1590, 43691
        %v1594 = vmul.u32 %v1590, 43690
        %v1595 = vmul.u32 %v1591, 43691
        %v1596 = vmul.u32 %v1591, 43690
        %v1597 = vshll.u32 %v1594, 16
        %v1598 = vshrl.u32 %v1594, 16
        %v1599 = vshll.u32 %v1595, 16
        %v1600 = vshrl.u32 %v1595, 16
        %vm1601 = vc.u32 %v1593, %v1597
        %v1602 = vsel %vm1601, 1, 0
        %v1603 = vadd.s32 %v1593, %v1597
        %v1604 = vadd.s32 %v1596, %v1602
        %vm1605 = vc.u32 %v1603, %v1599
        %v1606 = vsel %vm1605, 1, 0
        %v1607 = vadd.s32 %v1603, %v1599
        %v1608 = vadd.s32 %v1604, %v1606
        %v1609 = vadd.s32 %v1608, %v1598
        %v1610 = vadd.s32 %v1609, %v1600
        %v1611 = vshrl.u32 %v1610, 1
        %v1612 = vmul.u32 %v1611, 3
        %v1613 = vsub.s32 %v1589, %v1612
        %v1614 = vsub.s32 0, %v1613
        %v1615 = vsel %vm1587, %v1614, %v1613
        %vm1616 = vcmp.lt.s32.totalorder %v1586, 0
        %v1617 = vsub.s32 0, %v1586
        %v1618 = vsel %vm1616, %v1617, %v1586
        %v1619 = vand.u32 %v1618, 65535
        %v1620 = vshrl.u32 %v1618, 16
        %v1622 = vmul.u32 %v1619, 43691
        %v1623 = vmul.u32 %v1619, 43690
        %v1624 = vmul.u32 %v1620, 43691
        %v1625 = vmul.u32 %v1620, 43690
        %v1626 = vshll.u32 %v1623, 16
        %v1627 = vshrl.u32 %v1623, 16
        %v1628 = vshll.u32 %v1624, 16
        %v1629 = vshrl.u32 %v1624, 16
        %vm1630 = vc.u32 %v1622, %v1626
        %v1631 = vsel %vm1630, 1, 0
        %v1632 = vadd.s32 %v1622, %v1626
        %v1633 = vadd.s32 %v1625, %v1631
        %vm1634 = vc.u32 %v1632, %v1628
        %v1635 = vsel %vm1634, 1, 0
        %v1636 = vadd.s32 %v1632, %v1628
        %v1637 = vadd.s32 %v1633, %v1635
        %v1638 = vadd.s32 %v1637, %v1627
        %v1639 = vadd.s32 %v1638, %v1629
        %v1640 = vshrl.u32 %v1639, 1
        %v1641 = vmul.u32 %v1640, 3
        %v1642 = vsub.s32 %v1618, %v1641
        %v1643 = vsub.s32 0, %v1642
        %v1644 = vsel %vm1616, %v1643, %v1642
        %vm1645 = vcmp.ne.s32.totalorder %v1615, 0
        %vm1646 = vcmp.ne.s32.totalorder %v1644, 0
        %vm1647 = vcmp.lt.s32.totalorder %v1615, 0
        %vm1648 = vcmp.lt.s32.totalorder %v1644, 0
        %vm1649 = vmand %vm1647, %vm1645
        %vm1650 = vmand %vm1648, %vm1646
        %v1651 = vadd.s32 %v1615, 3
        %v1652 = vadd.s32 %v1644, 3
        %v1653 = vsel %vm1649, %v1651, %v1615
        %v1654 = vsel %vm1650, %v1652, %v1644
        %vm1655 = vcmp.ge.s32.totalorder %v1653, 0
        %vm1656 = vcmp.ge.s32.totalorder %v1654, 0
        %vm1657 = vcmp.lt.s32.totalorder %v1653, 1
        %vm1658 = vcmp.lt.s32.totalorder %v1654, 1
        %vm1659 = vmand %vm1655, %vm1657
        %vm1660 = vmand %vm1656, %vm1658
        %v1661 = vsel %vm1659, 1, 0
        %v1662 = vsel %vm1660, 1, 0
        %v1663 = vcvt.s32.f32 %v1661
        %v1664 = vcvt.s32.f32 %v1662
        %vm1667 = vcmask 1040384
        %v1668 = vrot.slane %v1663, 7
        %v1669 = vrot.slane %v1664, 7
        %v1670 = vsel %vm1667, %v1668, %v1669
        %v1673 = vmul.f32 %v1576, %v1668
        %v1674 = vmul.f32 %v1577, %v1670
        %v1675 = vld [vmem:[#allocation2 + $0x9] sm:$0x1]
        %v1677 = vrot.slane %v1580, 7
        %v1679 = vmul.f32 %v1673, %v1677
        %v1681 = vrot.slane %v1679, 1
        %v1683 = vadd.f32 %v1675, %v1681
        %1684 = vst.msk [vmem:[#allocation2 + $0x9] sm:$0x1] %vm1009, %v1683
        %v1685 = vld [vmem:[#allocation2 + $0x6] sm:$0xf]
        %v1686 = vperm.slane %v1580, 5
        %v1687 = vmul.f32 %v1673, %v1686
        %v1689 = vrot.slane %v1687, 1
        %v1691 = vadd.f32 %v1685, %v1689
        %vm1692 = vcmask 519168
        %1693 = vst.msk [vmem:[#allocation2 + $0x6] sm:$0xf] %vm1692, %v1691
        %v1694 = vld [vmem:[#allocation2 + $0x3] sm:$0x7f]
        %v1695 = vperm.slane %v1581, 2
        %v1696 = vmul.f32 %v1673, %v1695
        %v1698 = vrot.slane %v1696, 1
        %v1700 = vadd.f32 %v1694, %v1698
        %vm1701 = vcmask 522240
        %1702 = vst.msk [vmem:[#allocation2 + $0x3] sm:$0x7f] %vm1701, %v1700
        %v1703 = vld [vmem:[#allocation2 + $0x1] sm:$0xff]
        %v1704 = vperm.slane %v1581, 7
        %v1705 = vmul.f32 %v1673, %v1704
        %v1706 = vmul.f32 %v1674, %v1704
        %vm1709 = vcmask 1045504
        %v1710 = vrot.slane %v1705, 2
        %v1711 = vrot.slane %v1706, 2
        %v1712 = vsel %vm1709, %v1710, %v1711
        %v1714 = vadd.f32 %v1703, %v1712
        %1715 = vst.msk [vmem:[#allocation2 + $0x1] sm:$0xff] %vm1011, %v1714
        %v1716 = vld [vmem:[#allocation2 + $0x1] sm:$0x1f]
        %v1717 = vperm.slane %v1582, 4
        %v1718 = vmul.f32 %v1673, %v1717
        %v1719 = vmul.f32 %v1674, %v1717
        %vm1722 = vcmask 1042432
        %v1723 = vrot.slane %v1718, 5
        %v1724 = vrot.slane %v1719, 5
        %v1725 = vsel %vm1722, %v1723, %v1724
        %v1727 = vadd.f32 %v1716, %v1725
        %vm1728 = vcmask 520192
        %1729 = vst.msk [vmem:[#allocation2 + $0x1] sm:$0x1f] %vm1728, %v1727
        %vm1730 = vcmp.lt.s32.totalorder %v1653, 2
        %vm1731 = vcmp.lt.s32.totalorder %v1654, 2
        %vm1732 = vmand %vm1655, %vm1730
        %vm1733 = vmand %vm1656, %vm1731
        %v1734 = vsel %vm1732, 1, 0
        %v1735 = vsel %vm1733, 1, 0
        %v1736 = vcvt.s32.f32 %v1734
        %v1737 = vcvt.s32.f32 %v1735
        %v1740 = vrot.slane %v1736, 7
        %v1741 = vrot.slane %v1737, 7
        %v1742 = vsel %vm1667, %v1740, %v1741
        %v1745 = vmul.f32 %v1576, %v1740
        %v1746 = vmul.f32 %v1577, %v1742
        %v1747 = vld [vmem:[#allocation2 + $0x8] sm:$0x3]
        %v1748 = vperm.slane %v1580, 1
        %v1749 = vmul.f32 %v1745, %v1748
        %v1751 = vrot.slane %v1749, 1
        %v1753 = vadd.f32 %v1747, %v1751
        %1754 = vst.msk [vmem:[#allocation2 + $0x8] sm:$0x3] %vm1063, %v1753
        %v1755 = vld [vmem:[#allocation2 + $0x5] sm:$0x1f]
        %v1756 = vperm.slane %v1580, 6
        %v1757 = vmul.f32 %v1745, %v1756
        %v1759 = vrot.slane %v1757, 1
        %v1761 = vadd.f32 %v1755, %v1759
        %1762 = vst.msk [vmem:[#allocation2 + $0x5] sm:$0x1f] %vm1728, %v1761
        %v1763 = vld [vmem:[#allocation2 + $0x2] sm:$0xff]
        %v1764 = vperm.slane %v1581, 3
        %v1765 = vmul.f32 %v1745, %v1764
        %v1766 = vmul.f32 %v1746, %v1764
        %vm1769 = vcmask 1046528
        %v1770 = vrot.slane %v1765, 1
        %v1771 = vrot.slane %v1766, 1
        %v1772 = vsel %vm1769, %v1770, %v1771
        %v1774 = vadd.f32 %v1763, %v1772
        %1775 = vst.msk [vmem:[#allocation2 + $0x2] sm:$0xff] %vm1011, %v1774
        %v1776 = vld [vmem:[#allocation2 + $0x1] sm:$0x7f]
        %v1777 = vperm.slane %v1582, 0
        %v1778 = vmul.f32 %v1745, %v1777
        %v1779 = vmul.f32 %v1746, %v1777
        %v1782 = vrot.slane %v1778, 3
        %v1783 = vrot.slane %v1779, 3
        %v1784 = vsel %vm1381, %v1782, %v1783
        %v1786 = vadd.f32 %v1776, %v1784
        %1787 = vst.msk [vmem:[#allocation2 + $0x1] sm:$0x7f] %vm1701, %v1786
        %v1788 = vld [vmem:[#allocation2 + $0x1] sm:$0xf]
        %v1789 = vperm.slane %v1582, 5
        %v1790 = vmul.f32 %v1745, %v1789
        %v1791 = vmul.f32 %v1746, %v1789
        %vm1794 = vcmask 1041408
        %v1795 = vrot.slane %v1790, 6
        %v1796 = vrot.slane %v1791, 6
        %v1797 = vsel %vm1794, %v1795, %v1796
        %v1799 = vadd.f32 %v1788, %v1797
        %1800 = vst.msk [vmem:[#allocation2 + $0x1] sm:$0xf] %vm1692, %v1799
        %v1801 = vld [vmem:[#allocation2 + $0x7] sm:$0x7]
        %v1802 = vperm.slane %v1580, 2
        %v1803 = vmul.f32 %v1576, %v1802
        %v1805 = vrot.slane %v1803, 1
        %v1807 = vadd.f32 %v1801, %v1805
        %vm1808 = vcmask 518144
        %1809 = vst.msk [vmem:[#allocation2 + $0x7] sm:$0x7] %vm1808, %v1807
        %v1810 = vld [vmem:[#allocation2 + $0x4] sm:$0x3f]
        %v1811 = vperm.slane %v1580, 7
        %v1812 = vmul.f32 %v1576, %v1811
        %v1814 = vrot.slane %v1812, 1
        %v1816 = vadd.f32 %v1810, %v1814
        %vm1817 = vcmask 521216
        %1818 = vst.msk [vmem:[#allocation2 + $0x4] sm:$0x3f] %vm1817, %v1816
        %v1819 = vld [vmem:[#allocation2 + $0x1] sm:$0xff]
        %v1820 = vld [vmem:[#allocation2 + $0x9] sm:$0x1]
        %v1821 = vperm.slane %v1581, 4
        %v1822 = vmul.f32 %v1576, %v1821
        %v1823 = vmul.f32 %v1577, %v1821
        %v1826 = vrot.slane %v1822, 1
        %v1827 = vrot.slane %v1823, 1
        %v1828 = vsel %vm1769, %v1826, %v1827
        %v1831 = vadd.f32 %v1819, %v1828
        %v1832 = vadd.f32 %v1820, %v1827
        %1833 = vst.msk [vmem:[#allocation2 + $0x1] sm:$0xff] %vm1011, %v1831
        %1834 = vst.msk [vmem:[#allocation2 + $0x9] sm:$0x1] %vm1009, %v1832
        %v1835 = vld [vmem:[#allocation2 + $0x1] sm:$0x3f]
        %v1836 = vperm.slane %v1582, 1
        %v1837 = vmul.f32 %v1576, %v1836
        %v1838 = vmul.f32 %v1577, %v1836
        %vm1841 = vcmask 1043456
        %v1842 = vrot.slane %v1837, 4
        %v1843 = vrot.slane %v1838, 4
        %v1844 = vsel %vm1841, %v1842, %v1843
        %v1846 = vadd.f32 %v1835, %v1844
        %1847 = vst.msk [vmem:[#allocation2 + $0x1] sm:$0x3f] %vm1817, %v1846
        %v1848 = vld [vmem:[#allocation2 + $0x1] sm:$0x7]
        %v1849 = vperm.slane %v1582, 6
        %v1850 = vmul.f32 %v1576, %v1849
        %v1851 = vmul.f32 %v1577, %v1849
        %v1854 = vrot.slane %v1850, 7
        %v1855 = vrot.slane %v1851, 7
        %v1856 = vsel %vm1667, %v1854, %v1855
        %v1858 = vadd.f32 %v1848, %v1856
        %1859 = vst.msk [vmem:[#allocation2 + $0x1] sm:$0x7] %vm1808, %v1858
        %vm1860 = vcmp.ge.s32.totalorder %v1653, 1
        %vm1861 = vcmp.ge.s32.totalorder %v1654, 1
        %vm1862 = vcmp.lt.s32.totalorder %v1653, 3
        %vm1863 = vcmp.lt.s32.totalorder %v1654, 3
        %vm1864 = vmand %vm1860, %vm1862
        %vm1865 = vmand %vm1861, %vm1863
        %v1866 = vsel %vm1864, 1, 0
        %v1867 = vsel %vm1865, 1, 0
        %v1868 = vcvt.s32.f32 %v1866
        %v1869 = vcvt.s32.f32 %v1867
        %v1872 = vrot.slane %v1868, 7
        %v1873 = vrot.slane %v1869, 7
        %v1874 = vsel %vm1667, %v1872, %v1873
        %v1877 = vmul.f32 %v1576, %v1872
        %v1878 = vmul.f32 %v1577, %v1874
        %v1879 = vld [vmem:[#allocation2 + $0x6] sm:$0xf]
        %v1880 = vperm.slane %v1580, 3
        %v1881 = vmul.f32 %v1877, %v1880
        %v1883 = vrot.slane %v1881, 1
        %v1885 = vadd.f32 %v1879, %v1883
        %1886 = vst.msk [vmem:[#allocation2 + $0x6] sm:$0xf] %vm1692, %v1885
        %v1887 = vld [vmem:[#allocation2 + $0x3] sm:$0x7f]
        %v1888 = vperm.slane %v1581, 0
        %v1889 = vmul.f32 %v1877, %v1888
        %v1891 = vrot.slane %v1889, 1
        %v1893 = vadd.f32 %v1887, %v1891
        %1894 = vst.msk [vmem:[#allocation2 + $0x3] sm:$0x7f] %vm1701, %v1893
        %v1895 = vld [vmem:[#allocation2 + $0x1] sm:$0xff]
        %v1896 = vperm.slane %v1581, 5
        %v1897 = vmul.f32 %v1877, %v1896
        %v1898 = vmul.f32 %v1878, %v1896
        %v1901 = vrot.slane %v1897, 2
        %v1902 = vrot.slane %v1898, 2
        %v1903 = vsel %vm1709, %v1901, %v1902
        %v1905 = vadd.f32 %v1895, %v1903
        %1906 = vst.msk [vmem:[#allocation2 + $0x1] sm:$0xff] %vm1011, %v1905
        %v1907 = vld [vmem:[#allocation2 + $0x1] sm:$0x1f]
        %v1908 = vperm.slane %v1582, 2
        %v1909 = vmul.f32 %v1877, %v1908
        %v1910 = vmul.f32 %v1878, %v1908
        %v1913 = vrot.slane %v1909, 5
        %v1914 = vrot.slane %v1910, 5
        %v1915 = vsel %vm1722, %v1913, %v1914
        %v1917 = vadd.f32 %v1907, %v1915
        %1918 = vst.msk [vmem:[#allocation2 + $0x1] sm:$0x1f] %vm1728, %v1917
        %v1919 = vld [vmem:[#allocation2 + $0x1] sm:$0x3]
        %v1920 = vperm.slane %v1582, 7
        %v1921 = vmul.f32 %v1878, %v1920
        %v1922 = vadd.f32 %v1919, %v1921
        %1923 = vst.msk [vmem:[#allocation2 + $0x1] sm:$0x3] %vm1063, %v1922
        %vm1924 = vcmp.ge.s32.totalorder %v1653, 2
        %vm1925 = vcmp.ge.s32.totalorder %v1654, 2
        %vm1926 = vmand %vm1924, %vm1862
        %vm1927 = vmand %vm1925, %vm1863
        %v1928 = vsel %vm1926, 1, 0
        %v1929 = vsel %vm1927, 1, 0
        %v1930 = vcvt.s32.f32 %v1928
        %v1931 = vcvt.s32.f32 %v1929
        %v1934 = vrot.slane %v1930, 7
        %v1935 = vrot.slane %v1931, 7
        %v1936 = vsel %vm1667, %v1934, %v1935
        %v1939 = vmul.f32 %v1576, %v1934
        %v1940 = vmul.f32 %v1577, %v1936
        %v1941 = vld [vmem:[#allocation2 + $0x5] sm:$0x1f]
        %v1942 = vperm.slane %v1580, 4
        %v1943 = vmul.f32 %v1939, %v1942
        %v1945 = vrot.slane %v1943, 1
        %v1947 = vadd.f32 %v1941, %v1945
        %1948 = vst.msk [vmem:[#allocation2 + $0x5] sm:$0x1f] %vm1728, %v1947
        %v1949 = vld [vmem:[#allocation2 + $0x2] sm:$0xff]
        %v1950 = vperm.slane %v1581, 1
        %v1951 = vmul.f32 %v1939, %v1950
        %v1952 = vmul.f32 %v1940, %v1950
        %v1955 = vrot.slane %v1951, 1
        %v1956 = vrot.slane %v1952, 1
        %v1957 = vsel %vm1769, %v1955, %v1956
        %v1959 = vadd.f32 %v1949, %v1957
        %1960 = vst.msk [vmem:[#allocation2 + $0x2] sm:$0xff] %vm1011, %v1959
        %v1961 = vld [vmem:[#allocation2 + $0x1] sm:$0x7f]
        %v1962 = vperm.slane %v1581, 6
        %v1963 = vmul.f32 %v1939, %v1962
        %v1964 = vmul.f32 %v1940, %v1962
        %v1967 = vrot.slane %v1963, 3
        %v1968 = vrot.slane %v1964, 3
        %v1969 = vsel %vm1381, %v1967, %v1968
        %v1971 = vadd.f32 %v1961, %v1969
        %1972 = vst.msk [vmem:[#allocation2 + $0x1] sm:$0x7f] %vm1701, %v1971
        %v1973 = vld [vmem:[#allocation2 + $0x1] sm:$0xf]
        %v1974 = vperm.slane %v1582, 3
        %v1975 = vmul.f32 %v1939, %v1974
        %v1976 = vmul.f32 %v1940, %v1974
        %v1979 = vrot.slane %v1975, 6
        %v1980 = vrot.slane %v1976, 6
        %v1981 = vsel %vm1794, %v1979, %v1980
        %v1983 = vadd.f32 %v1973, %v1981
        %1984 = vst.msk [vmem:[#allocation2 + $0x1] sm:$0xf] %vm1692, %v1983
        %v1985 = vld [vmem:[#allocation2 + $0x1] sm:$0x1]
        %v1987 = vrot.slane %v1583, 7
        %v1989 = vmul.f32 %v1940, %v1987
        %v1991 = vrot.slane %v1989, 1
        %v1993 = vadd.f32 %v1985, %v1991
        %1994 = vst.msk [vmem:[#allocation2 + $0x1] sm:$0x1] %vm1009, %v1993
        %v1995 = vld [vmem:[#allocation2] sm:$0xff]
        %v1996 = vld [vmem:[#allocation2 + $0x8] sm:$0x3]
        %v1997 = vld [vmem:[%s14] sm:$0x1]
        %v1998 = vld [vmem:[%s15] sm:$0x1]
        %v1999 = vld [vmem:[#allocation17] sm:$0xff]
        %v2000 = vld [vmem:[#allocation17 + $0x8] sm:$0xff]
        %v2001 = vld [vmem:[#allocation17 + $0x10] sm:$0xff]
        %v2002 = vld [vmem:[#allocation17 + $0x18] sm:$0xff]
        %v2003 = vld [vmem:[#allocation17 + $0x20] sm:$0xff]
        %v2004 = vld [vmem:[#allocation17 + $0x28] sm:$0xff]
        %v2005 = vld [vmem:[#allocation17 + $0x30] sm:$0xff]
        %v2006 = vld [vmem:[#allocation17 + $0x38] sm:$0xff]
        %v2007 = vld [vmem:[%s17] sm:$0x3]
        %v2008 = vld [vmem:[#allocation18] sm:$0xf]
        %v2009 = vld [vmem:[#allocation18 + $0x4] sm:$0xf]
        %v2010 = vld [vmem:[#allocation18 + $0x8] sm:$0xf]
        %v2011 = vld [vmem:[#allocation18 + $0xc] sm:$0xf]
        %v2012 = vld [vmem:[#allocation18 + $0x10] sm:$0xf]
        %v2013 = vld [vmem:[#allocation18 + $0x14] sm:$0xf]
        %v2014 = vld [vmem:[#allocation18 + $0x18] sm:$0xf]
        %v2015 = vld [vmem:[#allocation18 + $0x1c] sm:$0xf]
        %v2016 = vld [vmem:[#allocation20] sm:$0xf]
        %v2017 = vld [vmem:[#allocation20 + $0x4] sm:$0xf]
        %v2018 = vld [vmem:[#allocation20 + $0x8] sm:$0xf]
        %v2019 = vld [vmem:[#allocation20 + $0xc] sm:$0xf]
        %v2020 = vld [vmem:[#allocation20 + $0x10] sm:$0xf]
        %v2021 = vld [vmem:[#allocation20 + $0x14] sm:$0xf]
        %v2022 = vld [vmem:[#allocation20 + $0x18] sm:$0xf]
        %v2023 = vld [vmem:[#allocation20 + $0x1c] sm:$0xf]
        %v2024 = vld [vmem:[%s20] sm:$0x1]
        %v2025 = vsel %vm1011, %v1995, 0.0
        %2026 = vadd.xlane.f32.xlu0 %v2025
        %v2027 = vpop.xlane.xlu0 %2026
        %v2028 = vsel %vm1063, %v1996, 0.0
        %2029 = vadd.xlane.f32.xlu0 %v2028
        %v2030 = vpop.xlane.xlu0 %2029
        %v2031 = vmul.f32 %v2027, %v1073
        %v2032 = vmul.f32 %v2030, %v1073
        %v2033 = vsub.f32 %v1995, %v2031
        %v2034 = vsub.f32 %v1996, %v2032
        %v2035 = vmul.f32 %v2033, %v2033
        %v2036 = vmul.f32 %v2034, %v2034
        %v2037 = vsel %vm1011, %v2035, 0.0
        %2038 = vadd.xlane.f32.xlu0 %v2037
        %v2039 = vpop.xlane.xlu0 %2038
        %v2040 = vsel %vm1063, %v2036, 0.0
        %2041 = vadd.xlane.f32.xlu0 %v2040
        %v2042 = vpop.xlane.xlu0 %2041
        %v2043 = vmul.f32 %v2039, %v1073
        %v2044 = vmul.f32 %v2042, %v1073
        %v2045 = vadd.f32 %v2043, 1e-05
        %v2046 = vadd.f32 %v2044, 1e-05
        %v2047 = vrsqrt.pop %v2045
        %v2048 = vmul.f32 %v2047, %v2045
        %v2049 = vmul.f32 %v2048, %v2047
        %v2050 = vmul.f32 0.5, %v2049
        %v2051 = vsub.f32 1.5, %v2050
        %v2052 = vmul.f32 %v2047, %v2051
        %vm2053 = vweird.f32 %v2045
        %vm2054 = vweird.f32 %v2047
        %vm2055 = vmor %vm2053, %vm2054
        %v2056 = vsel %vm2055, %v2047, %v2052
        %v2057 = vrsqrt.pop %v2046
        %v2058 = vmul.f32 %v2057, %v2046
        %v2059 = vmul.f32 %v2058, %v2057
        %v2060 = vmul.f32 0.5, %v2059
        %v2061 = vsub.f32 1.5, %v2060
        %v2062 = vmul.f32 %v2057, %v2061
        %vm2063 = vweird.f32 %v2046
        %vm2064 = vweird.f32 %v2057
        %vm2065 = vmor %vm2063, %vm2064
        %v2066 = vsel %vm2065, %v2057, %v2062
        %v2067 = vmul.f32 %v2033, %v2056
        %v2068 = vmul.f32 %v2034, %v2066
        %v2070 = vperm.slane %v1997, 0
        %v2072 = vmul.f32 %v2067, %v2070
        %v2073 = vmul.f32 %v2068, %v2070
        %v2075 = vperm.slane %v1998, 0
        %v2077 = vadd.f32 %v2072, %v2075
        %v2078 = vadd.f32 %v2073, %v2075
        %v2079 = vpack.c.bf16 %v2078, %v2077
        %v2081 = vperm.slane %v2007, 0
        %v2082 = vperm.slane %v2007, 1
        %v2093 = vunpack.c.l.b16 %v1999
        %v2094 = vunpack.c.h.b16 %v1999
        %v2095 = vunpack.c.l.b16 %v2000
        %v2096 = vunpack.c.h.b16 %v2000
        %v2097 = vunpack.c.l.b16 %v2001
        %v2098 = vunpack.c.h.b16 %v2001
        %v2099 = vunpack.c.l.b16 %v2002
        %v2100 = vunpack.c.h.b16 %v2002
        %v2101 = vunpack.c.l.b16 %v2003
        %v2102 = vunpack.c.h.b16 %v2003
        %v2103 = vunpack.c.l.b16 %v2004
        %v2104 = vunpack.c.h.b16 %v2004
        %v2105 = vunpack.c.l.b16 %v2005
        %v2106 = vunpack.c.h.b16 %v2005
        %v2107 = vunpack.c.l.b16 %v2006
        %v2108 = vunpack.c.h.b16 %v2006
        %v2109 = vpack.c.b16 %v2095, %v2093
        %v2110 = vpack.c.b16 %v2096, %v2094
        %v2111 = vpack.c.b16 %v2099, %v2097
        %v2112 = vpack.c.b16 %v2100, %v2098
        %v2113 = vpack.c.b16 %v2103, %v2101
        %v2114 = vpack.c.b16 %v2104, %v2102
        %v2115 = vpack.c.b16 %v2107, %v2105
        %v2116 = vpack.c.b16 %v2108, %v2106
        %v2126 = vsel %vm1011, %v2079, 0
        %2128 = vmatpush.bf16.msra.mxu0 0
        %2129 = vmatpush.bf16.msra.mxu0 0
        %2130 = vmatpush.bf16.msra.mxu0 0
        %2131 = vmatpush.bf16.msra.mxu0 0
        %2132 = vmatpush.bf16.msra.mxu0 %v2115
        %2133 = vmatpush.bf16.msra.mxu0 %v2113
        %2134 = vmatpush.bf16.msra.mxu0 %v2111
        %2135 = vmatpush.bf16.msra.mxu0 %v2109
        %2136 = vmatmul.bf16.gmra.mxu0 %v2126
        %v2137 = vpop.f32.mrf.mxu0
        %v2138 = vadd.f32 %v2081, %v2137
        %v2139 = vpop.f32.mrf.mxu0
        %v2140 = vadd.f32 %v2081, %v2139
        %2141 = vdwg.mxu0
        %2142 = vmatpush.bf16.msra.mxu0 0
        %2143 = vmatpush.bf16.msra.mxu0 0
        %2144 = vmatpush.bf16.msra.mxu0 0
        %2145 = vmatpush.bf16.msra.mxu0 0
        %2146 = vmatpush.bf16.msra.mxu0 %v2116
        %2147 = vmatpush.bf16.msra.mxu0 %v2114
        %2148 = vmatpush.bf16.msra.mxu0 %v2112
        %2149 = vmatpush.bf16.msra.mxu0 %v2110
        %2150 = vmatmul.bf16.gmra.mxu0 %v2126
        %v2151 = vpop.f32.mrf.mxu0
        %v2152 = vadd.f32 %v2082, %v2151
        %v2153 = vpop.f32.mrf.mxu0
        %v2154 = vadd.f32 %v2082, %v2153
        %2155 = vdwg.mxu0
        %v2156 = vpack.c.bf16 %v2140, %v2138
        %v2165 = vunpack.c.l.b16 %v2008
        %v2166 = vunpack.c.l.b16 %v2009
        %v2167 = vunpack.c.l.b16 %v2010
        %v2168 = vunpack.c.l.b16 %v2011
        %v2169 = vunpack.c.l.b16 %v2012
        %v2170 = vunpack.c.l.b16 %v2013
        %v2171 = vunpack.c.l.b16 %v2014
        %v2172 = vunpack.c.l.b16 %v2015
        %v2173 = vpack.c.b16 %v2166, %v2165
        %v2174 = vpack.c.b16 %v2168, %v2167
        %v2175 = vpack.c.b16 %v2170, %v2169
        %v2176 = vpack.c.b16 %v2172, %v2171
        %2178 = vrot.lane.b32.xlu0 %v2156, 64
        %v2179 = vpop.permute.xlu0 %2178
        %v2181 = vsel %vm1011, %v2173, 0
        %v2184 = vsel %vm1011, %v2174, 0
        %v2187 = vsel %vm1011, %v2175, 0
        %v2190 = vsel %vm1011, %v2176, 0
        %v2193 = vsel %vm1011, %v2179, 0
        %2195 = vmatpush.bf16.xpose.msra.mxu0 0
        %2196 = vmatpush.bf16.xpose.msra.mxu0 0
        %2197 = vmatpush.bf16.xpose.msra.mxu0 0
        %2198 = vmatpush.bf16.xpose.msra.mxu0 0
        %2199 = vmatpush.bf16.xpose.msra.mxu0 0
        %2200 = vmatpush.bf16.xpose.msra.mxu0 0
        %2201 = vmatpush.bf16.xpose.msra.mxu0 0
        %2202 = vmatpush.bf16.xpose.msra.mxu0 %v2193
        %2203 = vmatmul.bf16.gmra.mxu0 %v2181
        %v2204 = vpop.f32.mrf.mxu0
        %v2205 = vadd.f32 0.0, %v2204
        %v2206 = vpop.f32.mrf.mxu0
        %v2207 = vadd.f32 0.0, %v2206
        %2208 = vmatmul.bf16.gmra.mxu0 %v2184
        %v2209 = vpop.f32.mrf.mxu0
        %v2210 = vadd.f32 0.0, %v2209
        %v2211 = vpop.f32.mrf.mxu0
        %v2212 = vadd.f32 0.0, %v2211
        %2213 = vmatmul.bf16.gmra.mxu0 %v2187
        %v2214 = vpop.f32.mrf.mxu0
        %v2215 = vadd.f32 0.0, %v2214
        %v2216 = vpop.f32.mrf.mxu0
        %v2217 = vadd.f32 0.0, %v2216
        %2218 = vmatmul.bf16.gmra.mxu0 %v2190
        %v2219 = vpop.f32.mrf.mxu0
        %v2220 = vadd.f32 0.0, %v2219
        %v2221 = vpop.f32.mrf.mxu0
        %v2222 = vadd.f32 0.0, %v2221
        %2223 = vdwg.mxu0
        %v2224 = vmul.f32 %v2205, 0.35355338
        %v2225 = vmul.f32 %v2207, 0.35355338
        %v2226 = vmul.f32 %v2210, 0.35355338
        %v2227 = vmul.f32 %v2212, 0.35355338
        %v2228 = vmul.f32 %v2215, 0.35355338
        %v2229 = vmul.f32 %v2217, 0.35355338
        %v2230 = vmul.f32 %v2220, 0.35355338
        %v2231 = vmul.f32 %v2222, 0.35355338
        %v2232 = vsel %vm1275, %v2224, -inf
        %2233 = vmax.xlane.f32.xlu0 %v2232
        %v2234 = vpop.xlane.xlu0 %2233
        %v2235 = vsel %vm1275, %v2225, -inf
        %2236 = vmax.xlane.f32.xlu0 %v2235
        %v2237 = vpop.xlane.xlu0 %2236
        %v2238 = vsel %vm1275, %v2226, -inf
        %2239 = vmax.xlane.f32.xlu0 %v2238
        %v2240 = vpop.xlane.xlu0 %2239
        %v2241 = vsel %vm1275, %v2227, -inf
        %2242 = vmax.xlane.f32.xlu0 %v2241
        %v2243 = vpop.xlane.xlu0 %2242
        %v2244 = vsel %vm1275, %v2228, -inf
        %2245 = vmax.xlane.f32.xlu0 %v2244
        %v2246 = vpop.xlane.xlu0 %2245
        %v2247 = vsel %vm1275, %v2229, -inf
        %2248 = vmax.xlane.f32.xlu0 %v2247
        %v2249 = vpop.xlane.xlu0 %2248
        %v2250 = vsel %vm1275, %v2230, -inf
        %2251 = vmax.xlane.f32.xlu0 %v2250
        %v2252 = vpop.xlane.xlu0 %2251
        %v2253 = vsel %vm1275, %v2231, -inf
        %2254 = vmax.xlane.f32.xlu0 %v2253
        %v2255 = vpop.xlane.xlu0 %2254
        %v2256 = vsub.f32 %v2224, %v2234
        %v2257 = vsub.f32 %v2225, %v2237
        %v2258 = vsub.f32 %v2226, %v2240
        %v2259 = vsub.f32 %v2227, %v2243
        %v2260 = vsub.f32 %v2228, %v2246
        %v2261 = vsub.f32 %v2229, %v2249
        %v2262 = vsub.f32 %v2230, %v2252
        %v2263 = vsub.f32 %v2231, %v2255
        %v2264 = vmul.f32 %v2256, 1.442695
        %v2265 = vpow.pop %v2264
        %v2266 = vmul.f32 %v2257, 1.442695
        %v2267 = vpow.pop %v2266
        %v2268 = vmul.f32 %v2258, 1.442695
        %v2269 = vpow.pop %v2268
        %v2270 = vmul.f32 %v2259, 1.442695
        %v2271 = vpow.pop %v2270
        %v2272 = vmul.f32 %v2260, 1.442695
        %v2273 = vpow.pop %v2272
        %v2274 = vmul.f32 %v2261, 1.442695
        %v2275 = vpow.pop %v2274
        %v2276 = vmul.f32 %v2262, 1.442695
        %v2277 = vpow.pop %v2276
        %v2278 = vmul.f32 %v2263, 1.442695
        %v2279 = vpow.pop %v2278
        %v2280 = vsel %vm1275, %v2265, 0.0
        %2281 = vadd.xlane.f32.xlu0 %v2280
        %v2282 = vpop.xlane.xlu0 %2281
        %v2283 = vsel %vm1275, %v2267, 0.0
        %2284 = vadd.xlane.f32.xlu0 %v2283
        %v2285 = vpop.xlane.xlu0 %2284
        %v2286 = vsel %vm1275, %v2269, 0.0
        %2287 = vadd.xlane.f32.xlu0 %v2286
        %v2288 = vpop.xlane.xlu0 %2287
        %v2289 = vsel %vm1275, %v2271, 0.0
        %2290 = vadd.xlane.f32.xlu0 %v2289
        %v2291 = vpop.xlane.xlu0 %2290
        %v2292 = vsel %vm1275, %v2273, 0.0
        %2293 = vadd.xlane.f32.xlu0 %v2292
        %v2294 = vpop.xlane.xlu0 %2293
        %v2295 = vsel %vm1275, %v2275, 0.0
        %2296 = vadd.xlane.f32.xlu0 %v2295
        %v2297 = vpop.xlane.xlu0 %2296
        %v2298 = vsel %vm1275, %v2277, 0.0
        %2299 = vadd.xlane.f32.xlu0 %v2298
        %v2300 = vpop.xlane.xlu0 %2299
        %v2301 = vsel %vm1275, %v2279, 0.0
        %2302 = vadd.xlane.f32.xlu0 %v2301
        %v2303 = vpop.xlane.xlu0 %2302
        %v2304 = vrcp.pop %v2282
        %v2305 = vrcp.pop %v2285
        %v2306 = vrcp.pop %v2288
        %v2307 = vrcp.pop %v2291
        %v2308 = vrcp.pop %v2294
        %v2309 = vrcp.pop %v2297
        %v2310 = vrcp.pop %v2300
        %v2311 = vrcp.pop %v2303
        %v2312 = vmul.f32 %v2265, %v2304
        %v2313 = vmul.f32 %v2267, %v2305
        %v2314 = vmul.f32 %v2269, %v2306
        %v2315 = vmul.f32 %v2271, %v2307
        %v2316 = vmul.f32 %v2273, %v2308
        %v2317 = vmul.f32 %v2275, %v2309
        %v2318 = vmul.f32 %v2277, %v2310
        %v2319 = vmul.f32 %v2279, %v2311
        %v2320 = vpack.c.bf16 %v2313, %v2312
        %v2321 = vpack.c.bf16 %v2315, %v2314
        %v2322 = vpack.c.bf16 %v2317, %v2316
        %v2323 = vpack.c.bf16 %v2319, %v2318
        %v2324 = vpack.c.bf16 %v2154, %v2152
        %v2326 = vsel %vm1275, %v2320, 0
        %v2329 = vsel %vm1275, %v2321, 0
        %v2332 = vsel %vm1275, %v2322, 0
        %v2335 = vsel %vm1275, %v2323, 0
        %v2338 = vsel %vm1381, %v2324, 0
        %2340 = vmatpush.bf16.msra.mxu0 0
        %2341 = vmatpush.bf16.msra.mxu0 0
        %2342 = vmatpush.bf16.msra.mxu0 0
        %2343 = vmatpush.bf16.msra.mxu0 0
        %2344 = vmatpush.bf16.msra.mxu0 0
        %2345 = vmatpush.bf16.msra.mxu0 0
        %2346 = vmatpush.bf16.msra.mxu0 0
        %2347 = vmatpush.bf16.msra.mxu0 %v2338
        %2348 = vmatmul.bf16.gmra.mxu0 %v2326
        %v2349 = vpop.f32.mrf.mxu0
        %v2350 = vadd.f32 0.0, %v2349
        %v2351 = vpop.f32.mrf.mxu0
        %v2352 = vadd.f32 0.0, %v2351
        %2353 = vmatmul.bf16.gmra.mxu0 %v2329
        %v2354 = vpop.f32.mrf.mxu0
        %v2355 = vadd.f32 0.0, %v2354
        %v2356 = vpop.f32.mrf.mxu0
        %v2357 = vadd.f32 0.0, %v2356
        %2358 = vmatmul.bf16.gmra.mxu0 %v2332
        %v2359 = vpop.f32.mrf.mxu0
        %v2360 = vadd.f32 0.0, %v2359
        %v2361 = vpop.f32.mrf.mxu0
        %v2362 = vadd.f32 0.0, %v2361
        %2363 = vmatmul.bf16.gmra.mxu0 %v2335
        %v2364 = vpop.f32.mrf.mxu0
        %v2365 = vadd.f32 0.0, %v2364
        %v2366 = vpop.f32.mrf.mxu0
        %v2367 = vadd.f32 0.0, %v2366
        %2368 = vdwg.mxu0
        %v2369 = vmul.f32 %v2350, %v1414
        %v2370 = vmul.f32 %v2352, %v1415
        %v2371 = vmul.f32 %v2355, %v1416
        %v2372 = vmul.f32 %v2357, %v1417
        %v2373 = vmul.f32 %v2360, %v1418
        %v2374 = vmul.f32 %v2362, %v1419
        %v2375 = vmul.f32 %v2365, %v1420
        %v2376 = vmul.f32 %v2367, %v1421
        %v2378 = vsel %vm1011, %v2156, 0
        %2380 = vmatpush.bf16.xpose.msra.mxu0 0
        %2381 = vmatpush.bf16.xpose.msra.mxu0 0
        %2382 = vmatpush.bf16.xpose.msra.mxu0 0
        %2383 = vmatpush.bf16.xpose.msra.mxu0 0
        %2384 = vmatpush.bf16.xpose.msra.mxu0 %v2190
        %2385 = vmatpush.bf16.xpose.msra.mxu0 %v2187
        %2386 = vmatpush.bf16.xpose.msra.mxu0 %v2184
        %2387 = vmatpush.bf16.xpose.msra.mxu0 %v2181
        %2388 = vmatmul.bf16.gmra.mxu0 %v2378
        %v2389 = vpop.f32.mrf.mxu0
        %v2390 = vadd.f32 0.0, %v2389
        %v2391 = vpop.f32.mrf.mxu0
        %v2392 = vadd.f32 0.0, %v2391
        %2393 = vdwg.mxu0
        %v2394 = vmul.f32 %v2390, 0.35355338
        %v2395 = vmul.f32 %v2392, 0.35355338
        %v2396 = vsel %vm1011, %v2394, -inf
        %2397 = vmax.xlane.f32.xlu0 %v2396
        %v2398 = vpop.xlane.xlu0 %2397
        %v2399 = vsel %vm1063, %v2395, -inf
        %2400 = vmax.xlane.f32.xlu0 %v2399
        %v2401 = vpop.xlane.xlu0 %2400
        %v2402 = vsub.f32 %v2394, %v2398
        %v2403 = vsub.f32 %v2395, %v2401
        %v2404 = vmul.f32 %v2402, 1.442695
        %v2405 = vpow.pop %v2404
        %v2406 = vmul.f32 %v2403, 1.442695
        %v2407 = vpow.pop %v2406
        %v2408 = vpack.c.bf16 %v2407, %v2405
        %v2410 = vsel %vm1011, %v2408, 0
        %2412 = vmatpush.bf16.msra.mxu0 0
        %2413 = vmatpush.bf16.msra.mxu0 0
        %2414 = vmatpush.bf16.msra.mxu0 0
        %2415 = vmatpush.bf16.msra.mxu0 0
        %2416 = vmatpush.bf16.msra.mxu0 %v1481
        %2417 = vmatpush.bf16.msra.mxu0 %v1480
        %2418 = vmatpush.bf16.msra.mxu0 %v1479
        %2419 = vmatpush.bf16.msra.mxu0 %v1478
        %2420 = vmatmul.bf16.gmra.mxu0 %v2410
        %v2421 = vpop.f32.mrf.mxu0
        %v2422 = vadd.f32 0.0, %v2421
        %v2423 = vpop.f32.mrf.mxu0
        %v2424 = vadd.f32 0.0, %v2423
        %2425 = vdwg.mxu0
        %v2426 = vrcp.pop %v2422
        %v2427 = vrcp.pop %v2424
        %v2428 = vmul.f32 %v2405, %v2426
        %v2429 = vmul.f32 %v2407, %v2427
        %v2430 = vpack.c.bf16 %v2429, %v2428
        %v2431 = vpack.c.bf16 %v2370, %v2369
        %v2432 = vpack.c.bf16 %v2372, %v2371
        %v2433 = vpack.c.bf16 %v2374, %v2373
        %v2434 = vpack.c.bf16 %v2376, %v2375
        %v2436 = vsel %vm1011, %v2430, 0
        %2438 = vmatpush.bf16.msra.mxu0 0
        %2439 = vmatpush.bf16.msra.mxu0 0
        %2440 = vmatpush.bf16.msra.mxu0 0
        %2441 = vmatpush.bf16.msra.mxu0 0
        %2442 = vmatpush.bf16.msra.mxu0 %v2434
        %2443 = vmatpush.bf16.msra.mxu0 %v2433
        %2444 = vmatpush.bf16.msra.mxu0 %v2432
        %2445 = vmatpush.bf16.msra.mxu0 %v2431
        %2446 = vmatmul.bf16.gmra.mxu0 %v2436
        %v2447 = vpop.f32.mrf.mxu0
        %v2448 = vadd.f32 0.0, %v2447
        %v2449 = vpop.f32.mrf.mxu0
        %v2450 = vadd.f32 0.0, %v2449
        %2451 = vdwg.mxu0
        %v2452 = vpack.c.bf16 %v2450, %v2448
        %v2461 = vunpack.c.l.b16 %v2016
        %v2462 = vunpack.c.l.b16 %v2017
        %v2463 = vunpack.c.l.b16 %v2018
        %v2464 = vunpack.c.l.b16 %v2019
        %v2465 = vunpack.c.l.b16 %v2020
        %v2466 = vunpack.c.l.b16 %v2021
        %v2467 = vunpack.c.l.b16 %v2022
        %v2468 = vunpack.c.l.b16 %v2023
        %v2469 = vpack.c.b16 %v2462, %v2461
        %v2470 = vpack.c.b16 %v2464, %v2463
        %v2471 = vpack.c.b16 %v2466, %v2465
        %v2472 = vpack.c.b16 %v2468, %v2467
        %v2478 = vsel %vm1011, %v2452, 0
        %2480 = vmatpush.bf16.msra.mxu0 0
        %2481 = vmatpush.bf16.msra.mxu0 0
        %2482 = vmatpush.bf16.msra.mxu0 0
        %2483 = vmatpush.bf16.msra.mxu0 0
        %2484 = vmatpush.bf16.msra.mxu0 %v2472
        %2485 = vmatpush.bf16.msra.mxu0 %v2471
        %2486 = vmatpush.bf16.msra.mxu0 %v2470
        %2487 = vmatpush.bf16.msra.mxu0 %v2469
        %2488 = vmatmul.bf16.gmra.mxu0 %v2478
        %v2489 = vpop.f32.mrf.mxu0
        %v2490 = vadd.f32 0.0, %v2489
        %v2491 = vpop.f32.mrf.mxu0
        %2492 = vdwg.mxu0
        %v2493 = vadd.f32 %v1995, %v2490
        %v2495 = vperm.slane %v2024, 0
        %v2497 = vadd.f32 %v2493, %v2495
        %v2498 = vld [vmem:[%s21] sm:$0x1]
        %v2499 = vld [vmem:[%s22] sm:$0x1]
        %v2500 = vsel %vm1009, %v2497, 0.0
        %2501 = vadd.xlane.f32.xlu0 %v2500
        %v2502 = vpop.xlane.xlu0 %2501
        %v2503 = vmul.f32 %v2502, %v1073
        %v2504 = vsub.f32 %v2497, %v2503
        %v2505 = vmul.f32 %v2504, %v2504
        %v2506 = vsel %vm1009, %v2505, 0.0
        %2507 = vadd.xlane.f32.xlu0 %v2506
        %v2508 = vpop.xlane.xlu0 %2507
        %v2509 = vmul.f32 %v2508, %v1073
        %v2510 = vadd.f32 %v2509, 1e-05
        %v2511 = vrsqrt.pop %v2510
        %v2512 = vmul.f32 %v2511, %v2510
        %v2513 = vmul.f32 %v2512, %v2511
        %v2514 = vmul.f32 0.5, %v2513
        %v2515 = vsub.f32 1.5, %v2514
        %v2516 = vmul.f32 %v2511, %v2515
        %vm2517 = vweird.f32 %v2510
        %vm2518 = vweird.f32 %v2511
        %vm2519 = vmor %vm2517, %vm2518
        %v2520 = vsel %vm2519, %v2511, %v2516
        %v2521 = vmul.f32 %v2504, %v2520
        %v2522 = vmul.f32 %v2521, %v2498
        %v2523 = vadd.f32 %v2522, %v2499
        %v2524 = vld [vmem:[%s23] sm:$0xf]
        %v2525 = vld [vmem:[%s23 + $0x4] sm:$0xf]
        %v2526 = vld [vmem:[%s23 + $0x8] sm:$0xf]
        %v2527 = vld [vmem:[%s23 + $0xc] sm:$0xf]
        %v2528 = vld [vmem:[%s23 + $0x10] sm:$0xf]
        %v2529 = vld [vmem:[%s23 + $0x14] sm:$0xf]
        %v2530 = vld [vmem:[%s23 + $0x18] sm:$0xf]
        %v2531 = vld [vmem:[%s23 + $0x1c] sm:$0xf]
        %v2532 = vpack.c.bf16 %v2523, %v2523
        %v2533 = vld [vmem:[%s24] sm:$0x1]
        %v2542 = vunpack.c.l.b16 %v2524
        %v2543 = vunpack.c.l.b16 %v2525
        %v2544 = vunpack.c.l.b16 %v2526
        %v2545 = vunpack.c.l.b16 %v2527
        %v2546 = vunpack.c.l.b16 %v2528
        %v2547 = vunpack.c.l.b16 %v2529
        %v2548 = vunpack.c.l.b16 %v2530
        %v2549 = vunpack.c.l.b16 %v2531
        %v2550 = vpack.c.b16 %v2543, %v2542
        %v2551 = vpack.c.b16 %v2545, %v2544
        %v2552 = vpack.c.b16 %v2547, %v2546
        %v2553 = vpack.c.b16 %v2549, %v2548
        %v2559 = vsel %vm1011, %v2532, 0
        %2561 = vmatpush.bf16.msra.mxu0 0
        %2562 = vmatpush.bf16.msra.mxu0 0
        %2563 = vmatpush.bf16.msra.mxu0 0
        %2564 = vmatpush.bf16.msra.mxu0 0
        %2565 = vmatpush.bf16.msra.mxu0 %v2553
        %2566 = vmatpush.bf16.msra.mxu0 %v2552
        %2567 = vmatpush.bf16.msra.mxu0 %v2551
        %2568 = vmatpush.bf16.msra.mxu0 %v2550
        %2569 = vmatmul.bf16.gmra.mxu0 %v2559
        %v2570 = vpop.f32.mrf.mxu0
        %v2571 = vadd.f32 %v2533, %v2570
        %v2572 = vpop.f32.mrf.mxu0
        %2573 = vdwg.mxu0
        %vm2574 = vcmask 8192
        %2575 = vst.msk [vmem:[%s930] sm:$0x1] %vm2574, %v2571
        %s2576 = sand.u32 %s583, 1
        %s2577 = scalar_lea.sflag [#allocation5], %s2576
        %s2578 = sand.u32 %s583, 1
        %s2579 = scalar_lea.vmem [#allocation21], %s2578
        // Predicated region
        $region165: #{tpu_custom_call.1} parent=119 // pred_check
          %p2580 = pneg %p593
        $region166: #{tpu_custom_call.1} parent=119 // pred_check_branch
          %2582 = sbr.rel (%p2580) target = $region168
        $region167: #{tpu_custom_call.1} parent=119 // pred_region
          %2584 = vsyncadd %s2577, 0
          %s2585 = scalar_lea.hbm %s25, %s45
          %s2587 = sshll.u32 %s2579, 4
          %s2588 = int_to_ptr.vmem [resolvable:$true] %s2587
          %s2589 = sshll.u32 %s2585, 4
          %s2590 = int_to_ptr.hbm [resolvable:$true] %s2589
          %2592 = dma.vmem_to_hbm [thread:$0]  %s2588, 16, %s2590, %s2577
        $region168: #{tpu_custom_call.1} parent=119 // pred_fallthru
          _
      $region120: #{tpu_custom_call.1} parent=5 // pred_fallthru
        _
      %p2593 = scmp.le.s32.totalorder 2, %s40
      // Predicated region
      $region169: #{tpu_custom_call.1} parent=5 // pred_check
        %p2594 = pneg %p2593
      $region170: #{tpu_custom_call.1} parent=5 // pred_check_branch
        %2596 = sbr.rel (%p2594) target = $region172
      $region171: #{tpu_custom_call.1} parent=5 // pred_region
        %s2597 = ssub.s32 %s40, 2
        // Predicated region
        $region173: #{tpu_custom_call.1} parent=171 // pred_check
          %p2598 = pneg %p599
        $region174: #{tpu_custom_call.1} parent=171 // pred_check_branch
          %2600 = sbr.rel (%p2598) target = $region176
        $region175: #{tpu_custom_call.1} parent=171 // pred_region
          %s2601 = sand.u32 %s584, 1
          %s2602 = scalar_lea.sflag [#allocation5], %s2601
          %s2603 = sand.u32 %s584, 1
          %s2604 = scalar_lea.vmem [#allocation21], %s2603
          %2606 = dma.done %s2602, 16
        $region176: #{tpu_custom_call.1} parent=171 // pred_fallthru
          _
      $region172: #{tpu_custom_call.1} parent=5 // pred_fallthru
        _
    $region6: #{tpu_custom_call.1} parent=1 // loop_footer
      %s44 = sadd.s32 1, %s40
    $region7: #{tpu_custom_call.1} parent=1 // loop_footer_branch
      %39 = sbr.rel target = $region3
    $region8: #{tpu_custom_call.1} parent=1 // loop_exit
      _
    %2607 = vsyncpa [#allocation4], 1
    %s2608 = scalar_lea.sflag [#allocation4], 1
    %2609 = vsyncpa %s2608, 1
    %2610 = vsyncpa [#allocation7], 1
    %2611 = vsyncpa [#allocation10], 1
    %2612 = vsyncpa [#allocation13], 1
    %2613 = vsyncpa [#allocation16], 1
    %2614 = vsyncpa [#allocation19], 1
    %2615 = vsyncpa [#allocation5], 1
    %s2616 = scalar_lea.sflag [#allocation5], 1
    %2617 = vsyncpa %s2616, 1

</llo_original>
